<compile_context>
chip_gen: v7x
topology: tpu7x:2x2x1
jax: 0.10.0
libtpu: 0.0.40
codegen_flags: <defaults>
</compile_context>

<pallas_src>
import jax
import jax.numpy as jnp
from jax.experimental import pallas as pl
from jax.experimental.pallas import tpu as pltpu

EPS = 1e-5  # torch.nn.InstanceNorm2d default


def _conv3x3_im2col(xp, w_flat, b):
    """xp: (H+2, W+2, Cin) padded input; w_flat: (9*Cin, Cout); b: (Cout,) f32.
    Returns conv output flattened to (H*W, Cout) in f32."""
    Hp, Wp, Cin = xp.shape
    H, W = Hp - 2, Wp - 2
    # 9 shifted views stacked along the channel (lane) axis -> (H, W, 9*Cin),
    # tap-major (dy, dx) with channel fastest (matches the weight reshape).
    taps = [xp[dy:dy + H, dx:dx + W, :] for dy in range(3) for dx in range(3)]
    patches = jnp.concatenate(taps, axis=-1)
    # Collapse spatial dims (lane dim untouched) and do a single MXU matmul.
    patches = patches.reshape(H * W, 9 * Cin)
    y = jnp.dot(patches, w_flat, preferred_element_type=jnp.float32)
    return y + b[None, :]


def _instance_norm(y, inv_hw):
    """Per-channel normalization over the flattened spatial axis.
    y: (H*W, C) f32. Single pass: sum + sum-of-squares -> mean/var."""
    s = jnp.sum(y, axis=0, keepdims=True)
    ss = jnp.sum(y * y, axis=0, keepdims=True)
    m = s * inv_hw
    v = ss * inv_hw - m * m
    return (y - m) * jax.lax.rsqrt(v + EPS)


def residual_block_kernel(xp_ref, w1_ref, b1_ref, w2_ref, b2_ref, o_ref,
                          pad_ref):
    _, H, W, C = o_ref.shape
    Hp, Wp = H + 2, W + 2
    inv_hw = 1.0 / float(H * W)

    xp = xp_ref[0]                       # (Hp, Wp, C), input dtype (bf16 ok)
    b1 = b1_ref[0].astype(jnp.float32)   # (C,)
    b2 = b2_ref[0].astype(jnp.float32)

    # --- conv1 -> InstanceNorm -> ReLU --------------------------------------
    y = _conv3x3_im2col(xp, w1_ref[...], b1)        # (H*W, C) f32
    y = _instance_norm(y, inv_hw)
    h = jnp.maximum(y, 0.0)

    # --- in-kernel reflection pad of h via VMEM scratch (no W-axis concat) ---
    h3 = h.reshape(H, W, C).astype(pad_ref.dtype)
    pad_ref[1:H + 1, 1:W + 1, :] = h3                        # interior
    pad_ref[0:1, 1:W + 1, :] = h3[1:2]                       # top    <- row 1
    pad_ref[H + 1:Hp, 1:W + 1, :] = h3[H - 2:H - 1]          # bottom <- row H-2
    pad_ref[:, 0:1, :] = pad_ref[:, 2:3, :]                  # left   <- col 2
    pad_ref[:, Wp - 1:Wp, :] = pad_ref[:, Wp - 3:Wp - 2, :]  # right  <- col W-1

    # --- conv2 -> InstanceNorm -----------------------------------------------
    y2 = _conv3x3_im2col(pad_ref[...], w2_ref[...], b2)      # (H*W, C) f32
    y2 = _instance_norm(y2, inv_hw)

    # --- residual add ----------------------------------------------------------
    x3 = xp[1:H + 1, 1:W + 1, :].astype(jnp.float32)         # un-padded input
    o_ref[0] = (x3 + y2.reshape(H, W, C)).astype(o_ref.dtype)


def residual_block_nchw(x_nchw, w1_oihw, b1, w2_oihw, b2):
    """Matches PyTorch ResidualBlock.forward.
    x: (N, C, H, W); w*: (C, C, 3, 3) OIHW; b*: (C,). Returns (N, C, H, W)."""
    N, C, H, W = x_nchw.shape
    Hp, Wp = H + 2, W + 2

    # Layout plumbing on the XLA side: NCHW -> NHWC, reflection pad of the
    # input, OIHW -> (9*Cin, Cout) im2col weight matrix (tap-major).
    x_nhwc = jnp.transpose(x_nchw, (0, 2, 3, 1))
    xp = jnp.pad(x_nhwc, ((0, 0), (1, 1), (1, 1), (0, 0)), mode="reflect")
    w1_flat = jnp.transpose(w1_oihw, (2, 3, 1, 0)).reshape(9 * C, C)
    w2_flat = jnp.transpose(w2_oihw, (2, 3, 1, 0)).reshape(9 * C, C)
    b1_2d = b1.reshape(1, C)
    b2_2d = b2.reshape(1, C)

    out_nhwc = pl.pallas_call(
        residual_block_kernel,
        out_shape=jax.ShapeDtypeStruct((N, H, W, C), x_nhwc.dtype),
        grid=(N,),
        in_specs=[
            pl.BlockSpec((1, Hp, Wp, C), lambda n: (n, 0, 0, 0)),
            pl.BlockSpec((9 * C, C), lambda n: (0, 0)),   # resident weights
            pl.BlockSpec((1, C), lambda n: (0, 0)),
            pl.BlockSpec((9 * C, C), lambda n: (0, 0)),
            pl.BlockSpec((1, C), lambda n: (0, 0)),
        ],
        out_specs=pl.BlockSpec((1, H, W, C), lambda n: (n, 0, 0, 0)),
        scratch_shapes=[pltpu.VMEM((Hp, Wp, C), x_nhwc.dtype)],
        compiler_params=pltpu.CompilerParams(
            dimension_semantics=("parallel",),
            vmem_limit_bytes=32 * 1024 * 1024),
        # TODO(synk): for production shapes (e.g. C=128, H=W>=64 on v7x's
        # 64 MiB VMEM) add an H-tiled grid axis with a 1-row halo and carry
        # InstanceNorm sum / sum-of-squares across tiles.
    )(xp, w1_flat, b1_2d, w2_flat, b2_2d)

    return jnp.transpose(out_nhwc, (0, 3, 1, 2))


def ref_forward_nchw(x, w1_oihw, b1, w2_oihw, b2):
    """Pure-JAX reference of the PyTorch module, NCHW / OIHW layout."""
    def conv(h, w, b):
        hp = jnp.pad(h, ((0, 0), (0, 0), (1, 1), (1, 1)), mode="reflect")
        y = jax.lax.conv_general_dilated(
            hp, w, window_strides=(1, 1), padding="VALID",
            dimension_numbers=("NCHW", "OIHW", "NCHW"))
        return y + b[None, :, None, None]

    def inorm(h):
        m = h.mean(axis=(2, 3), keepdims=True)
        v = ((h - m) ** 2).mean(axis=(2, 3), keepdims=True)
        return (h - m) / jnp.sqrt(v + EPS)

    h = jax.nn.relu(inorm(conv(x, w1_oihw, b1)))
    h = inorm(conv(h, w2_oihw, b2))
    return x + h


if __name__ == "__main__":
    # Small shapes consistent with the module: batch=2, features=4, 16x16 spatial.
    N, C, H, W = 2, 4, 16, 16
    key = jax.random.PRNGKey(0)
    k_x, k_w1, k_b1, k_w2, k_b2 = jax.random.split(key, 5)

    x_nchw = jax.random.normal(k_x, (N, C, H, W), jnp.float32)
    # PyTorch Conv2d weight layout: (out_c, in_c, kH, kW)
    w1_oihw = jax.random.normal(k_w1, (C, C, 3, 3), jnp.float32) * 0.2
    b1 = jax.random.normal(k_b1, (C,), jnp.float32) * 0.1
    w2_oihw = jax.random.normal(k_w2, (C, C, 3, 3), jnp.float32) * 0.2
    b2 = jax.random.normal(k_b2, (C,), jnp.float32) * 0.1

    out_nchw = residual_block_nchw(x_nchw, w1_oihw, b1, w2_oihw, b2)
    jax.block_until_ready(out_nchw)

    ref = ref_forward_nchw(x_nchw, w1_oihw, b1, w2_oihw, b2)
    assert jnp.allclose(out_nchw, ref, atol=1e-4, rtol=1e-4), (
        float(jnp.max(jnp.abs(out_nchw - ref))))

    print("KERNEL_OK")
</pallas_src>

<mosaic_0001>
module attributes {stable_mosaic.version = 11 : i64} {
  func.func @residual_block_kernel(%arg0: i32, %arg1: memref<1x18x18x4xf32, #tpu.memory_space<vmem>>, %arg2: memref<36x4xf32, #tpu.memory_space<vmem>>, %arg3: memref<1x4xf32, #tpu.memory_space<vmem>>, %arg4: memref<36x4xf32, #tpu.memory_space<vmem>>, %arg5: memref<1x4xf32, #tpu.memory_space<vmem>>, %arg6: memref<1x16x16x4xf32, #tpu.memory_space<vmem>>, %arg7: memref<18x18x4xf32, #tpu.memory_space<vmem>>) attributes {dimension_semantics = [#tpu.dimension_semantics<parallel>], iteration_bounds = array<i64: 2>, scalar_prefetch = 0 : i64, scratch_operands = 1 : i64, tpu.core_type = #tpu.core_type<tc>, window_params = [{transform_indices = @transform_0, window_bounds = array<i64: 1, 18, 18, 4>}, {pipeline_mode = #tpu.pipeline_mode<synchronous>, transform_indices = @transform_1, window_bounds = array<i64: 36, 4>}, {pipeline_mode = #tpu.pipeline_mode<synchronous>, transform_indices = @transform_2, window_bounds = array<i64: 1, 4>}, {pipeline_mode = #tpu.pipeline_mode<synchronous>, transform_indices = @transform_3, window_bounds = array<i64: 36, 4>}, {pipeline_mode = #tpu.pipeline_mode<synchronous>, transform_indices = @transform_4, window_bounds = array<i64: 1, 4>}, {transform_indices = @transform_5, window_bounds = array<i64: 1, 16, 16, 4>}]} {
    %c0 = arith.constant 0 : index
    %c0_0 = arith.constant 0 : index
    %c0_1 = arith.constant 0 : index
    %c0_2 = arith.constant 0 : index
    %0 = vector.load %arg1[%c0, %c0_0, %c0_1, %c0_2] : memref<1x18x18x4xf32, #tpu.memory_space<vmem>>, vector<1x18x18x4xf32>
    %1 = vector.shape_cast %0 : vector<1x18x18x4xf32> to vector<18x18x4xf32>
    %c0_3 = arith.constant 0 : index
    %c0_4 = arith.constant 0 : index
    %2 = vector.load %arg3[%c0_3, %c0_4] : memref<1x4xf32, #tpu.memory_space<vmem>>, vector<1x4xf32>
    %3 = vector.shape_cast %2 : vector<1x4xf32> to vector<4xf32>
    %c0_5 = arith.constant 0 : index
    %c0_6 = arith.constant 0 : index
    %4 = vector.load %arg5[%c0_5, %c0_6] : memref<1x4xf32, #tpu.memory_space<vmem>>, vector<1x4xf32>
    %5 = vector.shape_cast %4 : vector<1x4xf32> to vector<4xf32>
    %c0_7 = arith.constant 0 : index
    %c0_8 = arith.constant 0 : index
    %6 = vector.load %arg2[%c0_7, %c0_8] : memref<36x4xf32, #tpu.memory_space<vmem>>, vector<36x4xf32>
    %7 = vector.extract_strided_slice %1 {offsets = [0, 0, 0], sizes = [16, 16, 4], strides = [1, 1, 1]} : vector<18x18x4xf32> to vector<16x16x4xf32>
    %8 = vector.extract_strided_slice %1 {offsets = [0, 1, 0], sizes = [16, 16, 4], strides = [1, 1, 1]} : vector<18x18x4xf32> to vector<16x16x4xf32>
    %9 = vector.extract_strided_slice %1 {offsets = [0, 2, 0], sizes = [16, 16, 4], strides = [1, 1, 1]} : vector<18x18x4xf32> to vector<16x16x4xf32>
    %10 = vector.extract_strided_slice %1 {offsets = [1, 0, 0], sizes = [16, 16, 4], strides = [1, 1, 1]} : vector<18x18x4xf32> to vector<16x16x4xf32>
    %11 = vector.extract_strided_slice %1 {offsets = [1, 1, 0], sizes = [16, 16, 4], strides = [1, 1, 1]} : vector<18x18x4xf32> to vector<16x16x4xf32>
    %12 = vector.extract_strided_slice %1 {offsets = [1, 2, 0], sizes = [16, 16, 4], strides = [1, 1, 1]} : vector<18x18x4xf32> to vector<16x16x4xf32>
    %13 = vector.extract_strided_slice %1 {offsets = [2, 0, 0], sizes = [16, 16, 4], strides = [1, 1, 1]} : vector<18x18x4xf32> to vector<16x16x4xf32>
    %14 = vector.extract_strided_slice %1 {offsets = [2, 1, 0], sizes = [16, 16, 4], strides = [1, 1, 1]} : vector<18x18x4xf32> to vector<16x16x4xf32>
    %15 = vector.extract_strided_slice %1 {offsets = [2, 2, 0], sizes = [16, 16, 4], strides = [1, 1, 1]} : vector<18x18x4xf32> to vector<16x16x4xf32>
    %16 = tpu.concatenate %7, %8, %9, %10, %11, %12, %13, %14, %15 in 2 : vector<16x16x4xf32>, vector<16x16x4xf32>, vector<16x16x4xf32>, vector<16x16x4xf32>, vector<16x16x4xf32>, vector<16x16x4xf32>, vector<16x16x4xf32>, vector<16x16x4xf32>, vector<16x16x4xf32> -> vector<16x16x36xf32>
    %17 = vector.shape_cast %16 : vector<16x16x36xf32> to vector<256x36xf32>
    %cst = arith.constant dense<0.000000e+00> : vector<256x4xf32>
    %18 = tpu.matmul %17, %6, %cst {dimension_numbers = #tpu.dot_dimension_numbers<[1], [0], [0], [1], [0, 0, 1, 1], [], []>} : vector<256x36xf32>, vector<36x4xf32>, vector<256x4xf32> -> vector<256x4xf32>
    %19 = vector.shape_cast %3 : vector<4xf32> to vector<1x4xf32>
    %20 = vector.broadcast %19 : vector<1x4xf32> to vector<256x4xf32>
    %21 = arith.addf %18, %20 : vector<256x4xf32>
    %cst_9 = arith.constant dense<0.000000e+00> : vector<4xf32>
    %22 = vector.multi_reduction <add>, %21, %cst_9 [0] : vector<256x4xf32> to vector<4xf32>
    %23 = vector.shape_cast %22 : vector<4xf32> to vector<1x4xf32>
    %24 = arith.mulf %21, %21 : vector<256x4xf32>
    %cst_10 = arith.constant dense<0.000000e+00> : vector<4xf32>
    %25 = vector.multi_reduction <add>, %24, %cst_10 [0] : vector<256x4xf32> to vector<4xf32>
    %26 = vector.shape_cast %25 : vector<4xf32> to vector<1x4xf32>
    %cst_11 = arith.constant 3.906250e-03 : f32
    %27 = vector.broadcast %cst_11 : f32 to vector<1x4xf32>
    %28 = arith.mulf %23, %27 : vector<1x4xf32>
    %cst_12 = arith.constant 3.906250e-03 : f32
    %29 = vector.broadcast %cst_12 : f32 to vector<1x4xf32>
    %30 = arith.mulf %26, %29 : vector<1x4xf32>
    %31 = arith.mulf %28, %28 : vector<1x4xf32>
    %32 = arith.subf %30, %31 : vector<1x4xf32>
    %33 = vector.broadcast %28 : vector<1x4xf32> to vector<256x4xf32>
    %34 = arith.subf %21, %33 : vector<256x4xf32>
    %cst_13 = arith.constant 9.99999974E-6 : f32
    %35 = vector.broadcast %cst_13 : f32 to vector<1x4xf32>
    %36 = arith.addf %32, %35 : vector<1x4xf32>
    %37 = math.rsqrt %36 : vector<1x4xf32>
    %38 = vector.broadcast %37 : vector<1x4xf32> to vector<256x4xf32>
    %39 = arith.mulf %34, %38 : vector<256x4xf32>
    %cst_14 = arith.constant 0.000000e+00 : f32
    %40 = vector.broadcast %cst_14 : f32 to vector<256x4xf32>
    %41 = arith.maximumf %39, %40 : vector<256x4xf32>
    %42 = vector.shape_cast %41 : vector<256x4xf32> to vector<16x16x4xf32>
    %c1 = arith.constant 1 : index
    %c1_15 = arith.constant 1 : index
    %c0_16 = arith.constant 0 : index
    %43 = vector.load %arg7[%c1, %c1_15, %c0_16] : memref<18x18x4xf32, #tpu.memory_space<vmem>>, vector<16x16x4xf32>
    tpu.vector_store %arg7[%c1, %c1_15, %c0_16], %42 {strides = array<i32>} : memref<18x18x4xf32, #tpu.memory_space<vmem>>, vector<16x16x4xf32>,
    %44 = vector.extract_strided_slice %42 {offsets = [1, 0, 0], sizes = [1, 16, 4], strides = [1, 1, 1]} : vector<16x16x4xf32> to vector<1x16x4xf32>
    %c0_17 = arith.constant 0 : index
    %c1_18 = arith.constant 1 : index
    %c0_19 = arith.constant 0 : index
    %45 = vector.load %arg7[%c0_17, %c1_18, %c0_19] : memref<18x18x4xf32, #tpu.memory_space<vmem>>, vector<1x16x4xf32>
    tpu.vector_store %arg7[%c0_17, %c1_18, %c0_19], %44 {strides = array<i32>} : memref<18x18x4xf32, #tpu.memory_space<vmem>>, vector<1x16x4xf32>,
    %46 = vector.extract_strided_slice %42 {offsets = [14, 0, 0], sizes = [1, 16, 4], strides = [1, 1, 1]} : vector<16x16x4xf32> to vector<1x16x4xf32>
    %c17 = arith.constant 17 : index
    %c1_20 = arith.constant 1 : index
    %c0_21 = arith.constant 0 : index
    %47 = vector.load %arg7[%c17, %c1_20, %c0_21] : memref<18x18x4xf32, #tpu.memory_space<vmem>>, vector<1x16x4xf32>
    tpu.vector_store %arg7[%c17, %c1_20, %c0_21], %46 {strides = array<i32>} : memref<18x18x4xf32, #tpu.memory_space<vmem>>, vector<1x16x4xf32>,
    %c0_22 = arith.constant 0 : index
    %c2 = arith.constant 2 : index
    %c0_23 = arith.constant 0 : index
    %48 = vector.load %arg7[%c0_22, %c2, %c0_23] : memref<18x18x4xf32, #tpu.memory_space<vmem>>, vector<18x1x4xf32>
    %c0_24 = arith.constant 0 : index
    %c0_25 = arith.constant 0 : index
    %c0_26 = arith.constant 0 : index
    %49 = vector.load %arg7[%c0_24, %c0_25, %c0_26] : memref<18x18x4xf32, #tpu.memory_space<vmem>>, vector<18x1x4xf32>
    tpu.vector_store %arg7[%c0_24, %c0_25, %c0_26], %48 {strides = array<i32>} : memref<18x18x4xf32, #tpu.memory_space<vmem>>, vector<18x1x4xf32>,
    %c0_27 = arith.constant 0 : index
    %c15 = arith.constant 15 : index
    %c0_28 = arith.constant 0 : index
    %50 = vector.load %arg7[%c0_27, %c15, %c0_28] : memref<18x18x4xf32, #tpu.memory_space<vmem>>, vector<18x1x4xf32>
    %c0_29 = arith.constant 0 : index
    %c17_30 = arith.constant 17 : index
    %c0_31 = arith.constant 0 : index
    %51 = vector.load %arg7[%c0_29, %c17_30, %c0_31] : memref<18x18x4xf32, #tpu.memory_space<vmem>>, vector<18x1x4xf32>
    tpu.vector_store %arg7[%c0_29, %c17_30, %c0_31], %50 {strides = array<i32>} : memref<18x18x4xf32, #tpu.memory_space<vmem>>, vector<18x1x4xf32>,
    %c0_32 = arith.constant 0 : index
    %c0_33 = arith.constant 0 : index
    %c0_34 = arith.constant 0 : index
    %52 = vector.load %arg7[%c0_32, %c0_33, %c0_34] : memref<18x18x4xf32, #tpu.memory_space<vmem>>, vector<18x18x4xf32>
    %c0_35 = arith.constant 0 : index
    %c0_36 = arith.constant 0 : index
    %53 = vector.load %arg4[%c0_35, %c0_36] : memref<36x4xf32, #tpu.memory_space<vmem>>, vector<36x4xf32>
    %54 = vector.extract_strided_slice %52 {offsets = [0, 0, 0], sizes = [16, 16, 4], strides = [1, 1, 1]} : vector<18x18x4xf32> to vector<16x16x4xf32>
    %55 = vector.extract_strided_slice %52 {offsets = [0, 1, 0], sizes = [16, 16, 4], strides = [1, 1, 1]} : vector<18x18x4xf32> to vector<16x16x4xf32>
    %56 = vector.extract_strided_slice %52 {offsets = [0, 2, 0], sizes = [16, 16, 4], strides = [1, 1, 1]} : vector<18x18x4xf32> to vector<16x16x4xf32>
    %57 = vector.extract_strided_slice %52 {offsets = [1, 0, 0], sizes = [16, 16, 4], strides = [1, 1, 1]} : vector<18x18x4xf32> to vector<16x16x4xf32>
    %58 = vector.extract_strided_slice %52 {offsets = [1, 1, 0], sizes = [16, 16, 4], strides = [1, 1, 1]} : vector<18x18x4xf32> to vector<16x16x4xf32>
    %59 = vector.extract_strided_slice %52 {offsets = [1, 2, 0], sizes = [16, 16, 4], strides = [1, 1, 1]} : vector<18x18x4xf32> to vector<16x16x4xf32>
    %60 = vector.extract_strided_slice %52 {offsets = [2, 0, 0], sizes = [16, 16, 4], strides = [1, 1, 1]} : vector<18x18x4xf32> to vector<16x16x4xf32>
    %61 = vector.extract_strided_slice %52 {offsets = [2, 1, 0], sizes = [16, 16, 4], strides = [1, 1, 1]} : vector<18x18x4xf32> to vector<16x16x4xf32>
    %62 = vector.extract_strided_slice %52 {offsets = [2, 2, 0], sizes = [16, 16, 4], strides = [1, 1, 1]} : vector<18x18x4xf32> to vector<16x16x4xf32>
    %63 = tpu.concatenate %54, %55, %56, %57, %58, %59, %60, %61, %62 in 2 : vector<16x16x4xf32>, vector<16x16x4xf32>, vector<16x16x4xf32>, vector<16x16x4xf32>, vector<16x16x4xf32>, vector<16x16x4xf32>, vector<16x16x4xf32>, vector<16x16x4xf32>, vector<16x16x4xf32> -> vector<16x16x36xf32>
    %64 = vector.shape_cast %63 : vector<16x16x36xf32> to vector<256x36xf32>
    %cst_37 = arith.constant dense<0.000000e+00> : vector<256x4xf32>
    %65 = tpu.matmul %64, %53, %cst_37 {dimension_numbers = #tpu.dot_dimension_numbers<[1], [0], [0], [1], [0, 0, 1, 1], [], []>} : vector<256x36xf32>, vector<36x4xf32>, vector<256x4xf32> -> vector<256x4xf32>
    %66 = vector.shape_cast %5 : vector<4xf32> to vector<1x4xf32>
    %67 = vector.broadcast %66 : vector<1x4xf32> to vector<256x4xf32>
    %68 = arith.addf %65, %67 : vector<256x4xf32>
    %cst_38 = arith.constant dense<0.000000e+00> : vector<4xf32>
    %69 = vector.multi_reduction <add>, %68, %cst_38 [0] : vector<256x4xf32> to vector<4xf32>
    %70 = vector.shape_cast %69 : vector<4xf32> to vector<1x4xf32>
    %71 = arith.mulf %68, %68 : vector<256x4xf32>
    %cst_39 = arith.constant dense<0.000000e+00> : vector<4xf32>
    %72 = vector.multi_reduction <add>, %71, %cst_39 [0] : vector<256x4xf32> to vector<4xf32>
    %73 = vector.shape_cast %72 : vector<4xf32> to vector<1x4xf32>
    %cst_40 = arith.constant 3.906250e-03 : f32
    %74 = vector.broadcast %cst_40 : f32 to vector<1x4xf32>
    %75 = arith.mulf %70, %74 : vector<1x4xf32>
    %cst_41 = arith.constant 3.906250e-03 : f32
    %76 = vector.broadcast %cst_41 : f32 to vector<1x4xf32>
    %77 = arith.mulf %73, %76 : vector<1x4xf32>
    %78 = arith.mulf %75, %75 : vector<1x4xf32>
    %79 = arith.subf %77, %78 : vector<1x4xf32>
    %80 = vector.broadcast %75 : vector<1x4xf32> to vector<256x4xf32>
    %81 = arith.subf %68, %80 : vector<256x4xf32>
    %cst_42 = arith.constant 9.99999974E-6 : f32
    %82 = vector.broadcast %cst_42 : f32 to vector<1x4xf32>
    %83 = arith.addf %79, %82 : vector<1x4xf32>
    %84 = math.rsqrt %83 : vector<1x4xf32>
    %85 = vector.broadcast %84 : vector<1x4xf32> to vector<256x4xf32>
    %86 = arith.mulf %81, %85 : vector<256x4xf32>
    %87 = vector.extract_strided_slice %1 {offsets = [1, 1, 0], sizes = [16, 16, 4], strides = [1, 1, 1]} : vector<18x18x4xf32> to vector<16x16x4xf32>
    %88 = vector.shape_cast %86 : vector<256x4xf32> to vector<16x16x4xf32>
    %89 = arith.addf %87, %88 : vector<16x16x4xf32>
    %c0_43 = arith.constant 0 : index
    %c0_44 = arith.constant 0 : index
    %c0_45 = arith.constant 0 : index
    %c0_46 = arith.constant 0 : index
    %90 = vector.load %arg6[%c0_43, %c0_44, %c0_45, %c0_46] : memref<1x16x16x4xf32, #tpu.memory_space<vmem>>, vector<1x16x16x4xf32>
    %91 = vector.shape_cast %90 : vector<1x16x16x4xf32> to vector<16x16x4xf32>
    %92 = vector.shape_cast %89 : vector<16x16x4xf32> to vector<1x16x16x4xf32>
    tpu.vector_store %arg6[%c0_43, %c0_44, %c0_45, %c0_46], %92 {strides = array<i32>} : memref<1x16x16x4xf32, #tpu.memory_space<vmem>>, vector<1x16x16x4xf32>,
    return
  }
  func.func @transform_0(%arg0: i32) -> (i32, i32, i32, i32) {
    %c0_i32 = arith.constant 0 : i32
    %c0_i32_0 = arith.constant 0 : i32
    %c0_i32_1 = arith.constant 0 : i32
    %c0_i32_2 = arith.constant 0 : i32
    return %arg0, %c0_i32, %c0_i32_0, %c0_i32_1 : i32, i32, i32, i32
  }
  func.func @transform_1(%arg0: i32) -> (i32, i32) {
    %c0_i32 = arith.constant 0 : i32
    %c0_i32_0 = arith.constant 0 : i32
    %c0_i32_1 = arith.constant 0 : i32
    return %c0_i32, %c0_i32_0 : i32, i32
  }
  func.func @transform_2(%arg0: i32) -> (i32, i32) {
    %c0_i32 = arith.constant 0 : i32
    %c0_i32_0 = arith.constant 0 : i32
    %c0_i32_1 = arith.constant 0 : i32
    return %c0_i32, %c0_i32_0 : i32, i32
  }
  func.func @transform_3(%arg0: i32) -> (i32, i32) {
    %c0_i32 = arith.constant 0 : i32
    %c0_i32_0 = arith.constant 0 : i32
    %c0_i32_1 = arith.constant 0 : i32
    return %c0_i32, %c0_i32_0 : i32, i32
  }
  func.func @transform_4(%arg0: i32) -> (i32, i32) {
    %c0_i32 = arith.constant 0 : i32
    %c0_i32_0 = arith.constant 0 : i32
    %c0_i32_1 = arith.constant 0 : i32
    return %c0_i32, %c0_i32_0 : i32, i32
  }
  func.func @transform_5(%arg0: i32) -> (i32, i32, i32, i32) {
    %c0_i32 = arith.constant 0 : i32
    %c0_i32_0 = arith.constant 0 : i32
    %c0_i32_1 = arith.constant 0 : i32
    %c0_i32_2 = arith.constant 0 : i32
    return %arg0, %c0_i32, %c0_i32_0, %c0_i32_1 : i32, i32, i32, i32
  }
}

</mosaic_0001>

<llo_original>
// kernel: tpu_custom_call.1
$region0: #{tpu_custom_call.1}
  #allocation0 [shape = 'u32[]', space=smem, size = 0x4, offset = 0x4, fixed_abs, tag = 'smem constant byte address 0x4 - core index']
  #allocation1 [shape = 'u32[144,128]{1,0:T(1,128)}', space=vmem, size = 0x12000, scoped, tag = 'internal scratch']
  #allocation2 [shape = 'f32[18,18,4]{2,1,0:T(8,128)}', space=vmem, size = 0x36000, scoped, tag = 'scratch operand']
  %s0 = inlined_call_operand.vmem [shape: f32[2,18,18,4], index: 0, kind: input, shape index: {}]
  %s1 = inlined_call_operand.vmem [shape: f32[36,4], index: 1, kind: input, shape index: {}]
  %s2 = inlined_call_operand.vmem [shape: f32[1,4], index: 2, kind: input, shape index: {}]
  %s3 = inlined_call_operand.vmem [shape: f32[36,4], index: 3, kind: input, shape index: {}]
  %s4 = inlined_call_operand.vmem [shape: f32[1,4], index: 4, kind: input, shape index: {}]
  %s5 = inlined_call_operand.vmem [shape: f32[2,16,16,4], index: 5, kind: output, shape index: {}]
  %s6 = sld [smem:[#allocation0]]
  $region53: #{tpu_custom_call.1} parent=0
    _
  %s8 = ssub.s32 1, %s6
  %s9 = scalar_select 0, %s8, %s6
  loop: start=0, step=1, limit=4
  $region2: #{tpu_custom_call.1} parent=0 // loop_pre_header
    _
  $region3: #{tpu_custom_call.1} parent=0 // loop_header
    %s11 = sphi 0, %s15
    %p12 = scmp.ge.s32.totalorder %s11, 4
    %s21 = sphi 0, %s23
    %s24 = sphi 0, %s21
    %s25 = sphi 0, %s24
    %s41 = sphi 0, %s25
    %s45 = sphi 0, %s45
    %s47 = sphi 0, %s45
    %s48 = sphi 0, %s47
    %s62 = sphi 0, %s48
    %s66 = sphi 0, %s66
    %s68 = sphi 0, %s66
    %s69 = sphi 0, %s68
    %s83 = sphi 0, %s69
    %s87 = sphi 0, %s87
    %s89 = sphi 0, %s87
    %s90 = sphi 0, %s89
    %s104 = sphi 0, %s90
    %s108 = sphi 0, %s108
    %s110 = sphi 0, %s108
    %s111 = sphi 0, %s110
    %s125 = sphi 0, %s111
    %s131 = sphi 0, %s133
    %s134 = sphi 0, %s131
    %s135 = sphi 0, %s134
    %s151 = sphi 0, %s135
  $region4: #{tpu_custom_call.1} parent=0 // loop_header_branch
    %14 = sbr.rel (%p12) target = $region8
  $region5: #{tpu_custom_call.1} parent=0 // loop_body
    %s16 = ssub.s32 %s11, 1
    %s17 = ssub.s32 %s11, 2
    %s18 = sadd.s32 %s11, 1
    %s19 = ssub.s32 %s11, %s18
    %p20 = scmp.eq.s32.totalorder %s19, 0
    %s22 = sadd.s32 %s21, 1
    %s23 = scalar_select %p20, %s21, %s22
    %p26 = pneg %p20
    %p27 = scmp.eq.s32.totalorder %s11, 1
    %p28 = por %p26, %p27
    %p29 = scmp.ne.s32.totalorder %s21, %s24
    %p30 = scmp.eq.s32.totalorder %s11, 0
    %p31 = por %p29, %p30
    %p32 = scmp.ne.s32.totalorder %s21, %s24
    %p33 = scmp.eq.s32.totalorder %s16, 1
    %p34 = por %p32, %p33
    %p35 = scmp.ne.s32.totalorder %s24, %s25
    %p36 = scmp.eq.s32.totalorder %s16, 0
    %p37 = por %p35, %p36
    %p38 = scmp.ne.s32.totalorder %s24, %s25
    %p39 = scmp.eq.s32.totalorder %s17, 1
    %p40 = por %p38, %p39
    %p42 = scmp.ne.s32.totalorder %s25, %s41
    %p43 = scmp.eq.s32.totalorder %s17, 0
    %p44 = por %p42, %p43
    %s46 = sadd.s32 %s45, 1
    %p49 = scmp.eq.s32.totalorder %s11, 1
    %p50 = scmp.ne.s32.totalorder %s45, %s47
    %p51 = scmp.eq.s32.totalorder %s11, 0
    %p52 = por %p50, %p51
    %p53 = scmp.ne.s32.totalorder %s45, %s47
    %p54 = scmp.eq.s32.totalorder %s16, 1
    %p55 = por %p53, %p54
    %p56 = scmp.ne.s32.totalorder %s47, %s48
    %p57 = scmp.eq.s32.totalorder %s16, 0
    %p58 = por %p56, %p57
    %p59 = scmp.ne.s32.totalorder %s47, %s48
    %p60 = scmp.eq.s32.totalorder %s17, 1
    %p61 = por %p59, %p60
    %p63 = scmp.ne.s32.totalorder %s48, %s62
    %p64 = scmp.eq.s32.totalorder %s17, 0
    %p65 = por %p63, %p64
    %s67 = sadd.s32 %s66, 1
    %p70 = scmp.eq.s32.totalorder %s11, 1
    %p71 = scmp.ne.s32.totalorder %s66, %s68
    %p72 = scmp.eq.s32.totalorder %s11, 0
    %p73 = por %p71, %p72
    %p74 = scmp.ne.s32.totalorder %s66, %s68
    %p75 = scmp.eq.s32.totalorder %s16, 1
    %p76 = por %p74, %p75
    %p77 = scmp.ne.s32.totalorder %s68, %s69
    %p78 = scmp.eq.s32.totalorder %s16, 0
    %p79 = por %p77, %p78
    %p80 = scmp.ne.s32.totalorder %s68, %s69
    %p81 = scmp.eq.s32.totalorder %s17, 1
    %p82 = por %p80, %p81
    %p84 = scmp.ne.s32.totalorder %s69, %s83
    %p85 = scmp.eq.s32.totalorder %s17, 0
    %p86 = por %p84, %p85
    %s88 = sadd.s32 %s87, 1
    %p91 = scmp.eq.s32.totalorder %s11, 1
    %p92 = scmp.ne.s32.totalorder %s87, %s89
    %p93 = scmp.eq.s32.totalorder %s11, 0
    %p94 = por %p92, %p93
    %p95 = scmp.ne.s32.totalorder %s87, %s89
    %p96 = scmp.eq.s32.totalorder %s16, 1
    %p97 = por %p95, %p96
    %p98 = scmp.ne.s32.totalorder %s89, %s90
    %p99 = scmp.eq.s32.totalorder %s16, 0
    %p100 = por %p98, %p99
    %p101 = scmp.ne.s32.totalorder %s89, %s90
    %p102 = scmp.eq.s32.totalorder %s17, 1
    %p103 = por %p101, %p102
    %p105 = scmp.ne.s32.totalorder %s90, %s104
    %p106 = scmp.eq.s32.totalorder %s17, 0
    %p107 = por %p105, %p106
    %s109 = sadd.s32 %s108, 1
    %p112 = scmp.eq.s32.totalorder %s11, 1
    %p113 = scmp.ne.s32.totalorder %s108, %s110
    %p114 = scmp.eq.s32.totalorder %s11, 0
    %p115 = por %p113, %p114
    %p116 = scmp.ne.s32.totalorder %s108, %s110
    %p117 = scmp.eq.s32.totalorder %s16, 1
    %p118 = por %p116, %p117
    %p119 = scmp.ne.s32.totalorder %s110, %s111
    %p120 = scmp.eq.s32.totalorder %s16, 0
    %p121 = por %p119, %p120
    %p122 = scmp.ne.s32.totalorder %s110, %s111
    %p123 = scmp.eq.s32.totalorder %s17, 1
    %p124 = por %p122, %p123
    %p126 = scmp.ne.s32.totalorder %s111, %s125
    %p127 = scmp.eq.s32.totalorder %s17, 0
    %p128 = por %p126, %p127
    %s129 = ssub.s32 %s11, %s18
    %p130 = scmp.eq.s32.totalorder %s129, 0
    %s132 = sadd.s32 %s131, 1
    %s133 = scalar_select %p130, %s131, %s132
    %p136 = pneg %p130
    %p137 = scmp.eq.s32.totalorder %s11, 1
    %p138 = por %p136, %p137
    %p139 = scmp.ne.s32.totalorder %s131, %s134
    %p140 = scmp.eq.s32.totalorder %s11, 0
    %p141 = por %p139, %p140
    %p142 = scmp.ne.s32.totalorder %s131, %s134
    %p143 = scmp.eq.s32.totalorder %s16, 1
    %p144 = por %p142, %p143
    %p145 = scmp.ne.s32.totalorder %s134, %s135
    %p146 = scmp.eq.s32.totalorder %s16, 0
    %p147 = por %p145, %p146
    %p148 = scmp.ne.s32.totalorder %s134, %s135
    %p149 = scmp.eq.s32.totalorder %s17, 1
    %p150 = por %p148, %p149
    %p152 = scmp.ne.s32.totalorder %s135, %s151
    %p153 = scmp.eq.s32.totalorder %s17, 0
    %p154 = por %p152, %p153
    %p155 = scmp.le.s32.totalorder 1, %s11
    %p156 = scmp.lt.s32.totalorder %s11, 3
    %p157 = pnand %p155, %p156
    %p158 = pneg %p157
    // Predicated region
    $region9: #{tpu_custom_call.1} parent=5 // pred_check
      _
    $region10: #{tpu_custom_call.1} parent=5 // pred_check_branch
      %160 = sbr.rel (%p157) target = $region12
    $region11: #{tpu_custom_call.1} parent=5 // pred_region
      %s161 = ssub.s32 %s11, 1
      // Predicated region
      $region13: #{tpu_custom_call.1} parent=11 // pred_check
        %p162 = pneg %p58
      $region14: #{tpu_custom_call.1} parent=11 // pred_check_branch
        %164 = sbr.rel (%p162) target = $region16
      $region15: #{tpu_custom_call.1} parent=11 // pred_region
        _
      $region16: #{tpu_custom_call.1} parent=11 // pred_fallthru
        _
      // Predicated region
      $region17: #{tpu_custom_call.1} parent=11 // pred_check
        %p165 = pneg %p79
      $region18: #{tpu_custom_call.1} parent=11 // pred_check_branch
        %167 = sbr.rel (%p165) target = $region20
      $region19: #{tpu_custom_call.1} parent=11 // pred_region
        _
      $region20: #{tpu_custom_call.1} parent=11 // pred_fallthru
        _
      // Predicated region
      $region21: #{tpu_custom_call.1} parent=11 // pred_check
        %p168 = pneg %p100
      $region22: #{tpu_custom_call.1} parent=11 // pred_check_branch
        %170 = sbr.rel (%p168) target = $region24
      $region23: #{tpu_custom_call.1} parent=11 // pred_region
        _
      $region24: #{tpu_custom_call.1} parent=11 // pred_fallthru
        _
      // Predicated region
      $region25: #{tpu_custom_call.1} parent=11 // pred_check
        %p171 = pneg %p121
      $region26: #{tpu_custom_call.1} parent=11 // pred_check_branch
        %173 = sbr.rel (%p171) target = $region28
      $region27: #{tpu_custom_call.1} parent=11 // pred_region
        _
      $region28: #{tpu_custom_call.1} parent=11 // pred_fallthru
        _
    $region12: #{tpu_custom_call.1} parent=5 // pred_fallthru
      _
    %p174 = scmp.lt.s32.totalorder %s11, 2
    // Predicated region
    $region29: #{tpu_custom_call.1} parent=5 // pred_check
      %p175 = pneg %p174
    $region30: #{tpu_custom_call.1} parent=5 // pred_check_branch
      %177 = sbr.rel (%p175) target = $region32
    $region31: #{tpu_custom_call.1} parent=5 // pred_region
      // Predicated region
      $region33: #{tpu_custom_call.1} parent=31 // pred_check
        %p178 = pneg %p31
      $region34: #{tpu_custom_call.1} parent=31 // pred_check_branch
        %180 = sbr.rel (%p178) target = $region36
      $region35: #{tpu_custom_call.1} parent=31 // pred_region
        %p181 = scmp.lt.s32.totalorder %s11, 1
        %s182 = scalar_select %p181, %s11, 1
        %s183 = smul.addr %s182, 54
        %s184 = smul.addr %s183, 8
        %s185 = scalar_lea.vmem %s0, %s184
      $region36: #{tpu_custom_call.1} parent=31 // pred_fallthru
        _
    $region32: #{tpu_custom_call.1} parent=5 // pred_fallthru
      _
    %p186 = scmp.le.s32.totalorder 1, %s11
    %p187 = scmp.lt.s32.totalorder %s11, 3
    %p188 = pnand %p186, %p187
    %p189 = pneg %p188
    // Predicated region
    $region37: #{tpu_custom_call.1} parent=5 // pred_check
      _
    $region38: #{tpu_custom_call.1} parent=5 // pred_check_branch
      %191 = sbr.rel (%p188) target = $region40
    $region39: #{tpu_custom_call.1} parent=5 // pred_region
      %s192 = ssub.s32 %s11, 1
      %p193 = scmp.lt.s32.totalorder %s16, 1
      %s194 = scalar_select %p193, %s16, 1
      %s195 = smul.addr %s194, 54
      %s196 = smul.addr %s195, 8
      %s197 = scalar_lea.vmem %s0, %s196
      %p198 = pneg %p37
      %p199 = pneg %p34
      %p200 = pneg %p58
      %p201 = pneg %p55
      %p202 = pneg %p79
      %p203 = pneg %p76
      %p204 = pneg %p100
      %p205 = pneg %p97
      %p206 = pneg %p121
      %p207 = pneg %p118
      %p208 = pneg %p147
      %p209 = pneg %p144
      %p210 = scmp.lt.s32.totalorder %s16, 1
      %s211 = scalar_select %p210, %s16, 1
      %s212 = smul.addr %s211, 32
      %s213 = smul.addr %s212, 8
      %s214 = scalar_lea.vmem %s5, %s213
      %p215 = scmp.lt.s32.totalorder %s16, 1
      %s216 = scalar_select %p215, %s16, 1
      %s217 = smul.addr %s216, 54
      %s218 = smul.addr %s217, 8
      %s219 = scalar_lea.vmem %s0, %s218
      %p220 = scmp.lt.s32.totalorder %s16, 1
      %s221 = scalar_select %p220, %s16, 1
      %s222 = smul.addr %s221, 32
      %s223 = smul.addr %s222, 8
      %s224 = scalar_lea.vmem %s5, %s223
      %v225 = vld [vmem:[%s219] sm:$0xff]
      %v226 = vld [vmem:[%s219 + $0x8] sm:$0xff]
      %v227 = vld [vmem:[%s219 + $0x10] sm:$0x3]
      %v228 = vld [vmem:[%s219 + $0x18] sm:$0xff]
      %v229 = vld [vmem:[%s219 + $0x20] sm:$0xff]
      %v230 = vld [vmem:[%s219 + $0x28] sm:$0x3]
      %v231 = vld [vmem:[%s219 + $0x30] sm:$0xff]
      %v232 = vld [vmem:[%s219 + $0x38] sm:$0xff]
      %v233 = vld [vmem:[%s219 + $0x40] sm:$0x3]
      %v234 = vld [vmem:[%s219 + $0x48] sm:$0xff]
      %v235 = vld [vmem:[%s219 + $0x50] sm:$0xff]
      %v236 = vld [vmem:[%s219 + $0x58] sm:$0x3]
      %v237 = vld [vmem:[%s219 + $0x60] sm:$0xff]
      %v238 = vld [vmem:[%s219 + $0x68] sm:$0xff]
      %v239 = vld [vmem:[%s219 + $0x70] sm:$0x3]
      %v240 = vld [vmem:[%s219 + $0x78] sm:$0xff]
      %v241 = vld [vmem:[%s219 + $0x80] sm:$0xff]
      %v242 = vld [vmem:[%s219 + $0x88] sm:$0x3]
      %v243 = vld [vmem:[%s219 + $0x90] sm:$0xff]
      %v244 = vld [vmem:[%s219 + $0x98] sm:$0xff]
      %v245 = vld [vmem:[%s219 + $0xa0] sm:$0x3]
      %v246 = vld [vmem:[%s219 + $0xa8] sm:$0xff]
      %v247 = vld [vmem:[%s219 + $0xb0] sm:$0xff]
      %v248 = vld [vmem:[%s219 + $0xb8] sm:$0x3]
      %v249 = vld [vmem:[%s219 + $0xc0] sm:$0xff]
      %v250 = vld [vmem:[%s219 + $0xc8] sm:$0xff]
      %v251 = vld [vmem:[%s219 + $0xd0] sm:$0x3]
      %v252 = vld [vmem:[%s219 + $0xd8] sm:$0xff]
      %v253 = vld [vmem:[%s219 + $0xe0] sm:$0xff]
      %v254 = vld [vmem:[%s219 + $0xe8] sm:$0x3]
      %v255 = vld [vmem:[%s219 + $0xf0] sm:$0xff]
      %v256 = vld [vmem:[%s219 + $0xf8] sm:$0xff]
      %v257 = vld [vmem:[%s219 + $0x100] sm:$0x3]
      %v258 = vld [vmem:[%s219 + $0x108] sm:$0xff]
      %v259 = vld [vmem:[%s219 + $0x110] sm:$0xff]
      %v260 = vld [vmem:[%s219 + $0x118] sm:$0x3]
      %v261 = vld [vmem:[%s219 + $0x120] sm:$0xff]
      %v262 = vld [vmem:[%s219 + $0x128] sm:$0xff]
      %v263 = vld [vmem:[%s219 + $0x130] sm:$0x3]
      %v264 = vld [vmem:[%s219 + $0x138] sm:$0xff]
      %v265 = vld [vmem:[%s219 + $0x140] sm:$0xff]
      %v266 = vld [vmem:[%s219 + $0x148] sm:$0x3]
      %v267 = vld [vmem:[%s219 + $0x150] sm:$0xff]
      %v268 = vld [vmem:[%s219 + $0x158] sm:$0xff]
      %v269 = vld [vmem:[%s219 + $0x160] sm:$0x3]
      %v270 = vld [vmem:[%s219 + $0x168] sm:$0xff]
      %v271 = vld [vmem:[%s219 + $0x170] sm:$0xff]
      %v272 = vld [vmem:[%s219 + $0x178] sm:$0x3]
      %v273 = vld [vmem:[%s219 + $0x180] sm:$0xff]
      %v274 = vld [vmem:[%s219 + $0x188] sm:$0xff]
      %v275 = vld [vmem:[%s219 + $0x190] sm:$0x3]
      %v276 = vld [vmem:[%s219 + $0x198] sm:$0xff]
      %v277 = vld [vmem:[%s219 + $0x1a0] sm:$0xff]
      %v278 = vld [vmem:[%s219 + $0x1a8] sm:$0x3]
      %v279 = vld [vmem:[%s2] sm:$0x1]
      %v280 = vld [vmem:[%s4] sm:$0x1]
      %v281 = vld [vmem:[%s1] sm:$0xff]
      %v282 = vld [vmem:[%s1 + $0x8] sm:$0xff]
      %v283 = vld [vmem:[%s1 + $0x10] sm:$0xff]
      %v284 = vld [vmem:[%s1 + $0x18] sm:$0xff]
      %v285 = vld [vmem:[%s1 + $0x20] sm:$0xf]
      %vm334 = vcmask 1046528
      %v335 = vrot.slane %v225, 1
      %v336 = vrot.slane %v226, 1
      %v337 = vsel %vm334, %v335, %v336
      %v338 = vrot.slane %v227, 1
      %v339 = vsel %vm334, %v336, %v338
      %v340 = vrot.slane %v228, 1
      %v341 = vrot.slane %v229, 1
      %v342 = vsel %vm334, %v340, %v341
      %v343 = vrot.slane %v230, 1
      %v344 = vsel %vm334, %v341, %v343
      %v345 = vrot.slane %v231, 1
      %v346 = vrot.slane %v232, 1
      %v347 = vsel %vm334, %v345, %v346
      %v348 = vrot.slane %v233, 1
      %v349 = vsel %vm334, %v346, %v348
      %v350 = vrot.slane %v234, 1
      %v351 = vrot.slane %v235, 1
      %v352 = vsel %vm334, %v350, %v351
      %v353 = vrot.slane %v236, 1
      %v354 = vsel %vm334, %v351, %v353
      %v355 = vrot.slane %v237, 1
      %v356 = vrot.slane %v238, 1
      %v357 = vsel %vm334, %v355, %v356
      %v358 = vrot.slane %v239, 1
      %v359 = vsel %vm334, %v356, %v358
      %v360 = vrot.slane %v240, 1
      %v361 = vrot.slane %v241, 1
      %v362 = vsel %vm334, %v360, %v361
      %v363 = vrot.slane %v242, 1
      %v364 = vsel %vm334, %v361, %v363
      %v365 = vrot.slane %v243, 1
      %v366 = vrot.slane %v244, 1
      %v367 = vsel %vm334, %v365, %v366
      %v368 = vrot.slane %v245, 1
      %v369 = vsel %vm334, %v366, %v368
      %v370 = vrot.slane %v246, 1
      %v371 = vrot.slane %v247, 1
      %v372 = vsel %vm334, %v370, %v371
      %v373 = vrot.slane %v248, 1
      %v374 = vsel %vm334, %v371, %v373
      %v375 = vrot.slane %v249, 1
      %v376 = vrot.slane %v250, 1
      %v377 = vsel %vm334, %v375, %v376
      %v378 = vrot.slane %v251, 1
      %v379 = vsel %vm334, %v376, %v378
      %v380 = vrot.slane %v252, 1
      %v381 = vrot.slane %v253, 1
      %v382 = vsel %vm334, %v380, %v381
      %v383 = vrot.slane %v254, 1
      %v384 = vsel %vm334, %v381, %v383
      %v385 = vrot.slane %v255, 1
      %v386 = vrot.slane %v256, 1
      %v387 = vsel %vm334, %v385, %v386
      %v388 = vrot.slane %v257, 1
      %v389 = vsel %vm334, %v386, %v388
      %v390 = vrot.slane %v258, 1
      %v391 = vrot.slane %v259, 1
      %v392 = vsel %vm334, %v390, %v391
      %v393 = vrot.slane %v260, 1
      %v394 = vsel %vm334, %v391, %v393
      %v395 = vrot.slane %v261, 1
      %v396 = vrot.slane %v262, 1
      %v397 = vsel %vm334, %v395, %v396
      %v398 = vrot.slane %v263, 1
      %v399 = vsel %vm334, %v396, %v398
      %v400 = vrot.slane %v264, 1
      %v401 = vrot.slane %v265, 1
      %v402 = vsel %vm334, %v400, %v401
      %v403 = vrot.slane %v266, 1
      %v404 = vsel %vm334, %v401, %v403
      %v405 = vrot.slane %v267, 1
      %v406 = vrot.slane %v268, 1
      %v407 = vsel %vm334, %v405, %v406
      %v408 = vrot.slane %v269, 1
      %v409 = vsel %vm334, %v406, %v408
      %v410 = vrot.slane %v270, 1
      %v411 = vrot.slane %v271, 1
      %v412 = vsel %vm334, %v410, %v411
      %v413 = vrot.slane %v272, 1
      %v414 = vsel %vm334, %v411, %v413
      %415 = vrot.lane.b32.xlu0 %v337, 4
      %v416 = vpop.permute.xlu0 %415
      %417 = vrot.lane.b32.xlu0 %v339, 4
      %v418 = vpop.permute.xlu0 %417
      %419 = vrot.lane.b32.xlu0 %v342, 4
      %v420 = vpop.permute.xlu0 %419
      %421 = vrot.lane.b32.xlu0 %v344, 4
      %v422 = vpop.permute.xlu0 %421
      %423 = vrot.lane.b32.xlu0 %v347, 4
      %v424 = vpop.permute.xlu0 %423
      %425 = vrot.lane.b32.xlu0 %v349, 4
      %v426 = vpop.permute.xlu0 %425
      %427 = vrot.lane.b32.xlu0 %v352, 4
      %v428 = vpop.permute.xlu0 %427
      %429 = vrot.lane.b32.xlu0 %v354, 4
      %v430 = vpop.permute.xlu0 %429
      %431 = vrot.lane.b32.xlu0 %v357, 4
      %v432 = vpop.permute.xlu0 %431
      %433 = vrot.lane.b32.xlu0 %v359, 4
      %v434 = vpop.permute.xlu0 %433
      %435 = vrot.lane.b32.xlu0 %v362, 4
      %v436 = vpop.permute.xlu0 %435
      %437 = vrot.lane.b32.xlu0 %v364, 4
      %v438 = vpop.permute.xlu0 %437
      %439 = vrot.lane.b32.xlu0 %v367, 4
      %v440 = vpop.permute.xlu0 %439
      %441 = vrot.lane.b32.xlu0 %v369, 4
      %v442 = vpop.permute.xlu0 %441
      %443 = vrot.lane.b32.xlu0 %v372, 4
      %v444 = vpop.permute.xlu0 %443
      %445 = vrot.lane.b32.xlu0 %v374, 4
      %v446 = vpop.permute.xlu0 %445
      %447 = vrot.lane.b32.xlu0 %v377, 4
      %v448 = vpop.permute.xlu0 %447
      %449 = vrot.lane.b32.xlu0 %v379, 4
      %v450 = vpop.permute.xlu0 %449
      %451 = vrot.lane.b32.xlu0 %v382, 4
      %v452 = vpop.permute.xlu0 %451
      %453 = vrot.lane.b32.xlu0 %v384, 4
      %v454 = vpop.permute.xlu0 %453
      %455 = vrot.lane.b32.xlu0 %v387, 4
      %v456 = vpop.permute.xlu0 %455
      %457 = vrot.lane.b32.xlu0 %v389, 4
      %v458 = vpop.permute.xlu0 %457
      %459 = vrot.lane.b32.xlu0 %v392, 4
      %v460 = vpop.permute.xlu0 %459
      %461 = vrot.lane.b32.xlu0 %v394, 4
      %v462 = vpop.permute.xlu0 %461
      %463 = vrot.lane.b32.xlu0 %v397, 4
      %v464 = vpop.permute.xlu0 %463
      %465 = vrot.lane.b32.xlu0 %v399, 4
      %v466 = vpop.permute.xlu0 %465
      %467 = vrot.lane.b32.xlu0 %v402, 4
      %v468 = vpop.permute.xlu0 %467
      %469 = vrot.lane.b32.xlu0 %v404, 4
      %v470 = vpop.permute.xlu0 %469
      %471 = vrot.lane.b32.xlu0 %v407, 4
      %v472 = vpop.permute.xlu0 %471
      %473 = vrot.lane.b32.xlu0 %v409, 4
      %v474 = vpop.permute.xlu0 %473
      %475 = vrot.lane.b32.xlu0 %v412, 4
      %v476 = vpop.permute.xlu0 %475
      %477 = vrot.lane.b32.xlu0 %v414, 4
      %v478 = vpop.permute.xlu0 %477
      %vm511 = vcmask 1045504
      %v512 = vrot.slane %v225, 2
      %v513 = vrot.slane %v226, 2
      %v514 = vsel %vm511, %v512, %v513
      %v515 = vrot.slane %v227, 2
      %v516 = vsel %vm511, %v513, %v515
      %v517 = vrot.slane %v228, 2
      %v518 = vrot.slane %v229, 2
      %v519 = vsel %vm511, %v517, %v518
      %v520 = vrot.slane %v230, 2
      %v521 = vsel %vm511, %v518, %v520
      %v522 = vrot.slane %v231, 2
      %v523 = vrot.slane %v232, 2
      %v524 = vsel %vm511, %v522, %v523
      %v525 = vrot.slane %v233, 2
      %v526 = vsel %vm511, %v523, %v525
      %v527 = vrot.slane %v234, 2
      %v528 = vrot.slane %v235, 2
      %v529 = vsel %vm511, %v527, %v528
      %v530 = vrot.slane %v236, 2
      %v531 = vsel %vm511, %v528, %v530
      %v532 = vrot.slane %v237, 2
      %v533 = vrot.slane %v238, 2
      %v534 = vsel %vm511, %v532, %v533
      %v535 = vrot.slane %v239, 2
      %v536 = vsel %vm511, %v533, %v535
      %v537 = vrot.slane %v240, 2
      %v538 = vrot.slane %v241, 2
      %v539 = vsel %vm511, %v537, %v538
      %v540 = vrot.slane %v242, 2
      %v541 = vsel %vm511, %v538, %v540
      %v542 = vrot.slane %v243, 2
      %v543 = vrot.slane %v244, 2
      %v544 = vsel %vm511, %v542, %v543
      %v545 = vrot.slane %v245, 2
      %v546 = vsel %vm511, %v543, %v545
      %v547 = vrot.slane %v246, 2
      %v548 = vrot.slane %v247, 2
      %v549 = vsel %vm511, %v547, %v548
      %v550 = vrot.slane %v248, 2
      %v551 = vsel %vm511, %v548, %v550
      %v552 = vrot.slane %v249, 2
      %v553 = vrot.slane %v250, 2
      %v554 = vsel %vm511, %v552, %v553
      %v555 = vrot.slane %v251, 2
      %v556 = vsel %vm511, %v553, %v555
      %v557 = vrot.slane %v252, 2
      %v558 = vrot.slane %v253, 2
      %v559 = vsel %vm511, %v557, %v558
      %v560 = vrot.slane %v254, 2
      %v561 = vsel %vm511, %v558, %v560
      %v562 = vrot.slane %v255, 2
      %v563 = vrot.slane %v256, 2
      %v564 = vsel %vm511, %v562, %v563
      %v565 = vrot.slane %v257, 2
      %v566 = vsel %vm511, %v563, %v565
      %v567 = vrot.slane %v258, 2
      %v568 = vrot.slane %v259, 2
      %v569 = vsel %vm511, %v567, %v568
      %v570 = vrot.slane %v260, 2
      %v571 = vsel %vm511, %v568, %v570
      %v572 = vrot.slane %v261, 2
      %v573 = vrot.slane %v262, 2
      %v574 = vsel %vm511, %v572, %v573
      %v575 = vrot.slane %v263, 2
      %v576 = vsel %vm511, %v573, %v575
      %v577 = vrot.slane %v264, 2
      %v578 = vrot.slane %v265, 2
      %v579 = vsel %vm511, %v577, %v578
      %v580 = vrot.slane %v266, 2
      %v581 = vsel %vm511, %v578, %v580
      %v582 = vrot.slane %v267, 2
      %v583 = vrot.slane %v268, 2
      %v584 = vsel %vm511, %v582, %v583
      %v585 = vrot.slane %v269, 2
      %v586 = vsel %vm511, %v583, %v585
      %v587 = vrot.slane %v270, 2
      %v588 = vrot.slane %v271, 2
      %v589 = vsel %vm511, %v587, %v588
      %v590 = vrot.slane %v272, 2
      %v591 = vsel %vm511, %v588, %v590
      %592 = vrot.lane.b32.xlu0 %v514, 8
      %v593 = vpop.permute.xlu0 %592
      %594 = vrot.lane.b32.xlu0 %v516, 8
      %v595 = vpop.permute.xlu0 %594
      %596 = vrot.lane.b32.xlu0 %v519, 8
      %v597 = vpop.permute.xlu0 %596
      %598 = vrot.lane.b32.xlu0 %v521, 8
      %v599 = vpop.permute.xlu0 %598
      %600 = vrot.lane.b32.xlu0 %v524, 8
      %v601 = vpop.permute.xlu0 %600
      %602 = vrot.lane.b32.xlu0 %v526, 8
      %v603 = vpop.permute.xlu0 %602
      %604 = vrot.lane.b32.xlu0 %v529, 8
      %v605 = vpop.permute.xlu0 %604
      %606 = vrot.lane.b32.xlu0 %v531, 8
      %v607 = vpop.permute.xlu0 %606
      %608 = vrot.lane.b32.xlu0 %v534, 8
      %v609 = vpop.permute.xlu0 %608
      %610 = vrot.lane.b32.xlu0 %v536, 8
      %v611 = vpop.permute.xlu0 %610
      %612 = vrot.lane.b32.xlu0 %v539, 8
      %v613 = vpop.permute.xlu0 %612
      %614 = vrot.lane.b32.xlu0 %v541, 8
      %v615 = vpop.permute.xlu0 %614
      %616 = vrot.lane.b32.xlu0 %v544, 8
      %v617 = vpop.permute.xlu0 %616
      %618 = vrot.lane.b32.xlu0 %v546, 8
      %v619 = vpop.permute.xlu0 %618
      %620 = vrot.lane.b32.xlu0 %v549, 8
      %v621 = vpop.permute.xlu0 %620
      %622 = vrot.lane.b32.xlu0 %v551, 8
      %v623 = vpop.permute.xlu0 %622
      %624 = vrot.lane.b32.xlu0 %v554, 8
      %v625 = vpop.permute.xlu0 %624
      %626 = vrot.lane.b32.xlu0 %v556, 8
      %v627 = vpop.permute.xlu0 %626
      %628 = vrot.lane.b32.xlu0 %v559, 8
      %v629 = vpop.permute.xlu0 %628
      %630 = vrot.lane.b32.xlu0 %v561, 8
      %v631 = vpop.permute.xlu0 %630
      %632 = vrot.lane.b32.xlu0 %v564, 8
      %v633 = vpop.permute.xlu0 %632
      %634 = vrot.lane.b32.xlu0 %v566, 8
      %v635 = vpop.permute.xlu0 %634
      %636 = vrot.lane.b32.xlu0 %v569, 8
      %v637 = vpop.permute.xlu0 %636
      %638 = vrot.lane.b32.xlu0 %v571, 8
      %v639 = vpop.permute.xlu0 %638
      %640 = vrot.lane.b32.xlu0 %v574, 8
      %v641 = vpop.permute.xlu0 %640
      %642 = vrot.lane.b32.xlu0 %v576, 8
      %v643 = vpop.permute.xlu0 %642
      %644 = vrot.lane.b32.xlu0 %v579, 8
      %v645 = vpop.permute.xlu0 %644
      %646 = vrot.lane.b32.xlu0 %v581, 8
      %v647 = vpop.permute.xlu0 %646
      %648 = vrot.lane.b32.xlu0 %v584, 8
      %v649 = vpop.permute.xlu0 %648
      %650 = vrot.lane.b32.xlu0 %v586, 8
      %v651 = vpop.permute.xlu0 %650
      %652 = vrot.lane.b32.xlu0 %v589, 8
      %v653 = vpop.permute.xlu0 %652
      %654 = vrot.lane.b32.xlu0 %v591, 8
      %v655 = vpop.permute.xlu0 %654
      %690 = vrot.lane.b32.xlu0 %v228, 12
      %v691 = vpop.permute.xlu0 %690
      %692 = vrot.lane.b32.xlu0 %v229, 12
      %v693 = vpop.permute.xlu0 %692
      %694 = vrot.lane.b32.xlu0 %v231, 12
      %v695 = vpop.permute.xlu0 %694
      %696 = vrot.lane.b32.xlu0 %v232, 12
      %v697 = vpop.permute.xlu0 %696
      %698 = vrot.lane.b32.xlu0 %v234, 12
      %v699 = vpop.permute.xlu0 %698
      %700 = vrot.lane.b32.xlu0 %v235, 12
      %v701 = vpop.permute.xlu0 %700
      %702 = vrot.lane.b32.xlu0 %v237, 12
      %v703 = vpop.permute.xlu0 %702
      %704 = vrot.lane.b32.xlu0 %v238, 12
      %v705 = vpop.permute.xlu0 %704
      %706 = vrot.lane.b32.xlu0 %v240, 12
      %v707 = vpop.permute.xlu0 %706
      %708 = vrot.lane.b32.xlu0 %v241, 12
      %v709 = vpop.permute.xlu0 %708
      %710 = vrot.lane.b32.xlu0 %v243, 12
      %v711 = vpop.permute.xlu0 %710
      %712 = vrot.lane.b32.xlu0 %v244, 12
      %v713 = vpop.permute.xlu0 %712
      %714 = vrot.lane.b32.xlu0 %v246, 12
      %v715 = vpop.permute.xlu0 %714
      %716 = vrot.lane.b32.xlu0 %v247, 12
      %v717 = vpop.permute.xlu0 %716
      %718 = vrot.lane.b32.xlu0 %v249, 12
      %v719 = vpop.permute.xlu0 %718
      %720 = vrot.lane.b32.xlu0 %v250, 12
      %v721 = vpop.permute.xlu0 %720
      %722 = vrot.lane.b32.xlu0 %v252, 12
      %v723 = vpop.permute.xlu0 %722
      %724 = vrot.lane.b32.xlu0 %v253, 12
      %v725 = vpop.permute.xlu0 %724
      %726 = vrot.lane.b32.xlu0 %v255, 12
      %v727 = vpop.permute.xlu0 %726
      %728 = vrot.lane.b32.xlu0 %v256, 12
      %v729 = vpop.permute.xlu0 %728
      %730 = vrot.lane.b32.xlu0 %v258, 12
      %v731 = vpop.permute.xlu0 %730
      %732 = vrot.lane.b32.xlu0 %v259, 12
      %v733 = vpop.permute.xlu0 %732
      %734 = vrot.lane.b32.xlu0 %v261, 12
      %v735 = vpop.permute.xlu0 %734
      %736 = vrot.lane.b32.xlu0 %v262, 12
      %v737 = vpop.permute.xlu0 %736
      %738 = vrot.lane.b32.xlu0 %v264, 12
      %v739 = vpop.permute.xlu0 %738
      %740 = vrot.lane.b32.xlu0 %v265, 12
      %v741 = vpop.permute.xlu0 %740
      %742 = vrot.lane.b32.xlu0 %v267, 12
      %v743 = vpop.permute.xlu0 %742
      %744 = vrot.lane.b32.xlu0 %v268, 12
      %v745 = vpop.permute.xlu0 %744
      %746 = vrot.lane.b32.xlu0 %v270, 12
      %v747 = vpop.permute.xlu0 %746
      %748 = vrot.lane.b32.xlu0 %v271, 12
      %v749 = vpop.permute.xlu0 %748
      %750 = vrot.lane.b32.xlu0 %v273, 12
      %v751 = vpop.permute.xlu0 %750
      %752 = vrot.lane.b32.xlu0 %v274, 12
      %v753 = vpop.permute.xlu0 %752
      %v787 = vrot.slane %v273, 1
      %v788 = vrot.slane %v274, 1
      %v789 = vsel %vm334, %v787, %v788
      %v790 = vrot.slane %v275, 1
      %v791 = vsel %vm334, %v788, %v790
      %792 = vrot.lane.b32.xlu0 %v342, 16
      %v793 = vpop.permute.xlu0 %792
      %794 = vrot.lane.b32.xlu0 %v344, 16
      %v795 = vpop.permute.xlu0 %794
      %796 = vrot.lane.b32.xlu0 %v347, 16
      %v797 = vpop.permute.xlu0 %796
      %798 = vrot.lane.b32.xlu0 %v349, 16
      %v799 = vpop.permute.xlu0 %798
      %800 = vrot.lane.b32.xlu0 %v352, 16
      %v801 = vpop.permute.xlu0 %800
      %802 = vrot.lane.b32.xlu0 %v354, 16
      %v803 = vpop.permute.xlu0 %802
      %804 = vrot.lane.b32.xlu0 %v357, 16
      %v805 = vpop.permute.xlu0 %804
      %806 = vrot.lane.b32.xlu0 %v359, 16
      %v807 = vpop.permute.xlu0 %806
      %808 = vrot.lane.b32.xlu0 %v362, 16
      %v809 = vpop.permute.xlu0 %808
      %810 = vrot.lane.b32.xlu0 %v364, 16
      %v811 = vpop.permute.xlu0 %810
      %812 = vrot.lane.b32.xlu0 %v367, 16
      %v813 = vpop.permute.xlu0 %812
      %814 = vrot.lane.b32.xlu0 %v369, 16
      %v815 = vpop.permute.xlu0 %814
      %816 = vrot.lane.b32.xlu0 %v372, 16
      %v817 = vpop.permute.xlu0 %816
      %818 = vrot.lane.b32.xlu0 %v374, 16
      %v819 = vpop.permute.xlu0 %818
      %820 = vrot.lane.b32.xlu0 %v377, 16
      %v821 = vpop.permute.xlu0 %820
      %822 = vrot.lane.b32.xlu0 %v379, 16
      %v823 = vpop.permute.xlu0 %822
      %824 = vrot.lane.b32.xlu0 %v382, 16
      %v825 = vpop.permute.xlu0 %824
      %826 = vrot.lane.b32.xlu0 %v384, 16
      %v827 = vpop.permute.xlu0 %826
      %828 = vrot.lane.b32.xlu0 %v387, 16
      %v829 = vpop.permute.xlu0 %828
      %830 = vrot.lane.b32.xlu0 %v389, 16
      %v831 = vpop.permute.xlu0 %830
      %832 = vrot.lane.b32.xlu0 %v392, 16
      %v833 = vpop.permute.xlu0 %832
      %834 = vrot.lane.b32.xlu0 %v394, 16
      %v835 = vpop.permute.xlu0 %834
      %836 = vrot.lane.b32.xlu0 %v397, 16
      %v837 = vpop.permute.xlu0 %836
      %838 = vrot.lane.b32.xlu0 %v399, 16
      %v839 = vpop.permute.xlu0 %838
      %840 = vrot.lane.b32.xlu0 %v402, 16
      %v841 = vpop.permute.xlu0 %840
      %842 = vrot.lane.b32.xlu0 %v404, 16
      %v843 = vpop.permute.xlu0 %842
      %844 = vrot.lane.b32.xlu0 %v407, 16
      %v845 = vpop.permute.xlu0 %844
      %846 = vrot.lane.b32.xlu0 %v409, 16
      %v847 = vpop.permute.xlu0 %846
      %848 = vrot.lane.b32.xlu0 %v412, 16
      %v849 = vpop.permute.xlu0 %848
      %850 = vrot.lane.b32.xlu0 %v414, 16
      %v851 = vpop.permute.xlu0 %850
      %852 = vrot.lane.b32.xlu0 %v789, 16
      %v853 = vpop.permute.xlu0 %852
      %854 = vrot.lane.b32.xlu0 %v791, 16
      %v855 = vpop.permute.xlu0 %854
      %v888 = vrot.slane %v273, 2
      %v889 = vrot.slane %v274, 2
      %v890 = vsel %vm511, %v888, %v889
      %v891 = vrot.slane %v275, 2
      %v892 = vsel %vm511, %v889, %v891
      %893 = vrot.lane.b32.xlu0 %v519, 20
      %v894 = vpop.permute.xlu0 %893
      %895 = vrot.lane.b32.xlu0 %v521, 20
      %v896 = vpop.permute.xlu0 %895
      %897 = vrot.lane.b32.xlu0 %v524, 20
      %v898 = vpop.permute.xlu0 %897
      %899 = vrot.lane.b32.xlu0 %v526, 20
      %v900 = vpop.permute.xlu0 %899
      %901 = vrot.lane.b32.xlu0 %v529, 20
      %v902 = vpop.permute.xlu0 %901
      %903 = vrot.lane.b32.xlu0 %v531, 20
      %v904 = vpop.permute.xlu0 %903
      %905 = vrot.lane.b32.xlu0 %v534, 20
      %v906 = vpop.permute.xlu0 %905
      %907 = vrot.lane.b32.xlu0 %v536, 20
      %v908 = vpop.permute.xlu0 %907
      %909 = vrot.lane.b32.xlu0 %v539, 20
      %v910 = vpop.permute.xlu0 %909
      %911 = vrot.lane.b32.xlu0 %v541, 20
      %v912 = vpop.permute.xlu0 %911
      %913 = vrot.lane.b32.xlu0 %v544, 20
      %v914 = vpop.permute.xlu0 %913
      %915 = vrot.lane.b32.xlu0 %v546, 20
      %v916 = vpop.permute.xlu0 %915
      %917 = vrot.lane.b32.xlu0 %v549, 20
      %v918 = vpop.permute.xlu0 %917
      %919 = vrot.lane.b32.xlu0 %v551, 20
      %v920 = vpop.permute.xlu0 %919
      %921 = vrot.lane.b32.xlu0 %v554, 20
      %v922 = vpop.permute.xlu0 %921
      %923 = vrot.lane.b32.xlu0 %v556, 20
      %v924 = vpop.permute.xlu0 %923
      %925 = vrot.lane.b32.xlu0 %v559, 20
      %v926 = vpop.permute.xlu0 %925
      %927 = vrot.lane.b32.xlu0 %v561, 20
      %v928 = vpop.permute.xlu0 %927
      %929 = vrot.lane.b32.xlu0 %v564, 20
      %v930 = vpop.permute.xlu0 %929
      %931 = vrot.lane.b32.xlu0 %v566, 20
      %v932 = vpop.permute.xlu0 %931
      %933 = vrot.lane.b32.xlu0 %v569, 20
      %v934 = vpop.permute.xlu0 %933
      %935 = vrot.lane.b32.xlu0 %v571, 20
      %v936 = vpop.permute.xlu0 %935
      %937 = vrot.lane.b32.xlu0 %v574, 20
      %v938 = vpop.permute.xlu0 %937
      %939 = vrot.lane.b32.xlu0 %v576, 20
      %v940 = vpop.permute.xlu0 %939
      %941 = vrot.lane.b32.xlu0 %v579, 20
      %v942 = vpop.permute.xlu0 %941
      %943 = vrot.lane.b32.xlu0 %v581, 20
      %v944 = vpop.permute.xlu0 %943
      %945 = vrot.lane.b32.xlu0 %v584, 20
      %v946 = vpop.permute.xlu0 %945
      %947 = vrot.lane.b32.xlu0 %v586, 20
      %v948 = vpop.permute.xlu0 %947
      %949 = vrot.lane.b32.xlu0 %v589, 20
      %v950 = vpop.permute.xlu0 %949
      %951 = vrot.lane.b32.xlu0 %v591, 20
      %v952 = vpop.permute.xlu0 %951
      %953 = vrot.lane.b32.xlu0 %v890, 20
      %v954 = vpop.permute.xlu0 %953
      %955 = vrot.lane.b32.xlu0 %v892, 20
      %v956 = vpop.permute.xlu0 %955
      %991 = vrot.lane.b32.xlu0 %v231, 24
      %v992 = vpop.permute.xlu0 %991
      %993 = vrot.lane.b32.xlu0 %v232, 24
      %v994 = vpop.permute.xlu0 %993
      %995 = vrot.lane.b32.xlu0 %v234, 24
      %v996 = vpop.permute.xlu0 %995
      %997 = vrot.lane.b32.xlu0 %v235, 24
      %v998 = vpop.permute.xlu0 %997
      %999 = vrot.lane.b32.xlu0 %v237, 24
      %v1000 = vpop.permute.xlu0 %999
      %1001 = vrot.lane.b32.xlu0 %v238, 24
      %v1002 = vpop.permute.xlu0 %1001
      %1003 = vrot.lane.b32.xlu0 %v240, 24
      %v1004 = vpop.permute.xlu0 %1003
      %1005 = vrot.lane.b32.xlu0 %v241, 24
      %v1006 = vpop.permute.xlu0 %1005
      %1007 = vrot.lane.b32.xlu0 %v243, 24
      %v1008 = vpop.permute.xlu0 %1007
      %1009 = vrot.lane.b32.xlu0 %v244, 24
      %v1010 = vpop.permute.xlu0 %1009
      %1011 = vrot.lane.b32.xlu0 %v246, 24
      %v1012 = vpop.permute.xlu0 %1011
      %1013 = vrot.lane.b32.xlu0 %v247, 24
      %v1014 = vpop.permute.xlu0 %1013
      %1015 = vrot.lane.b32.xlu0 %v249, 24
      %v1016 = vpop.permute.xlu0 %1015
      %1017 = vrot.lane.b32.xlu0 %v250, 24
      %v1018 = vpop.permute.xlu0 %1017
      %1019 = vrot.lane.b32.xlu0 %v252, 24
      %v1020 = vpop.permute.xlu0 %1019
      %1021 = vrot.lane.b32.xlu0 %v253, 24
      %v1022 = vpop.permute.xlu0 %1021
      %1023 = vrot.lane.b32.xlu0 %v255, 24
      %v1024 = vpop.permute.xlu0 %1023
      %1025 = vrot.lane.b32.xlu0 %v256, 24
      %v1026 = vpop.permute.xlu0 %1025
      %1027 = vrot.lane.b32.xlu0 %v258, 24
      %v1028 = vpop.permute.xlu0 %1027
      %1029 = vrot.lane.b32.xlu0 %v259, 24
      %v1030 = vpop.permute.xlu0 %1029
      %1031 = vrot.lane.b32.xlu0 %v261, 24
      %v1032 = vpop.permute.xlu0 %1031
      %1033 = vrot.lane.b32.xlu0 %v262, 24
      %v1034 = vpop.permute.xlu0 %1033
      %1035 = vrot.lane.b32.xlu0 %v264, 24
      %v1036 = vpop.permute.xlu0 %1035
      %1037 = vrot.lane.b32.xlu0 %v265, 24
      %v1038 = vpop.permute.xlu0 %1037
      %1039 = vrot.lane.b32.xlu0 %v267, 24
      %v1040 = vpop.permute.xlu0 %1039
      %1041 = vrot.lane.b32.xlu0 %v268, 24
      %v1042 = vpop.permute.xlu0 %1041
      %1043 = vrot.lane.b32.xlu0 %v270, 24
      %v1044 = vpop.permute.xlu0 %1043
      %1045 = vrot.lane.b32.xlu0 %v271, 24
      %v1046 = vpop.permute.xlu0 %1045
      %1047 = vrot.lane.b32.xlu0 %v273, 24
      %v1048 = vpop.permute.xlu0 %1047
      %1049 = vrot.lane.b32.xlu0 %v274, 24
      %v1050 = vpop.permute.xlu0 %1049
      %1051 = vrot.lane.b32.xlu0 %v276, 24
      %v1052 = vpop.permute.xlu0 %1051
      %1053 = vrot.lane.b32.xlu0 %v277, 24
      %v1054 = vpop.permute.xlu0 %1053
      %v1088 = vrot.slane %v276, 1
      %v1089 = vrot.slane %v277, 1
      %v1090 = vsel %vm334, %v1088, %v1089
      %v1091 = vrot.slane %v278, 1
      %v1092 = vsel %vm334, %v1089, %v1091
      %1093 = vrot.lane.b32.xlu0 %v347, 28
      %v1094 = vpop.permute.xlu0 %1093
      %1095 = vrot.lane.b32.xlu0 %v349, 28
      %v1096 = vpop.permute.xlu0 %1095
      %1097 = vrot.lane.b32.xlu0 %v352, 28
      %v1098 = vpop.permute.xlu0 %1097
      %1099 = vrot.lane.b32.xlu0 %v354, 28
      %v1100 = vpop.permute.xlu0 %1099
      %1101 = vrot.lane.b32.xlu0 %v357, 28
      %v1102 = vpop.permute.xlu0 %1101
      %1103 = vrot.lane.b32.xlu0 %v359, 28
      %v1104 = vpop.permute.xlu0 %1103
      %1105 = vrot.lane.b32.xlu0 %v362, 28
      %v1106 = vpop.permute.xlu0 %1105
      %1107 = vrot.lane.b32.xlu0 %v364, 28
      %v1108 = vpop.permute.xlu0 %1107
      %1109 = vrot.lane.b32.xlu0 %v367, 28
      %v1110 = vpop.permute.xlu0 %1109
      %1111 = vrot.lane.b32.xlu0 %v369, 28
      %v1112 = vpop.permute.xlu0 %1111
      %1113 = vrot.lane.b32.xlu0 %v372, 28
      %v1114 = vpop.permute.xlu0 %1113
      %1115 = vrot.lane.b32.xlu0 %v374, 28
      %v1116 = vpop.permute.xlu0 %1115
      %1117 = vrot.lane.b32.xlu0 %v377, 28
      %v1118 = vpop.permute.xlu0 %1117
      %1119 = vrot.lane.b32.xlu0 %v379, 28
      %v1120 = vpop.permute.xlu0 %1119
      %1121 = vrot.lane.b32.xlu0 %v382, 28
      %v1122 = vpop.permute.xlu0 %1121
      %1123 = vrot.lane.b32.xlu0 %v384, 28
      %v1124 = vpop.permute.xlu0 %1123
      %1125 = vrot.lane.b32.xlu0 %v387, 28
      %v1126 = vpop.permute.xlu0 %1125
      %1127 = vrot.lane.b32.xlu0 %v389, 28
      %v1128 = vpop.permute.xlu0 %1127
      %1129 = vrot.lane.b32.xlu0 %v392, 28
      %v1130 = vpop.permute.xlu0 %1129
      %1131 = vrot.lane.b32.xlu0 %v394, 28
      %v1132 = vpop.permute.xlu0 %1131
      %1133 = vrot.lane.b32.xlu0 %v397, 28
      %v1134 = vpop.permute.xlu0 %1133
      %1135 = vrot.lane.b32.xlu0 %v399, 28
      %v1136 = vpop.permute.xlu0 %1135
      %1137 = vrot.lane.b32.xlu0 %v402, 28
      %v1138 = vpop.permute.xlu0 %1137
      %1139 = vrot.lane.b32.xlu0 %v404, 28
      %v1140 = vpop.permute.xlu0 %1139
      %1141 = vrot.lane.b32.xlu0 %v407, 28
      %v1142 = vpop.permute.xlu0 %1141
      %1143 = vrot.lane.b32.xlu0 %v409, 28
      %v1144 = vpop.permute.xlu0 %1143
      %1145 = vrot.lane.b32.xlu0 %v412, 28
      %v1146 = vpop.permute.xlu0 %1145
      %1147 = vrot.lane.b32.xlu0 %v414, 28
      %v1148 = vpop.permute.xlu0 %1147
      %1149 = vrot.lane.b32.xlu0 %v789, 28
      %v1150 = vpop.permute.xlu0 %1149
      %1151 = vrot.lane.b32.xlu0 %v791, 28
      %v1152 = vpop.permute.xlu0 %1151
      %1153 = vrot.lane.b32.xlu0 %v1090, 28
      %v1154 = vpop.permute.xlu0 %1153
      %1155 = vrot.lane.b32.xlu0 %v1092, 28
      %v1156 = vpop.permute.xlu0 %1155
      %v1189 = vrot.slane %v276, 2
      %v1190 = vrot.slane %v277, 2
      %v1191 = vsel %vm511, %v1189, %v1190
      %v1192 = vrot.slane %v278, 2
      %v1193 = vsel %vm511, %v1190, %v1192
      %1194 = vrot.lane.b32.xlu0 %v524, 32
      %v1195 = vpop.permute.xlu0 %1194
      %1196 = vrot.lane.b32.xlu0 %v526, 32
      %v1197 = vpop.permute.xlu0 %1196
      %1198 = vrot.lane.b32.xlu0 %v529, 32
      %v1199 = vpop.permute.xlu0 %1198
      %1200 = vrot.lane.b32.xlu0 %v531, 32
      %v1201 = vpop.permute.xlu0 %1200
      %1202 = vrot.lane.b32.xlu0 %v534, 32
      %v1203 = vpop.permute.xlu0 %1202
      %1204 = vrot.lane.b32.xlu0 %v536, 32
      %v1205 = vpop.permute.xlu0 %1204
      %1206 = vrot.lane.b32.xlu0 %v539, 32
      %v1207 = vpop.permute.xlu0 %1206
      %1208 = vrot.lane.b32.xlu0 %v541, 32
      %v1209 = vpop.permute.xlu0 %1208
      %1210 = vrot.lane.b32.xlu0 %v544, 32
      %v1211 = vpop.permute.xlu0 %1210
      %1212 = vrot.lane.b32.xlu0 %v546, 32
      %v1213 = vpop.permute.xlu0 %1212
      %1214 = vrot.lane.b32.xlu0 %v549, 32
      %v1215 = vpop.permute.xlu0 %1214
      %1216 = vrot.lane.b32.xlu0 %v551, 32
      %v1217 = vpop.permute.xlu0 %1216
      %1218 = vrot.lane.b32.xlu0 %v554, 32
      %v1219 = vpop.permute.xlu0 %1218
      %1220 = vrot.lane.b32.xlu0 %v556, 32
      %v1221 = vpop.permute.xlu0 %1220
      %1222 = vrot.lane.b32.xlu0 %v559, 32
      %v1223 = vpop.permute.xlu0 %1222
      %1224 = vrot.lane.b32.xlu0 %v561, 32
      %v1225 = vpop.permute.xlu0 %1224
      %1226 = vrot.lane.b32.xlu0 %v564, 32
      %v1227 = vpop.permute.xlu0 %1226
      %1228 = vrot.lane.b32.xlu0 %v566, 32
      %v1229 = vpop.permute.xlu0 %1228
      %1230 = vrot.lane.b32.xlu0 %v569, 32
      %v1231 = vpop.permute.xlu0 %1230
      %1232 = vrot.lane.b32.xlu0 %v571, 32
      %v1233 = vpop.permute.xlu0 %1232
      %1234 = vrot.lane.b32.xlu0 %v574, 32
      %v1235 = vpop.permute.xlu0 %1234
      %1236 = vrot.lane.b32.xlu0 %v576, 32
      %v1237 = vpop.permute.xlu0 %1236
      %1238 = vrot.lane.b32.xlu0 %v579, 32
      %v1239 = vpop.permute.xlu0 %1238
      %1240 = vrot.lane.b32.xlu0 %v581, 32
      %v1241 = vpop.permute.xlu0 %1240
      %1242 = vrot.lane.b32.xlu0 %v584, 32
      %v1243 = vpop.permute.xlu0 %1242
      %1244 = vrot.lane.b32.xlu0 %v586, 32
      %v1245 = vpop.permute.xlu0 %1244
      %1246 = vrot.lane.b32.xlu0 %v589, 32
      %v1247 = vpop.permute.xlu0 %1246
      %1248 = vrot.lane.b32.xlu0 %v591, 32
      %v1249 = vpop.permute.xlu0 %1248
      %1250 = vrot.lane.b32.xlu0 %v890, 32
      %v1251 = vpop.permute.xlu0 %1250
      %1252 = vrot.lane.b32.xlu0 %v892, 32
      %v1253 = vpop.permute.xlu0 %1252
      %1254 = vrot.lane.b32.xlu0 %v1191, 32
      %v1255 = vpop.permute.xlu0 %1254
      %1256 = vrot.lane.b32.xlu0 %v1193, 32
      %v1257 = vpop.permute.xlu0 %1256
      %vm1290 = vcmask 31744
      %v1291 = vsel %vm1290, %v225, %v416
      %v1292 = vsel %vm1290, %v226, %v418
      %v1293 = vsel %vm1290, %v228, %v420
      %v1294 = vsel %vm1290, %v229, %v422
      %v1295 = vsel %vm1290, %v231, %v424
      %v1296 = vsel %vm1290, %v232, %v426
      %v1297 = vsel %vm1290, %v234, %v428
      %v1298 = vsel %vm1290, %v235, %v430
      %v1299 = vsel %vm1290, %v237, %v432
      %v1300 = vsel %vm1290, %v238, %v434
      %v1301 = vsel %vm1290, %v240, %v436
      %v1302 = vsel %vm1290, %v241, %v438
      %v1303 = vsel %vm1290, %v243, %v440
      %v1304 = vsel %vm1290, %v244, %v442
      %v1305 = vsel %vm1290, %v246, %v444
      %v1306 = vsel %vm1290, %v247, %v446
      %v1307 = vsel %vm1290, %v249, %v448
      %v1308 = vsel %vm1290, %v250, %v450
      %v1309 = vsel %vm1290, %v252, %v452
      %v1310 = vsel %vm1290, %v253, %v454
      %v1311 = vsel %vm1290, %v255, %v456
      %v1312 = vsel %vm1290, %v256, %v458
      %v1313 = vsel %vm1290, %v258, %v460
      %v1314 = vsel %vm1290, %v259, %v462
      %v1315 = vsel %vm1290, %v261, %v464
      %v1316 = vsel %vm1290, %v262, %v466
      %v1317 = vsel %vm1290, %v264, %v468
      %v1318 = vsel %vm1290, %v265, %v470
      %v1319 = vsel %vm1290, %v267, %v472
      %v1320 = vsel %vm1290, %v268, %v474
      %v1321 = vsel %vm1290, %v270, %v476
      %v1322 = vsel %vm1290, %v271, %v478
      %vm1323 = vcmask 64512
      %v1324 = vsel %vm1323, %v1291, %v593
      %v1325 = vsel %vm1323, %v1292, %v595
      %v1326 = vsel %vm1323, %v1293, %v597
      %v1327 = vsel %vm1323, %v1294, %v599
      %v1328 = vsel %vm1323, %v1295, %v601
      %v1329 = vsel %vm1323, %v1296, %v603
      %v1330 = vsel %vm1323, %v1297, %v605
      %v1331 = vsel %vm1323, %v1298, %v607
      %v1332 = vsel %vm1323, %v1299, %v609
      %v1333 = vsel %vm1323, %v1300, %v611
      %v1334 = vsel %vm1323, %v1301, %v613
      %v1335 = vsel %vm1323, %v1302, %v615
      %v1336 = vsel %vm1323, %v1303, %v617
      %v1337 = vsel %vm1323, %v1304, %v619
      %v1338 = vsel %vm1323, %v1305, %v621
      %v1339 = vsel %vm1323, %v1306, %v623
      %v1340 = vsel %vm1323, %v1307, %v625
      %v1341 = vsel %vm1323, %v1308, %v627
      %v1342 = vsel %vm1323, %v1309, %v629
      %v1343 = vsel %vm1323, %v1310, %v631
      %v1344 = vsel %vm1323, %v1311, %v633
      %v1345 = vsel %vm1323, %v1312, %v635
      %v1346 = vsel %vm1323, %v1313, %v637
      %v1347 = vsel %vm1323, %v1314, %v639
      %v1348 = vsel %vm1323, %v1315, %v641
      %v1349 = vsel %vm1323, %v1316, %v643
      %v1350 = vsel %vm1323, %v1317, %v645
      %v1351 = vsel %vm1323, %v1318, %v647
      %v1352 = vsel %vm1323, %v1319, %v649
      %v1353 = vsel %vm1323, %v1320, %v651
      %v1354 = vsel %vm1323, %v1321, %v653
      %v1355 = vsel %vm1323, %v1322, %v655
      %vm1356 = vcmask 97280
      %v1357 = vsel %vm1356, %v1324, %v691
      %v1358 = vsel %vm1356, %v1325, %v693
      %v1359 = vsel %vm1356, %v1326, %v695
      %v1360 = vsel %vm1356, %v1327, %v697
      %v1361 = vsel %vm1356, %v1328, %v699
      %v1362 = vsel %vm1356, %v1329, %v701
      %v1363 = vsel %vm1356, %v1330, %v703
      %v1364 = vsel %vm1356, %v1331, %v705
      %v1365 = vsel %vm1356, %v1332, %v707
      %v1366 = vsel %vm1356, %v1333, %v709
      %v1367 = vsel %vm1356, %v1334, %v711
      %v1368 = vsel %vm1356, %v1335, %v713
      %v1369 = vsel %vm1356, %v1336, %v715
      %v1370 = vsel %vm1356, %v1337, %v717
      %v1371 = vsel %vm1356, %v1338, %v719
      %v1372 = vsel %vm1356, %v1339, %v721
      %v1373 = vsel %vm1356, %v1340, %v723
      %v1374 = vsel %vm1356, %v1341, %v725
      %v1375 = vsel %vm1356, %v1342, %v727
      %v1376 = vsel %vm1356, %v1343, %v729
      %v1377 = vsel %vm1356, %v1344, %v731
      %v1378 = vsel %vm1356, %v1345, %v733
      %v1379 = vsel %vm1356, %v1346, %v735
      %v1380 = vsel %vm1356, %v1347, %v737
      %v1381 = vsel %vm1356, %v1348, %v739
      %v1382 = vsel %vm1356, %v1349, %v741
      %v1383 = vsel %vm1356, %v1350, %v743
      %v1384 = vsel %vm1356, %v1351, %v745
      %v1385 = vsel %vm1356, %v1352, %v747
      %v1386 = vsel %vm1356, %v1353, %v749
      %v1387 = vsel %vm1356, %v1354, %v751
      %v1388 = vsel %vm1356, %v1355, %v753
      %vm1389 = vcmask 130048
      %v1390 = vsel %vm1389, %v1357, %v793
      %v1391 = vsel %vm1389, %v1358, %v795
      %v1392 = vsel %vm1389, %v1359, %v797
      %v1393 = vsel %vm1389, %v1360, %v799
      %v1394 = vsel %vm1389, %v1361, %v801
      %v1395 = vsel %vm1389, %v1362, %v803
      %v1396 = vsel %vm1389, %v1363, %v805
      %v1397 = vsel %vm1389, %v1364, %v807
      %v1398 = vsel %vm1389, %v1365, %v809
      %v1399 = vsel %vm1389, %v1366, %v811
      %v1400 = vsel %vm1389, %v1367, %v813
      %v1401 = vsel %vm1389, %v1368, %v815
      %v1402 = vsel %vm1389, %v1369, %v817
      %v1403 = vsel %vm1389, %v1370, %v819
      %v1404 = vsel %vm1389, %v1371, %v821
      %v1405 = vsel %vm1389, %v1372, %v823
      %v1406 = vsel %vm1389, %v1373, %v825
      %v1407 = vsel %vm1389, %v1374, %v827
      %v1408 = vsel %vm1389, %v1375, %v829
      %v1409 = vsel %vm1389, %v1376, %v831
      %v1410 = vsel %vm1389, %v1377, %v833
      %v1411 = vsel %vm1389, %v1378, %v835
      %v1412 = vsel %vm1389, %v1379, %v837
      %v1413 = vsel %vm1389, %v1380, %v839
      %v1414 = vsel %vm1389, %v1381, %v841
      %v1415 = vsel %vm1389, %v1382, %v843
      %v1416 = vsel %vm1389, %v1383, %v845
      %v1417 = vsel %vm1389, %v1384, %v847
      %v1418 = vsel %vm1389, %v1385, %v849
      %v1419 = vsel %vm1389, %v1386, %v851
      %v1420 = vsel %vm1389, %v1387, %v853
      %v1421 = vsel %vm1389, %v1388, %v855
      %vm1422 = vcmask 162816
      %v1423 = vsel %vm1422, %v1390, %v894
      %v1424 = vsel %vm1422, %v1391, %v896
      %v1425 = vsel %vm1422, %v1392, %v898
      %v1426 = vsel %vm1422, %v1393, %v900
      %v1427 = vsel %vm1422, %v1394, %v902
      %v1428 = vsel %vm1422, %v1395, %v904
      %v1429 = vsel %vm1422, %v1396, %v906
      %v1430 = vsel %vm1422, %v1397, %v908
      %v1431 = vsel %vm1422, %v1398, %v910
      %v1432 = vsel %vm1422, %v1399, %v912
      %v1433 = vsel %vm1422, %v1400, %v914
      %v1434 = vsel %vm1422, %v1401, %v916
      %v1435 = vsel %vm1422, %v1402, %v918
      %v1436 = vsel %vm1422, %v1403, %v920
      %v1437 = vsel %vm1422, %v1404, %v922
      %v1438 = vsel %vm1422, %v1405, %v924
      %v1439 = vsel %vm1422, %v1406, %v926
      %v1440 = vsel %vm1422, %v1407, %v928
      %v1441 = vsel %vm1422, %v1408, %v930
      %v1442 = vsel %vm1422, %v1409, %v932
      %v1443 = vsel %vm1422, %v1410, %v934
      %v1444 = vsel %vm1422, %v1411, %v936
      %v1445 = vsel %vm1422, %v1412, %v938
      %v1446 = vsel %vm1422, %v1413, %v940
      %v1447 = vsel %vm1422, %v1414, %v942
      %v1448 = vsel %vm1422, %v1415, %v944
      %v1449 = vsel %vm1422, %v1416, %v946
      %v1450 = vsel %vm1422, %v1417, %v948
      %v1451 = vsel %vm1422, %v1418, %v950
      %v1452 = vsel %vm1422, %v1419, %v952
      %v1453 = vsel %vm1422, %v1420, %v954
      %v1454 = vsel %vm1422, %v1421, %v956
      %vm1455 = vcmask 195584
      %v1456 = vsel %vm1455, %v1423, %v992
      %v1457 = vsel %vm1455, %v1424, %v994
      %v1458 = vsel %vm1455, %v1425, %v996
      %v1459 = vsel %vm1455, %v1426, %v998
      %v1460 = vsel %vm1455, %v1427, %v1000
      %v1461 = vsel %vm1455, %v1428, %v1002
      %v1462 = vsel %vm1455, %v1429, %v1004
      %v1463 = vsel %vm1455, %v1430, %v1006
      %v1464 = vsel %vm1455, %v1431, %v1008
      %v1465 = vsel %vm1455, %v1432, %v1010
      %v1466 = vsel %vm1455, %v1433, %v1012
      %v1467 = vsel %vm1455, %v1434, %v1014
      %v1468 = vsel %vm1455, %v1435, %v1016
      %v1469 = vsel %vm1455, %v1436, %v1018
      %v1470 = vsel %vm1455, %v1437, %v1020
      %v1471 = vsel %vm1455, %v1438, %v1022
      %v1472 = vsel %vm1455, %v1439, %v1024
      %v1473 = vsel %vm1455, %v1440, %v1026
      %v1474 = vsel %vm1455, %v1441, %v1028
      %v1475 = vsel %vm1455, %v1442, %v1030
      %v1476 = vsel %vm1455, %v1443, %v1032
      %v1477 = vsel %vm1455, %v1444, %v1034
      %v1478 = vsel %vm1455, %v1445, %v1036
      %v1479 = vsel %vm1455, %v1446, %v1038
      %v1480 = vsel %vm1455, %v1447, %v1040
      %v1481 = vsel %vm1455, %v1448, %v1042
      %v1482 = vsel %vm1455, %v1449, %v1044
      %v1483 = vsel %vm1455, %v1450, %v1046
      %v1484 = vsel %vm1455, %v1451, %v1048
      %v1485 = vsel %vm1455, %v1452, %v1050
      %v1486 = vsel %vm1455, %v1453, %v1052
      %v1487 = vsel %vm1455, %v1454, %v1054
      %vm1488 = vcmask 228352
      %v1489 = vsel %vm1488, %v1456, %v1094
      %v1490 = vsel %vm1488, %v1457, %v1096
      %v1491 = vsel %vm1488, %v1458, %v1098
      %v1492 = vsel %vm1488, %v1459, %v1100
      %v1493 = vsel %vm1488, %v1460, %v1102
      %v1494 = vsel %vm1488, %v1461, %v1104
      %v1495 = vsel %vm1488, %v1462, %v1106
      %v1496 = vsel %vm1488, %v1463, %v1108
      %v1497 = vsel %vm1488, %v1464, %v1110
      %v1498 = vsel %vm1488, %v1465, %v1112
      %v1499 = vsel %vm1488, %v1466, %v1114
      %v1500 = vsel %vm1488, %v1467, %v1116
      %v1501 = vsel %vm1488, %v1468, %v1118
      %v1502 = vsel %vm1488, %v1469, %v1120
      %v1503 = vsel %vm1488, %v1470, %v1122
      %v1504 = vsel %vm1488, %v1471, %v1124
      %v1505 = vsel %vm1488, %v1472, %v1126
      %v1506 = vsel %vm1488, %v1473, %v1128
      %v1507 = vsel %vm1488, %v1474, %v1130
      %v1508 = vsel %vm1488, %v1475, %v1132
      %v1509 = vsel %vm1488, %v1476, %v1134
      %v1510 = vsel %vm1488, %v1477, %v1136
      %v1511 = vsel %vm1488, %v1478, %v1138
      %v1512 = vsel %vm1488, %v1479, %v1140
      %v1513 = vsel %vm1488, %v1480, %v1142
      %v1514 = vsel %vm1488, %v1481, %v1144
      %v1515 = vsel %vm1488, %v1482, %v1146
      %v1516 = vsel %vm1488, %v1483, %v1148
      %v1517 = vsel %vm1488, %v1484, %v1150
      %v1518 = vsel %vm1488, %v1485, %v1152
      %v1519 = vsel %vm1488, %v1486, %v1154
      %v1520 = vsel %vm1488, %v1487, %v1156
      %vm1521 = vcmask 261120
      %v1522 = vsel %vm1521, %v1489, %v1195
      %v1523 = vsel %vm1521, %v1490, %v1197
      %v1524 = vsel %vm1521, %v1491, %v1199
      %v1525 = vsel %vm1521, %v1492, %v1201
      %v1526 = vsel %vm1521, %v1493, %v1203
      %v1527 = vsel %vm1521, %v1494, %v1205
      %v1528 = vsel %vm1521, %v1495, %v1207
      %v1529 = vsel %vm1521, %v1496, %v1209
      %v1530 = vsel %vm1521, %v1497, %v1211
      %v1531 = vsel %vm1521, %v1498, %v1213
      %v1532 = vsel %vm1521, %v1499, %v1215
      %v1533 = vsel %vm1521, %v1500, %v1217
      %v1534 = vsel %vm1521, %v1501, %v1219
      %v1535 = vsel %vm1521, %v1502, %v1221
      %v1536 = vsel %vm1521, %v1503, %v1223
      %v1537 = vsel %vm1521, %v1504, %v1225
      %v1538 = vsel %vm1521, %v1505, %v1227
      %v1539 = vsel %vm1521, %v1506, %v1229
      %v1540 = vsel %vm1521, %v1507, %v1231
      %v1541 = vsel %vm1521, %v1508, %v1233
      %v1542 = vsel %vm1521, %v1509, %v1235
      %v1543 = vsel %vm1521, %v1510, %v1237
      %v1544 = vsel %vm1521, %v1511, %v1239
      %v1545 = vsel %vm1521, %v1512, %v1241
      %v1546 = vsel %vm1521, %v1513, %v1243
      %v1547 = vsel %vm1521, %v1514, %v1245
      %v1548 = vsel %vm1521, %v1515, %v1247
      %v1549 = vsel %vm1521, %v1516, %v1249
      %v1550 = vsel %vm1521, %v1517, %v1251
      %v1551 = vsel %vm1521, %v1518, %v1253
      %v1552 = vsel %vm1521, %v1519, %v1255
      %v1553 = vsel %vm1521, %v1520, %v1257
      %v1555 = vlaneseq
      %v1556 = vshrl.u32 %v1555, 7
      %v1557 = vsub.s32 0, %v1556
      %v1558 = vrot.slane %v279, %v1557
      %vm1560 = vcmask 293888
      %v1562 = vsel %vm1560, %v1522, 0
      %v1565 = vsel %vm1560, %v1523, 0
      %v1568 = vsel %vm1560, %v1524, 0
      %v1571 = vsel %vm1560, %v1525, 0
      %v1574 = vsel %vm1560, %v1526, 0
      %v1577 = vsel %vm1560, %v1527, 0
      %v1580 = vsel %vm1560, %v1528, 0
      %v1583 = vsel %vm1560, %v1529, 0
      %v1586 = vsel %vm1560, %v1530, 0
      %v1589 = vsel %vm1560, %v1531, 0
      %v1592 = vsel %vm1560, %v1532, 0
      %v1595 = vsel %vm1560, %v1533, 0
      %v1598 = vsel %vm1560, %v1534, 0
      %v1601 = vsel %vm1560, %v1535, 0
      %v1604 = vsel %vm1560, %v1536, 0
      %v1607 = vsel %vm1560, %v1537, 0
      %v1610 = vsel %vm1560, %v1538, 0
      %v1613 = vsel %vm1560, %v1539, 0
      %v1616 = vsel %vm1560, %v1540, 0
      %v1619 = vsel %vm1560, %v1541, 0
      %v1622 = vsel %vm1560, %v1542, 0
      %v1625 = vsel %vm1560, %v1543, 0
      %v1628 = vsel %vm1560, %v1544, 0
      %v1631 = vsel %vm1560, %v1545, 0
      %v1634 = vsel %vm1560, %v1546, 0
      %v1637 = vsel %vm1560, %v1547, 0
      %v1640 = vsel %vm1560, %v1548, 0
      %v1643 = vsel %vm1560, %v1549, 0
      %v1646 = vsel %vm1560, %v1550, 0
      %v1649 = vsel %vm1560, %v1551, 0
      %v1652 = vsel %vm1560, %v1552, 0
      %v1655 = vsel %vm1560, %v1553, 0
      %vm1657 = vcmask 1043456
      %v1659 = vsel %vm1657, %v285, 0
      %1661 = vmatprep.subr.mxu0 0.0
      %1662 = vmatpush1.msra.mxu0 %v281
      %1663 = vmatprep.subr.mxu0 0.0
      %1664 = vmatpush1.msra.mxu0 %v282
      %1665 = vmatprep.subr.mxu0 0.0
      %1666 = vmatpush1.msra.mxu0 %v283
      %1667 = vmatprep.subr.mxu0 0.0
      %1668 = vmatpush1.msra.mxu0 %v284
      %1669 = vmatprep.subr.mxu0 0.0
      %1670 = vmatpush1.msra.mxu0 %v1659
      %1671 = vmatprep.subr.mxu0 0.0
      %1672 = vmatpush1.msra.mxu0 0.0
      %1673 = vmatprep.subr.mxu0 0.0
      %1674 = vmatpush1.msra.mxu0 0.0
      %1675 = vmatprep.subr.mxu0 0.0
      %1676 = vmatpush1.msra.mxu0 0.0
      %1677 = vmatprep.subr.mxu0 0.0
      %1678 = vmatpush1.msra.mxu0 0.0
      %1679 = vmatprep.subr.mxu0 0.0
      %1680 = vmatpush1.msra.mxu0 0.0
      %1681 = vmatprep.subr.mxu0 0.0
      %1682 = vmatpush1.msra.mxu0 0.0
      %1683 = vmatprep.subr.mxu0 0.0
      %1684 = vmatpush1.msra.mxu0 0.0
      %1685 = vmatprep.subr.mxu0 0.0
      %1686 = vmatpush1.msra.mxu0 0.0
      %1687 = vmatprep.subr.mxu0 0.0
      %1688 = vmatpush1.msra.mxu0 0.0
      %1689 = vmatprep.subr.mxu0 0.0
      %1690 = vmatpush1.msra.mxu0 0.0
      %1691 = vmatprep.subr.mxu0 0.0
      %1692 = vmatpush1.msra.mxu0 0.0
      %1693 = vmatprep.subr.mxu0 0.0
      %1694 = vmatpush1.msra.mxu0 0.0
      %1695 = vmatprep.subr.mxu0 0.0
      %1696 = vmatpush1.msra.mxu0 0.0
      %1697 = vmatprep.subr.mxu0 0.0
      %1698 = vmatpush1.msra.mxu0 0.0
      %1699 = vmatprep.subr.mxu0 0.0
      %1700 = vmatpush1.msra.mxu0 0.0
      %1701 = vmatprep.subr.mxu0 0.0
      %1702 = vmatpush1.msra.mxu0 0.0
      %1703 = vmatprep.subr.mxu0 0.0
      %1704 = vmatpush1.msra.mxu0 0.0
      %1705 = vmatprep.subr.mxu0 0.0
      %1706 = vmatpush1.msra.mxu0 0.0
      %1707 = vmatprep.subr.mxu0 0.0
      %1708 = vmatpush1.msra.mxu0 0.0
      %1709 = vmatprep.subr.mxu0 0.0
      %1710 = vmatpush1.msra.mxu0 0.0
      %1711 = vmatprep.subr.mxu0 0.0
      %1712 = vmatpush1.msra.mxu0 0.0
      %1713 = vmatprep.subr.mxu0 0.0
      %1714 = vmatpush1.msra.mxu0 0.0
      %1715 = vmatprep.subr.mxu0 0.0
      %1716 = vmatpush1.msra.mxu0 0.0
      %1717 = vmatprep.subr.mxu0 0.0
      %1718 = vmatpush1.msra.mxu0 0.0
      %1719 = vmatprep.subr.mxu0 0.0
      %1720 = vmatpush1.msra.mxu0 0.0
      %1721 = vmatprep.subr.mxu0 0.0
      %1722 = vmatpush1.msra.mxu0 0.0
      %1723 = vmatprep.subr.mxu0 0.0
      %1724 = vmatpush1.msra.mxu0 0.0
      %1725 = vmatprep.mubr.f32.mxu0 0.0
      %1726 = vmatmul.mubr.f32.gmra.mrb[0].mxu0 %v1562
      %v1727 = vpop.f32.mrb[0].mxu0
      %v1728 = vadd.f32 %v1558, %v1727
      %v1729 = vpop.f32.mrb[0].mxu0
      %1730 = vmatprep.mubr.f32.mxu0 0.0
      %1731 = vmatmul.mubr.f32.gmra.mrb[0].mxu0 %v1565
      %v1732 = vpop.f32.mrb[0].mxu0
      %v1733 = vadd.f32 %v1558, %v1732
      %v1734 = vpop.f32.mrb[0].mxu0
      %1735 = vmatprep.mubr.f32.mxu0 0.0
      %1736 = vmatmul.mubr.f32.gmra.mrb[0].mxu0 %v1568
      %v1737 = vpop.f32.mrb[0].mxu0
      %v1738 = vadd.f32 %v1558, %v1737
      %v1739 = vpop.f32.mrb[0].mxu0
      %1740 = vmatprep.mubr.f32.mxu0 0.0
      %1741 = vmatmul.mubr.f32.gmra.mrb[0].mxu0 %v1571
      %v1742 = vpop.f32.mrb[0].mxu0
      %v1743 = vadd.f32 %v1558, %v1742
      %v1744 = vpop.f32.mrb[0].mxu0
      %1745 = vmatprep.mubr.f32.mxu0 0.0
      %1746 = vmatmul.mubr.f32.gmra.mrb[0].mxu0 %v1574
      %v1747 = vpop.f32.mrb[0].mxu0
      %v1748 = vadd.f32 %v1558, %v1747
      %v1749 = vpop.f32.mrb[0].mxu0
      %1750 = vmatprep.mubr.f32.mxu0 0.0
      %1751 = vmatmul.mubr.f32.gmra.mrb[0].mxu0 %v1577
      %v1752 = vpop.f32.mrb[0].mxu0
      %v1753 = vadd.f32 %v1558, %v1752
      %v1754 = vpop.f32.mrb[0].mxu0
      %1755 = vmatprep.mubr.f32.mxu0 0.0
      %1756 = vmatmul.mubr.f32.gmra.mrb[0].mxu0 %v1580
      %v1757 = vpop.f32.mrb[0].mxu0
      %v1758 = vadd.f32 %v1558, %v1757
      %v1759 = vpop.f32.mrb[0].mxu0
      %1760 = vmatprep.mubr.f32.mxu0 0.0
      %1761 = vmatmul.mubr.f32.gmra.mrb[0].mxu0 %v1583
      %v1762 = vpop.f32.mrb[0].mxu0
      %v1763 = vadd.f32 %v1558, %v1762
      %v1764 = vpop.f32.mrb[0].mxu0
      %1765 = vmatprep.mubr.f32.mxu0 0.0
      %1766 = vmatmul.mubr.f32.gmra.mrb[0].mxu0 %v1586
      %v1767 = vpop.f32.mrb[0].mxu0
      %v1768 = vadd.f32 %v1558, %v1767
      %v1769 = vpop.f32.mrb[0].mxu0
      %1770 = vmatprep.mubr.f32.mxu0 0.0
      %1771 = vmatmul.mubr.f32.gmra.mrb[0].mxu0 %v1589
      %v1772 = vpop.f32.mrb[0].mxu0
      %v1773 = vadd.f32 %v1558, %v1772
      %v1774 = vpop.f32.mrb[0].mxu0
      %1775 = vmatprep.mubr.f32.mxu0 0.0
      %1776 = vmatmul.mubr.f32.gmra.mrb[0].mxu0 %v1592
      %v1777 = vpop.f32.mrb[0].mxu0
      %v1778 = vadd.f32 %v1558, %v1777
      %v1779 = vpop.f32.mrb[0].mxu0
      %1780 = vmatprep.mubr.f32.mxu0 0.0
      %1781 = vmatmul.mubr.f32.gmra.mrb[0].mxu0 %v1595
      %v1782 = vpop.f32.mrb[0].mxu0
      %v1783 = vadd.f32 %v1558, %v1782
      %v1784 = vpop.f32.mrb[0].mxu0
      %1785 = vmatprep.mubr.f32.mxu0 0.0
      %1786 = vmatmul.mubr.f32.gmra.mrb[0].mxu0 %v1598
      %v1787 = vpop.f32.mrb[0].mxu0
      %v1788 = vadd.f32 %v1558, %v1787
      %v1789 = vpop.f32.mrb[0].mxu0
      %1790 = vmatprep.mubr.f32.mxu0 0.0
      %1791 = vmatmul.mubr.f32.gmra.mrb[0].mxu0 %v1601
      %v1792 = vpop.f32.mrb[0].mxu0
      %v1793 = vadd.f32 %v1558, %v1792
      %v1794 = vpop.f32.mrb[0].mxu0
      %1795 = vmatprep.mubr.f32.mxu0 0.0
      %1796 = vmatmul.mubr.f32.gmra.mrb[0].mxu0 %v1604
      %v1797 = vpop.f32.mrb[0].mxu0
      %v1798 = vadd.f32 %v1558, %v1797
      %v1799 = vpop.f32.mrb[0].mxu0
      %1800 = vmatprep.mubr.f32.mxu0 0.0
      %1801 = vmatmul.mubr.f32.gmra.mrb[0].mxu0 %v1607
      %v1802 = vpop.f32.mrb[0].mxu0
      %v1803 = vadd.f32 %v1558, %v1802
      %v1804 = vpop.f32.mrb[0].mxu0
      %1805 = vmatprep.mubr.f32.mxu0 0.0
      %1806 = vmatmul.mubr.f32.gmra.mrb[0].mxu0 %v1610
      %v1807 = vpop.f32.mrb[0].mxu0
      %v1808 = vadd.f32 %v1558, %v1807
      %v1809 = vpop.f32.mrb[0].mxu0
      %1810 = vmatprep.mubr.f32.mxu0 0.0
      %1811 = vmatmul.mubr.f32.gmra.mrb[0].mxu0 %v1613
      %v1812 = vpop.f32.mrb[0].mxu0
      %v1813 = vadd.f32 %v1558, %v1812
      %v1814 = vpop.f32.mrb[0].mxu0
      %1815 = vmatprep.mubr.f32.mxu0 0.0
      %1816 = vmatmul.mubr.f32.gmra.mrb[0].mxu0 %v1616
      %v1817 = vpop.f32.mrb[0].mxu0
      %v1818 = vadd.f32 %v1558, %v1817
      %v1819 = vpop.f32.mrb[0].mxu0
      %1820 = vmatprep.mubr.f32.mxu0 0.0
      %1821 = vmatmul.mubr.f32.gmra.mrb[0].mxu0 %v1619
      %v1822 = vpop.f32.mrb[0].mxu0
      %v1823 = vadd.f32 %v1558, %v1822
      %v1824 = vpop.f32.mrb[0].mxu0
      %1825 = vmatprep.mubr.f32.mxu0 0.0
      %1826 = vmatmul.mubr.f32.gmra.mrb[0].mxu0 %v1622
      %v1827 = vpop.f32.mrb[0].mxu0
      %v1828 = vadd.f32 %v1558, %v1827
      %v1829 = vpop.f32.mrb[0].mxu0
      %1830 = vmatprep.mubr.f32.mxu0 0.0
      %1831 = vmatmul.mubr.f32.gmra.mrb[0].mxu0 %v1625
      %v1832 = vpop.f32.mrb[0].mxu0
      %v1833 = vadd.f32 %v1558, %v1832
      %v1834 = vpop.f32.mrb[0].mxu0
      %1835 = vmatprep.mubr.f32.mxu0 0.0
      %1836 = vmatmul.mubr.f32.gmra.mrb[0].mxu0 %v1628
      %v1837 = vpop.f32.mrb[0].mxu0
      %v1838 = vadd.f32 %v1558, %v1837
      %v1839 = vpop.f32.mrb[0].mxu0
      %1840 = vmatprep.mubr.f32.mxu0 0.0
      %1841 = vmatmul.mubr.f32.gmra.mrb[0].mxu0 %v1631
      %v1842 = vpop.f32.mrb[0].mxu0
      %v1843 = vadd.f32 %v1558, %v1842
      %v1844 = vpop.f32.mrb[0].mxu0
      %1845 = vmatprep.mubr.f32.mxu0 0.0
      %1846 = vmatmul.mubr.f32.gmra.mrb[0].mxu0 %v1634
      %v1847 = vpop.f32.mrb[0].mxu0
      %v1848 = vadd.f32 %v1558, %v1847
      %v1849 = vpop.f32.mrb[0].mxu0
      %1850 = vmatprep.mubr.f32.mxu0 0.0
      %1851 = vmatmul.mubr.f32.gmra.mrb[0].mxu0 %v1637
      %v1852 = vpop.f32.mrb[0].mxu0
      %v1853 = vadd.f32 %v1558, %v1852
      %v1854 = vpop.f32.mrb[0].mxu0
      %1855 = vmatprep.mubr.f32.mxu0 0.0
      %1856 = vmatmul.mubr.f32.gmra.mrb[0].mxu0 %v1640
      %v1857 = vpop.f32.mrb[0].mxu0
      %v1858 = vadd.f32 %v1558, %v1857
      %v1859 = vpop.f32.mrb[0].mxu0
      %1860 = vmatprep.mubr.f32.mxu0 0.0
      %1861 = vmatmul.mubr.f32.gmra.mrb[0].mxu0 %v1643
      %v1862 = vpop.f32.mrb[0].mxu0
      %v1863 = vadd.f32 %v1558, %v1862
      %v1864 = vpop.f32.mrb[0].mxu0
      %1865 = vmatprep.mubr.f32.mxu0 0.0
      %1866 = vmatmul.mubr.f32.gmra.mrb[0].mxu0 %v1646
      %v1867 = vpop.f32.mrb[0].mxu0
      %v1868 = vadd.f32 %v1558, %v1867
      %v1869 = vpop.f32.mrb[0].mxu0
      %1870 = vmatprep.mubr.f32.mxu0 0.0
      %1871 = vmatmul.mubr.f32.gmra.mrb[0].mxu0 %v1649
      %v1872 = vpop.f32.mrb[0].mxu0
      %v1873 = vadd.f32 %v1558, %v1872
      %v1874 = vpop.f32.mrb[0].mxu0
      %1875 = vmatprep.mubr.f32.mxu0 0.0
      %1876 = vmatmul.mubr.f32.gmra.mrb[0].mxu0 %v1652
      %v1877 = vpop.f32.mrb[0].mxu0
      %v1878 = vadd.f32 %v1558, %v1877
      %v1879 = vpop.f32.mrb[0].mxu0
      %1880 = vmatprep.mubr.f32.mxu0 0.0
      %1881 = vmatmul.mubr.f32.gmra.mrb[0].mxu0 %v1655
      %v1882 = vpop.f32.mrb[0].mxu0
      %v1883 = vadd.f32 %v1558, %v1882
      %v1884 = vpop.f32.mrb[0].mxu0
      %1885 = vdwg.mxu0
      %v1886 = vsel %vm1290, %v1728, 0.0
      %v1887 = vsel %vm1290, %v1733, 0.0
      %v1888 = vadd.f32 %v1886, %v1887
      %v1889 = vsel %vm1290, %v1738, 0.0
      %v1890 = vadd.f32 %v1888, %v1889
      %v1891 = vsel %vm1290, %v1743, 0.0
      %v1892 = vadd.f32 %v1890, %v1891
      %v1893 = vsel %vm1290, %v1748, 0.0
      %v1894 = vadd.f32 %v1892, %v1893
      %v1895 = vsel %vm1290, %v1753, 0.0
      %v1896 = vadd.f32 %v1894, %v1895
      %v1897 = vsel %vm1290, %v1758, 0.0
      %v1898 = vadd.f32 %v1896, %v1897
      %v1899 = vsel %vm1290, %v1763, 0.0
      %v1900 = vadd.f32 %v1898, %v1899
      %v1901 = vsel %vm1290, %v1768, 0.0
      %v1902 = vadd.f32 %v1900, %v1901
      %v1903 = vsel %vm1290, %v1773, 0.0
      %v1904 = vadd.f32 %v1902, %v1903
      %v1905 = vsel %vm1290, %v1778, 0.0
      %v1906 = vadd.f32 %v1904, %v1905
      %v1907 = vsel %vm1290, %v1783, 0.0
      %v1908 = vadd.f32 %v1906, %v1907
      %v1909 = vsel %vm1290, %v1788, 0.0
      %v1910 = vadd.f32 %v1908, %v1909
      %v1911 = vsel %vm1290, %v1793, 0.0
      %v1912 = vadd.f32 %v1910, %v1911
      %v1913 = vsel %vm1290, %v1798, 0.0
      %v1914 = vadd.f32 %v1912, %v1913
      %v1915 = vsel %vm1290, %v1803, 0.0
      %v1916 = vadd.f32 %v1914, %v1915
      %v1917 = vsel %vm1290, %v1808, 0.0
      %v1918 = vadd.f32 %v1916, %v1917
      %v1919 = vsel %vm1290, %v1813, 0.0
      %v1920 = vadd.f32 %v1918, %v1919
      %v1921 = vsel %vm1290, %v1818, 0.0
      %v1922 = vadd.f32 %v1920, %v1921
      %v1923 = vsel %vm1290, %v1823, 0.0
      %v1924 = vadd.f32 %v1922, %v1923
      %v1925 = vsel %vm1290, %v1828, 0.0
      %v1926 = vadd.f32 %v1924, %v1925
      %v1927 = vsel %vm1290, %v1833, 0.0
      %v1928 = vadd.f32 %v1926, %v1927
      %v1929 = vsel %vm1290, %v1838, 0.0
      %v1930 = vadd.f32 %v1928, %v1929
      %v1931 = vsel %vm1290, %v1843, 0.0
      %v1932 = vadd.f32 %v1930, %v1931
      %v1933 = vsel %vm1290, %v1848, 0.0
      %v1934 = vadd.f32 %v1932, %v1933
      %v1935 = vsel %vm1290, %v1853, 0.0
      %v1936 = vadd.f32 %v1934, %v1935
      %v1937 = vsel %vm1290, %v1858, 0.0
      %v1938 = vadd.f32 %v1936, %v1937
      %v1939 = vsel %vm1290, %v1863, 0.0
      %v1940 = vadd.f32 %v1938, %v1939
      %v1941 = vsel %vm1290, %v1868, 0.0
      %v1942 = vadd.f32 %v1940, %v1941
      %v1943 = vsel %vm1290, %v1873, 0.0
      %v1944 = vadd.f32 %v1942, %v1943
      %v1945 = vsel %vm1290, %v1878, 0.0
      %v1946 = vadd.f32 %v1944, %v1945
      %v1947 = vsel %vm1290, %v1883, 0.0
      %v1948 = vadd.f32 %v1946, %v1947
      %v1949 = vrot.slane %v1948, 4
      %v1950 = vadd.f32 %v1948, %v1949
      %v1951 = vrot.slane %v1950, 2
      %v1952 = vadd.f32 %v1950, %v1951
      %v1953 = vrot.slane %v1952, 1
      %v1954 = vadd.f32 %v1952, %v1953
      %v1955 = vmul.f32 %v1728, %v1728
      %v1956 = vmul.f32 %v1733, %v1733
      %v1957 = vmul.f32 %v1738, %v1738
      %v1958 = vmul.f32 %v1743, %v1743
      %v1959 = vmul.f32 %v1748, %v1748
      %v1960 = vmul.f32 %v1753, %v1753
      %v1961 = vmul.f32 %v1758, %v1758
      %v1962 = vmul.f32 %v1763, %v1763
      %v1963 = vmul.f32 %v1768, %v1768
      %v1964 = vmul.f32 %v1773, %v1773
      %v1965 = vmul.f32 %v1778, %v1778
      %v1966 = vmul.f32 %v1783, %v1783
      %v1967 = vmul.f32 %v1788, %v1788
      %v1968 = vmul.f32 %v1793, %v1793
      %v1969 = vmul.f32 %v1798, %v1798
      %v1970 = vmul.f32 %v1803, %v1803
      %v1971 = vmul.f32 %v1808, %v1808
      %v1972 = vmul.f32 %v1813, %v1813
      %v1973 = vmul.f32 %v1818, %v1818
      %v1974 = vmul.f32 %v1823, %v1823
      %v1975 = vmul.f32 %v1828, %v1828
      %v1976 = vmul.f32 %v1833, %v1833
      %v1977 = vmul.f32 %v1838, %v1838
      %v1978 = vmul.f32 %v1843, %v1843
      %v1979 = vmul.f32 %v1848, %v1848
      %v1980 = vmul.f32 %v1853, %v1853
      %v1981 = vmul.f32 %v1858, %v1858
      %v1982 = vmul.f32 %v1863, %v1863
      %v1983 = vmul.f32 %v1868, %v1868
      %v1984 = vmul.f32 %v1873, %v1873
      %v1985 = vmul.f32 %v1878, %v1878
      %v1986 = vmul.f32 %v1883, %v1883
      %v1987 = vsel %vm1290, %v1955, 0.0
      %v1988 = vsel %vm1290, %v1956, 0.0
      %v1989 = vadd.f32 %v1987, %v1988
      %v1990 = vsel %vm1290, %v1957, 0.0
      %v1991 = vadd.f32 %v1989, %v1990
      %v1992 = vsel %vm1290, %v1958, 0.0
      %v1993 = vadd.f32 %v1991, %v1992
      %v1994 = vsel %vm1290, %v1959, 0.0
      %v1995 = vadd.f32 %v1993, %v1994
      %v1996 = vsel %vm1290, %v1960, 0.0
      %v1997 = vadd.f32 %v1995, %v1996
      %v1998 = vsel %vm1290, %v1961, 0.0
      %v1999 = vadd.f32 %v1997, %v1998
      %v2000 = vsel %vm1290, %v1962, 0.0
      %v2001 = vadd.f32 %v1999, %v2000
      %v2002 = vsel %vm1290, %v1963, 0.0
      %v2003 = vadd.f32 %v2001, %v2002
      %v2004 = vsel %vm1290, %v1964, 0.0
      %v2005 = vadd.f32 %v2003, %v2004
      %v2006 = vsel %vm1290, %v1965, 0.0
      %v2007 = vadd.f32 %v2005, %v2006
      %v2008 = vsel %vm1290, %v1966, 0.0
      %v2009 = vadd.f32 %v2007, %v2008
      %v2010 = vsel %vm1290, %v1967, 0.0
      %v2011 = vadd.f32 %v2009, %v2010
      %v2012 = vsel %vm1290, %v1968, 0.0
      %v2013 = vadd.f32 %v2011, %v2012
      %v2014 = vsel %vm1290, %v1969, 0.0
      %v2015 = vadd.f32 %v2013, %v2014
      %v2016 = vsel %vm1290, %v1970, 0.0
      %v2017 = vadd.f32 %v2015, %v2016
      %v2018 = vsel %vm1290, %v1971, 0.0
      %v2019 = vadd.f32 %v2017, %v2018
      %v2020 = vsel %vm1290, %v1972, 0.0
      %v2021 = vadd.f32 %v2019, %v2020
      %v2022 = vsel %vm1290, %v1973, 0.0
      %v2023 = vadd.f32 %v2021, %v2022
      %v2024 = vsel %vm1290, %v1974, 0.0
      %v2025 = vadd.f32 %v2023, %v2024
      %v2026 = vsel %vm1290, %v1975, 0.0
      %v2027 = vadd.f32 %v2025, %v2026
      %v2028 = vsel %vm1290, %v1976, 0.0
      %v2029 = vadd.f32 %v2027, %v2028
      %v2030 = vsel %vm1290, %v1977, 0.0
      %v2031 = vadd.f32 %v2029, %v2030
      %v2032 = vsel %vm1290, %v1978, 0.0
      %v2033 = vadd.f32 %v2031, %v2032
      %v2034 = vsel %vm1290, %v1979, 0.0
      %v2035 = vadd.f32 %v2033, %v2034
      %v2036 = vsel %vm1290, %v1980, 0.0
      %v2037 = vadd.f32 %v2035, %v2036
      %v2038 = vsel %vm1290, %v1981, 0.0
      %v2039 = vadd.f32 %v2037, %v2038
      %v2040 = vsel %vm1290, %v1982, 0.0
      %v2041 = vadd.f32 %v2039, %v2040
      %v2042 = vsel %vm1290, %v1983, 0.0
      %v2043 = vadd.f32 %v2041, %v2042
      %v2044 = vsel %vm1290, %v1984, 0.0
      %v2045 = vadd.f32 %v2043, %v2044
      %v2046 = vsel %vm1290, %v1985, 0.0
      %v2047 = vadd.f32 %v2045, %v2046
      %v2048 = vsel %vm1290, %v1986, 0.0
      %v2049 = vadd.f32 %v2047, %v2048
      %v2050 = vrot.slane %v2049, 4
      %v2051 = vadd.f32 %v2049, %v2050
      %v2052 = vrot.slane %v2051, 2
      %v2053 = vadd.f32 %v2051, %v2052
      %v2054 = vrot.slane %v2053, 1
      %v2055 = vadd.f32 %v2053, %v2054
      %v2056 = vmul.f32 %v1954, 0.00390625
      %v2057 = vmul.f32 %v2055, 0.00390625
      %v2058 = vmul.f32 %v2056, %v2056
      %v2059 = vsub.f32 %v2057, %v2058
      %v2060 = vsub.f32 %v1728, %v2056
      %v2061 = vsub.f32 %v1733, %v2056
      %v2062 = vsub.f32 %v1738, %v2056
      %v2063 = vsub.f32 %v1743, %v2056
      %v2064 = vsub.f32 %v1748, %v2056
      %v2065 = vsub.f32 %v1753, %v2056
      %v2066 = vsub.f32 %v1758, %v2056
      %v2067 = vsub.f32 %v1763, %v2056
      %v2068 = vsub.f32 %v1768, %v2056
      %v2069 = vsub.f32 %v1773, %v2056
      %v2070 = vsub.f32 %v1778, %v2056
      %v2071 = vsub.f32 %v1783, %v2056
      %v2072 = vsub.f32 %v1788, %v2056
      %v2073 = vsub.f32 %v1793, %v2056
      %v2074 = vsub.f32 %v1798, %v2056
      %v2075 = vsub.f32 %v1803, %v2056
      %v2076 = vsub.f32 %v1808, %v2056
      %v2077 = vsub.f32 %v1813, %v2056
      %v2078 = vsub.f32 %v1818, %v2056
      %v2079 = vsub.f32 %v1823, %v2056
      %v2080 = vsub.f32 %v1828, %v2056
      %v2081 = vsub.f32 %v1833, %v2056
      %v2082 = vsub.f32 %v1838, %v2056
      %v2083 = vsub.f32 %v1843, %v2056
      %v2084 = vsub.f32 %v1848, %v2056
      %v2085 = vsub.f32 %v1853, %v2056
      %v2086 = vsub.f32 %v1858, %v2056
      %v2087 = vsub.f32 %v1863, %v2056
      %v2088 = vsub.f32 %v1868, %v2056
      %v2089 = vsub.f32 %v1873, %v2056
      %v2090 = vsub.f32 %v1878, %v2056
      %v2091 = vsub.f32 %v1883, %v2056
      %v2092 = vadd.f32 %v2059, 1e-05
      %v2093 = vrsqrt.pop %v2092
      %v2094 = vmul.f32 %v2060, %v2093
      %v2095 = vmul.f32 %v2061, %v2093
      %v2096 = vmul.f32 %v2062, %v2093
      %v2097 = vmul.f32 %v2063, %v2093
      %v2098 = vmul.f32 %v2064, %v2093
      %v2099 = vmul.f32 %v2065, %v2093
      %v2100 = vmul.f32 %v2066, %v2093
      %v2101 = vmul.f32 %v2067, %v2093
      %v2102 = vmul.f32 %v2068, %v2093
      %v2103 = vmul.f32 %v2069, %v2093
      %v2104 = vmul.f32 %v2070, %v2093
      %v2105 = vmul.f32 %v2071, %v2093
      %v2106 = vmul.f32 %v2072, %v2093
      %v2107 = vmul.f32 %v2073, %v2093
      %v2108 = vmul.f32 %v2074, %v2093
      %v2109 = vmul.f32 %v2075, %v2093
      %v2110 = vmul.f32 %v2076, %v2093
      %v2111 = vmul.f32 %v2077, %v2093
      %v2112 = vmul.f32 %v2078, %v2093
      %v2113 = vmul.f32 %v2079, %v2093
      %v2114 = vmul.f32 %v2080, %v2093
      %v2115 = vmul.f32 %v2081, %v2093
      %v2116 = vmul.f32 %v2082, %v2093
      %v2117 = vmul.f32 %v2083, %v2093
      %v2118 = vmul.f32 %v2084, %v2093
      %v2119 = vmul.f32 %v2085, %v2093
      %v2120 = vmul.f32 %v2086, %v2093
      %v2121 = vmul.f32 %v2087, %v2093
      %v2122 = vmul.f32 %v2088, %v2093
      %v2123 = vmul.f32 %v2089, %v2093
      %v2124 = vmul.f32 %v2090, %v2093
      %v2125 = vmul.f32 %v2091, %v2093
      %v2126 = vmax.f32 %v2094, 0.0
      %v2127 = vmax.f32 %v2095, 0.0
      %v2128 = vmax.f32 %v2096, 0.0
      %v2129 = vmax.f32 %v2097, 0.0
      %v2130 = vmax.f32 %v2098, 0.0
      %v2131 = vmax.f32 %v2099, 0.0
      %v2132 = vmax.f32 %v2100, 0.0
      %v2133 = vmax.f32 %v2101, 0.0
      %v2134 = vmax.f32 %v2102, 0.0
      %v2135 = vmax.f32 %v2103, 0.0
      %v2136 = vmax.f32 %v2104, 0.0
      %v2137 = vmax.f32 %v2105, 0.0
      %v2138 = vmax.f32 %v2106, 0.0
      %v2139 = vmax.f32 %v2107, 0.0
      %v2140 = vmax.f32 %v2108, 0.0
      %v2141 = vmax.f32 %v2109, 0.0
      %v2142 = vmax.f32 %v2110, 0.0
      %v2143 = vmax.f32 %v2111, 0.0
      %v2144 = vmax.f32 %v2112, 0.0
      %v2145 = vmax.f32 %v2113, 0.0
      %v2146 = vmax.f32 %v2114, 0.0
      %v2147 = vmax.f32 %v2115, 0.0
      %v2148 = vmax.f32 %v2116, 0.0
      %v2149 = vmax.f32 %v2117, 0.0
      %v2150 = vmax.f32 %v2118, 0.0
      %v2151 = vmax.f32 %v2119, 0.0
      %v2152 = vmax.f32 %v2120, 0.0
      %v2153 = vmax.f32 %v2121, 0.0
      %v2154 = vmax.f32 %v2122, 0.0
      %v2155 = vmax.f32 %v2123, 0.0
      %v2156 = vmax.f32 %v2124, 0.0
      %v2157 = vmax.f32 %v2125, 0.0
      %s2158 = scalar_lea.vmem [#allocation2], 24
      %2159 = vst.msk [vmem:[%s2158 + $0x1] sm:$0xff] %vm1290, %v2126
      %2160 = vst.msk [vmem:[%s2158 + $0x9] sm:$0xff] %vm1290, %v2127
      %2161 = vst.msk [vmem:[%s2158 + $0x19] sm:$0xff] %vm1290, %v2128
      %2162 = vst.msk [vmem:[%s2158 + $0x21] sm:$0xff] %vm1290, %v2129
      %2163 = vst.msk [vmem:[%s2158 + $0x31] sm:$0xff] %vm1290, %v2130
      %2164 = vst.msk [vmem:[%s2158 + $0x39] sm:$0xff] %vm1290, %v2131
      %2165 = vst.msk [vmem:[%s2158 + $0x49] sm:$0xff] %vm1290, %v2132
      %2166 = vst.msk [vmem:[%s2158 + $0x51] sm:$0xff] %vm1290, %v2133
      %2167 = vst.msk [vmem:[%s2158 + $0x61] sm:$0xff] %vm1290, %v2134
      %2168 = vst.msk [vmem:[%s2158 + $0x69] sm:$0xff] %vm1290, %v2135
      %2169 = vst.msk [vmem:[%s2158 + $0x79] sm:$0xff] %vm1290, %v2136
      %2170 = vst.msk [vmem:[%s2158 + $0x81] sm:$0xff] %vm1290, %v2137
      %2171 = vst.msk [vmem:[%s2158 + $0x91] sm:$0xff] %vm1290, %v2138
      %2172 = vst.msk [vmem:[%s2158 + $0x99] sm:$0xff] %vm1290, %v2139
      %2173 = vst.msk [vmem:[%s2158 + $0xa9] sm:$0xff] %vm1290, %v2140
      %2174 = vst.msk [vmem:[%s2158 + $0xb1] sm:$0xff] %vm1290, %v2141
      %2175 = vst.msk [vmem:[%s2158 + $0xc1] sm:$0xff] %vm1290, %v2142
      %2176 = vst.msk [vmem:[%s2158 + $0xc9] sm:$0xff] %vm1290, %v2143
      %2177 = vst.msk [vmem:[%s2158 + $0xd9] sm:$0xff] %vm1290, %v2144
      %2178 = vst.msk [vmem:[%s2158 + $0xe1] sm:$0xff] %vm1290, %v2145
      %2179 = vst.msk [vmem:[%s2158 + $0xf1] sm:$0xff] %vm1290, %v2146
      %2180 = vst.msk [vmem:[%s2158 + $0xf9] sm:$0xff] %vm1290, %v2147
      %2181 = vst.msk [vmem:[%s2158 + $0x109] sm:$0xff] %vm1290, %v2148
      %2182 = vst.msk [vmem:[%s2158 + $0x111] sm:$0xff] %vm1290, %v2149
      %2183 = vst.msk [vmem:[%s2158 + $0x121] sm:$0xff] %vm1290, %v2150
      %2184 = vst.msk [vmem:[%s2158 + $0x129] sm:$0xff] %vm1290, %v2151
      %2185 = vst.msk [vmem:[%s2158 + $0x139] sm:$0xff] %vm1290, %v2152
      %2186 = vst.msk [vmem:[%s2158 + $0x141] sm:$0xff] %vm1290, %v2153
      %2187 = vst.msk [vmem:[%s2158 + $0x151] sm:$0xff] %vm1290, %v2154
      %2188 = vst.msk [vmem:[%s2158 + $0x159] sm:$0xff] %vm1290, %v2155
      %2189 = vst.msk [vmem:[%s2158 + $0x169] sm:$0xff] %vm1290, %v2156
      %2190 = vst.msk [vmem:[%s2158 + $0x171] sm:$0xff] %vm1290, %v2157
      %2191 = vst.msk [vmem:[#allocation2 + $0x1] sm:$0xff] %vm1290, %v2128
      %2192 = vst.msk [vmem:[#allocation2 + $0x9] sm:$0xff] %vm1290, %v2129
      %s2193 = scalar_lea.vmem [#allocation2], 408
      %2194 = vst.msk [vmem:[%s2193 + $0x1] sm:$0xff] %vm1290, %v2154
      %2195 = vst.msk [vmem:[%s2193 + $0x9] sm:$0xff] %vm1290, %v2155
      %v2196 = vld [vmem:[#allocation2 + $0x2] sm:$0x1]
      %v2197 = vld [vmem:[#allocation2 + $0x1a] sm:$0x1]
      %v2198 = vld [vmem:[#allocation2 + $0x32] sm:$0x1]
      %v2199 = vld [vmem:[#allocation2 + $0x4a] sm:$0x1]
      %v2200 = vld [vmem:[#allocation2 + $0x62] sm:$0x1]
      %v2201 = vld [vmem:[#allocation2 + $0x7a] sm:$0x1]
      %v2202 = vld [vmem:[#allocation2 + $0x92] sm:$0x1]
      %v2203 = vld [vmem:[#allocation2 + $0xaa] sm:$0x1]
      %v2204 = vld [vmem:[#allocation2 + $0xc2] sm:$0x1]
      %v2205 = vld [vmem:[#allocation2 + $0xda] sm:$0x1]
      %v2206 = vld [vmem:[#allocation2 + $0xf2] sm:$0x1]
      %v2207 = vld [vmem:[#allocation2 + $0x10a] sm:$0x1]
      %v2208 = vld [vmem:[#allocation2 + $0x122] sm:$0x1]
      %v2209 = vld [vmem:[#allocation2 + $0x13a] sm:$0x1]
      %v2210 = vld [vmem:[#allocation2 + $0x152] sm:$0x1]
      %v2211 = vld [vmem:[#allocation2 + $0x16a] sm:$0x1]
      %v2212 = vld [vmem:[#allocation2 + $0x182] sm:$0x1]
      %v2213 = vld [vmem:[#allocation2 + $0x19a] sm:$0x1]
      %vm2214 = vcmask 24576
      %2215 = vst.msk [vmem:[#allocation2] sm:$0x1] %vm2214, %v2196
      %2216 = vst.msk [vmem:[#allocation2 + $0x18] sm:$0x1] %vm2214, %v2197
      %2217 = vst.msk [vmem:[#allocation2 + $0x30] sm:$0x1] %vm2214, %v2198
      %2218 = vst.msk [vmem:[#allocation2 + $0x48] sm:$0x1] %vm2214, %v2199
      %2219 = vst.msk [vmem:[#allocation2 + $0x60] sm:$0x1] %vm2214, %v2200
      %2220 = vst.msk [vmem:[#allocation2 + $0x78] sm:$0x1] %vm2214, %v2201
      %2221 = vst.msk [vmem:[#allocation2 + $0x90] sm:$0x1] %vm2214, %v2202
      %2222 = vst.msk [vmem:[#allocation2 + $0xa8] sm:$0x1] %vm2214, %v2203
      %2223 = vst.msk [vmem:[#allocation2 + $0xc0] sm:$0x1] %vm2214, %v2204
      %2224 = vst.msk [vmem:[#allocation2 + $0xd8] sm:$0x1] %vm2214, %v2205
      %2225 = vst.msk [vmem:[#allocation2 + $0xf0] sm:$0x1] %vm2214, %v2206
      %2226 = vst.msk [vmem:[#allocation2 + $0x108] sm:$0x1] %vm2214, %v2207
      %2227 = vst.msk [vmem:[#allocation2 + $0x120] sm:$0x1] %vm2214, %v2208
      %2228 = vst.msk [vmem:[#allocation2 + $0x138] sm:$0x1] %vm2214, %v2209
      %2229 = vst.msk [vmem:[#allocation2 + $0x150] sm:$0x1] %vm2214, %v2210
      %2230 = vst.msk [vmem:[#allocation2 + $0x168] sm:$0x1] %vm2214, %v2211
      %2231 = vst.msk [vmem:[#allocation2 + $0x180] sm:$0x1] %vm2214, %v2212
      %2232 = vst.msk [vmem:[#allocation2 + $0x198] sm:$0x1] %vm2214, %v2213
      %v2233 = vld [vmem:[#allocation2 + $0xf] sm:$0x1]
      %v2234 = vld [vmem:[#allocation2 + $0x27] sm:$0x1]
      %v2235 = vld [vmem:[#allocation2 + $0x3f] sm:$0x1]
      %v2236 = vld [vmem:[#allocation2 + $0x57] sm:$0x1]
      %v2237 = vld [vmem:[#allocation2 + $0x6f] sm:$0x1]
      %v2238 = vld [vmem:[#allocation2 + $0x87] sm:$0x1]
      %v2239 = vld [vmem:[#allocation2 + $0x9f] sm:$0x1]
      %v2240 = vld [vmem:[#allocation2 + $0xb7] sm:$0x1]
      %v2241 = vld [vmem:[#allocation2 + $0xcf] sm:$0x1]
      %v2242 = vld [vmem:[#allocation2 + $0xe7] sm:$0x1]
      %v2243 = vld [vmem:[#allocation2 + $0xff] sm:$0x1]
      %v2244 = vld [vmem:[#allocation2 + $0x117] sm:$0x1]
      %v2245 = vld [vmem:[#allocation2 + $0x12f] sm:$0x1]
      %v2246 = vld [vmem:[#allocation2 + $0x147] sm:$0x1]
      %v2247 = vld [vmem:[#allocation2 + $0x15f] sm:$0x1]
      %v2248 = vld [vmem:[#allocation2 + $0x177] sm:$0x1]
      %v2249 = vld [vmem:[#allocation2 + $0x18f] sm:$0x1]
      %v2250 = vld [vmem:[#allocation2 + $0x1a7] sm:$0x1]
      %2251 = vst.msk [vmem:[#allocation2 + $0x11] sm:$0x1] %vm2214, %v2233
      %2252 = vst.msk [vmem:[#allocation2 + $0x29] sm:$0x1] %vm2214, %v2234
      %2253 = vst.msk [vmem:[#allocation2 + $0x41] sm:$0x1] %vm2214, %v2235
      %2254 = vst.msk [vmem:[#allocation2 + $0x59] sm:$0x1] %vm2214, %v2236
      %2255 = vst.msk [vmem:[#allocation2 + $0x71] sm:$0x1] %vm2214, %v2237
      %2256 = vst.msk [vmem:[#allocation2 + $0x89] sm:$0x1] %vm2214, %v2238
      %2257 = vst.msk [vmem:[#allocation2 + $0xa1] sm:$0x1] %vm2214, %v2239
      %2258 = vst.msk [vmem:[#allocation2 + $0xb9] sm:$0x1] %vm2214, %v2240
      %2259 = vst.msk [vmem:[#allocation2 + $0xd1] sm:$0x1] %vm2214, %v2241
      %2260 = vst.msk [vmem:[#allocation2 + $0xe9] sm:$0x1] %vm2214, %v2242
      %2261 = vst.msk [vmem:[#allocation2 + $0x101] sm:$0x1] %vm2214, %v2243
      %2262 = vst.msk [vmem:[#allocation2 + $0x119] sm:$0x1] %vm2214, %v2244
      %2263 = vst.msk [vmem:[#allocation2 + $0x131] sm:$0x1] %vm2214, %v2245
      %2264 = vst.msk [vmem:[#allocation2 + $0x149] sm:$0x1] %vm2214, %v2246
      %2265 = vst.msk [vmem:[#allocation2 + $0x161] sm:$0x1] %vm2214, %v2247
      %2266 = vst.msk [vmem:[#allocation2 + $0x179] sm:$0x1] %vm2214, %v2248
      %2267 = vst.msk [vmem:[#allocation2 + $0x191] sm:$0x1] %vm2214, %v2249
      %2268 = vst.msk [vmem:[#allocation2 + $0x1a9] sm:$0x1] %vm2214, %v2250
      %v2269 = vld [vmem:[#allocation2] sm:$0xff]
      %v2270 = vld [vmem:[#allocation2 + $0x8] sm:$0xff]
      %v2271 = vld [vmem:[#allocation2 + $0x10] sm:$0x3]
      %v2272 = vld [vmem:[#allocation2 + $0x18] sm:$0xff]
      %v2273 = vld [vmem:[#allocation2 + $0x20] sm:$0xff]
      %v2274 = vld [vmem:[#allocation2 + $0x28] sm:$0x3]
      %v2275 = vld [vmem:[#allocation2 + $0x30] sm:$0xff]
      %v2276 = vld [vmem:[#allocation2 + $0x38] sm:$0xff]
      %v2277 = vld [vmem:[#allocation2 + $0x40] sm:$0x3]
      %v2278 = vld [vmem:[#allocation2 + $0x48] sm:$0xff]
      %v2279 = vld [vmem:[#allocation2 + $0x50] sm:$0xff]
      %v2280 = vld [vmem:[#allocation2 + $0x58] sm:$0x3]
      %v2281 = vld [vmem:[#allocation2 + $0x60] sm:$0xff]
      %v2282 = vld [vmem:[#allocation2 + $0x68] sm:$0xff]
      %v2283 = vld [vmem:[#allocation2 + $0x70] sm:$0x3]
      %v2284 = vld [vmem:[#allocation2 + $0x78] sm:$0xff]
      %v2285 = vld [vmem:[#allocation2 + $0x80] sm:$0xff]
      %v2286 = vld [vmem:[#allocation2 + $0x88] sm:$0x3]
      %v2287 = vld [vmem:[#allocation2 + $0x90] sm:$0xff]
      %v2288 = vld [vmem:[#allocation2 + $0x98] sm:$0xff]
      %v2289 = vld [vmem:[#allocation2 + $0xa0] sm:$0x3]
      %v2290 = vld [vmem:[#allocation2 + $0xa8] sm:$0xff]
      %v2291 = vld [vmem:[#allocation2 + $0xb0] sm:$0xff]
      %v2292 = vld [vmem:[#allocation2 + $0xb8] sm:$0x3]
      %v2293 = vld [vmem:[#allocation2 + $0xc0] sm:$0xff]
      %v2294 = vld [vmem:[#allocation2 + $0xc8] sm:$0xff]
      %v2295 = vld [vmem:[#allocation2 + $0xd0] sm:$0x3]
      %v2296 = vld [vmem:[#allocation2 + $0xd8] sm:$0xff]
      %v2297 = vld [vmem:[#allocation2 + $0xe0] sm:$0xff]
      %v2298 = vld [vmem:[#allocation2 + $0xe8] sm:$0x3]
      %v2299 = vld [vmem:[#allocation2 + $0xf0] sm:$0xff]
      %v2300 = vld [vmem:[#allocation2 + $0xf8] sm:$0xff]
      %v2301 = vld [vmem:[#allocation2 + $0x100] sm:$0x3]
      %v2302 = vld [vmem:[#allocation2 + $0x108] sm:$0xff]
      %v2303 = vld [vmem:[#allocation2 + $0x110] sm:$0xff]
      %v2304 = vld [vmem:[#allocation2 + $0x118] sm:$0x3]
      %v2305 = vld [vmem:[#allocation2 + $0x120] sm:$0xff]
      %v2306 = vld [vmem:[#allocation2 + $0x128] sm:$0xff]
      %v2307 = vld [vmem:[#allocation2 + $0x130] sm:$0x3]
      %v2308 = vld [vmem:[#allocation2 + $0x138] sm:$0xff]
      %v2309 = vld [vmem:[#allocation2 + $0x140] sm:$0xff]
      %v2310 = vld [vmem:[#allocation2 + $0x148] sm:$0x3]
      %v2311 = vld [vmem:[#allocation2 + $0x150] sm:$0xff]
      %v2312 = vld [vmem:[#allocation2 + $0x158] sm:$0xff]
      %v2313 = vld [vmem:[#allocation2 + $0x160] sm:$0x3]
      %v2314 = vld [vmem:[#allocation2 + $0x168] sm:$0xff]
      %v2315 = vld [vmem:[#allocation2 + $0x170] sm:$0xff]
      %v2316 = vld [vmem:[#allocation2 + $0x178] sm:$0x3]
      %v2317 = vld [vmem:[#allocation2 + $0x180] sm:$0xff]
      %v2318 = vld [vmem:[#allocation2 + $0x188] sm:$0xff]
      %v2319 = vld [vmem:[#allocation2 + $0x190] sm:$0x3]
      %v2320 = vld [vmem:[#allocation2 + $0x198] sm:$0xff]
      %v2321 = vld [vmem:[#allocation2 + $0x1a0] sm:$0xff]
      %v2322 = vld [vmem:[#allocation2 + $0x1a8] sm:$0x3]
      %v2323 = vld [vmem:[%s3] sm:$0xff]
      %v2324 = vld [vmem:[%s3 + $0x8] sm:$0xff]
      %v2325 = vld [vmem:[%s3 + $0x10] sm:$0xff]
      %v2326 = vld [vmem:[%s3 + $0x18] sm:$0xff]
      %v2327 = vld [vmem:[%s3 + $0x20] sm:$0xf]
      %v2376 = vrot.slane %v2269, 1
      %v2377 = vrot.slane %v2270, 1
      %v2378 = vsel %vm334, %v2376, %v2377
      %v2379 = vrot.slane %v2271, 1
      %v2380 = vsel %vm334, %v2377, %v2379
      %v2381 = vrot.slane %v2272, 1
      %v2382 = vrot.slane %v2273, 1
      %v2383 = vsel %vm334, %v2381, %v2382
      %v2384 = vrot.slane %v2274, 1
      %v2385 = vsel %vm334, %v2382, %v2384
      %v2386 = vrot.slane %v2275, 1
      %v2387 = vrot.slane %v2276, 1
      %v2388 = vsel %vm334, %v2386, %v2387
      %v2389 = vrot.slane %v2277, 1
      %v2390 = vsel %vm334, %v2387, %v2389
      %v2391 = vrot.slane %v2278, 1
      %v2392 = vrot.slane %v2279, 1
      %v2393 = vsel %vm334, %v2391, %v2392
      %v2394 = vrot.slane %v2280, 1
      %v2395 = vsel %vm334, %v2392, %v2394
      %v2396 = vrot.slane %v2281, 1
      %v2397 = vrot.slane %v2282, 1
      %v2398 = vsel %vm334, %v2396, %v2397
      %v2399 = vrot.slane %v2283, 1
      %v2400 = vsel %vm334, %v2397, %v2399
      %v2401 = vrot.slane %v2284, 1
      %v2402 = vrot.slane %v2285, 1
      %v2403 = vsel %vm334, %v2401, %v2402
      %v2404 = vrot.slane %v2286, 1
      %v2405 = vsel %vm334, %v2402, %v2404
      %v2406 = vrot.slane %v2287, 1
      %v2407 = vrot.slane %v2288, 1
      %v2408 = vsel %vm334, %v2406, %v2407
      %v2409 = vrot.slane %v2289, 1
      %v2410 = vsel %vm334, %v2407, %v2409
      %v2411 = vrot.slane %v2290, 1
      %v2412 = vrot.slane %v2291, 1
      %v2413 = vsel %vm334, %v2411, %v2412
      %v2414 = vrot.slane %v2292, 1
      %v2415 = vsel %vm334, %v2412, %v2414
      %v2416 = vrot.slane %v2293, 1
      %v2417 = vrot.slane %v2294, 1
      %v2418 = vsel %vm334, %v2416, %v2417
      %v2419 = vrot.slane %v2295, 1
      %v2420 = vsel %vm334, %v2417, %v2419
      %v2421 = vrot.slane %v2296, 1
      %v2422 = vrot.slane %v2297, 1
      %v2423 = vsel %vm334, %v2421, %v2422
      %v2424 = vrot.slane %v2298, 1
      %v2425 = vsel %vm334, %v2422, %v2424
      %v2426 = vrot.slane %v2299, 1
      %v2427 = vrot.slane %v2300, 1
      %v2428 = vsel %vm334, %v2426, %v2427
      %v2429 = vrot.slane %v2301, 1
      %v2430 = vsel %vm334, %v2427, %v2429
      %v2431 = vrot.slane %v2302, 1
      %v2432 = vrot.slane %v2303, 1
      %v2433 = vsel %vm334, %v2431, %v2432
      %v2434 = vrot.slane %v2304, 1
      %v2435 = vsel %vm334, %v2432, %v2434
      %v2436 = vrot.slane %v2305, 1
      %v2437 = vrot.slane %v2306, 1
      %v2438 = vsel %vm334, %v2436, %v2437
      %v2439 = vrot.slane %v2307, 1
      %v2440 = vsel %vm334, %v2437, %v2439
      %v2441 = vrot.slane %v2308, 1
      %v2442 = vrot.slane %v2309, 1
      %v2443 = vsel %vm334, %v2441, %v2442
      %v2444 = vrot.slane %v2310, 1
      %v2445 = vsel %vm334, %v2442, %v2444
      %v2446 = vrot.slane %v2311, 1
      %v2447 = vrot.slane %v2312, 1
      %v2448 = vsel %vm334, %v2446, %v2447
      %v2449 = vrot.slane %v2313, 1
      %v2450 = vsel %vm334, %v2447, %v2449
      %v2451 = vrot.slane %v2314, 1
      %v2452 = vrot.slane %v2315, 1
      %v2453 = vsel %vm334, %v2451, %v2452
      %v2454 = vrot.slane %v2316, 1
      %v2455 = vsel %vm334, %v2452, %v2454
      %2456 = vrot.lane.b32.xlu0 %v2378, 4
      %v2457 = vpop.permute.xlu0 %2456
      %2458 = vrot.lane.b32.xlu0 %v2380, 4
      %v2459 = vpop.permute.xlu0 %2458
      %2460 = vrot.lane.b32.xlu0 %v2383, 4
      %v2461 = vpop.permute.xlu0 %2460
      %2462 = vrot.lane.b32.xlu0 %v2385, 4
      %v2463 = vpop.permute.xlu0 %2462
      %2464 = vrot.lane.b32.xlu0 %v2388, 4
      %v2465 = vpop.permute.xlu0 %2464
      %2466 = vrot.lane.b32.xlu0 %v2390, 4
      %v2467 = vpop.permute.xlu0 %2466
      %2468 = vrot.lane.b32.xlu0 %v2393, 4
      %v2469 = vpop.permute.xlu0 %2468
      %2470 = vrot.lane.b32.xlu0 %v2395, 4
      %v2471 = vpop.permute.xlu0 %2470
      %2472 = vrot.lane.b32.xlu0 %v2398, 4
      %v2473 = vpop.permute.xlu0 %2472
      %2474 = vrot.lane.b32.xlu0 %v2400, 4
      %v2475 = vpop.permute.xlu0 %2474
      %2476 = vrot.lane.b32.xlu0 %v2403, 4
      %v2477 = vpop.permute.xlu0 %2476
      %2478 = vrot.lane.b32.xlu0 %v2405, 4
      %v2479 = vpop.permute.xlu0 %2478
      %2480 = vrot.lane.b32.xlu0 %v2408, 4
      %v2481 = vpop.permute.xlu0 %2480
      %2482 = vrot.lane.b32.xlu0 %v2410, 4
      %v2483 = vpop.permute.xlu0 %2482
      %2484 = vrot.lane.b32.xlu0 %v2413, 4
      %v2485 = vpop.permute.xlu0 %2484
      %2486 = vrot.lane.b32.xlu0 %v2415, 4
      %v2487 = vpop.permute.xlu0 %2486
      %2488 = vrot.lane.b32.xlu0 %v2418, 4
      %v2489 = vpop.permute.xlu0 %2488
      %2490 = vrot.lane.b32.xlu0 %v2420, 4
      %v2491 = vpop.permute.xlu0 %2490
      %2492 = vrot.lane.b32.xlu0 %v2423, 4
      %v2493 = vpop.permute.xlu0 %2492
      %2494 = vrot.lane.b32.xlu0 %v2425, 4
      %v2495 = vpop.permute.xlu0 %2494
      %2496 = vrot.lane.b32.xlu0 %v2428, 4
      %v2497 = vpop.permute.xlu0 %2496
      %2498 = vrot.lane.b32.xlu0 %v2430, 4
      %v2499 = vpop.permute.xlu0 %2498
      %2500 = vrot.lane.b32.xlu0 %v2433, 4
      %v2501 = vpop.permute.xlu0 %2500
      %2502 = vrot.lane.b32.xlu0 %v2435, 4
      %v2503 = vpop.permute.xlu0 %2502
      %2504 = vrot.lane.b32.xlu0 %v2438, 4
      %v2505 = vpop.permute.xlu0 %2504
      %2506 = vrot.lane.b32.xlu0 %v2440, 4
      %v2507 = vpop.permute.xlu0 %2506
      %2508 = vrot.lane.b32.xlu0 %v2443, 4
      %v2509 = vpop.permute.xlu0 %2508
      %2510 = vrot.lane.b32.xlu0 %v2445, 4
      %v2511 = vpop.permute.xlu0 %2510
      %2512 = vrot.lane.b32.xlu0 %v2448, 4
      %v2513 = vpop.permute.xlu0 %2512
      %2514 = vrot.lane.b32.xlu0 %v2450, 4
      %v2515 = vpop.permute.xlu0 %2514
      %2516 = vrot.lane.b32.xlu0 %v2453, 4
      %v2517 = vpop.permute.xlu0 %2516
      %2518 = vrot.lane.b32.xlu0 %v2455, 4
      %v2519 = vpop.permute.xlu0 %2518
      %v2552 = vrot.slane %v2269, 2
      %v2553 = vrot.slane %v2270, 2
      %v2554 = vsel %vm511, %v2552, %v2553
      %v2555 = vrot.slane %v2271, 2
      %v2556 = vsel %vm511, %v2553, %v2555
      %v2557 = vrot.slane %v2272, 2
      %v2558 = vrot.slane %v2273, 2
      %v2559 = vsel %vm511, %v2557, %v2558
      %v2560 = vrot.slane %v2274, 2
      %v2561 = vsel %vm511, %v2558, %v2560
      %v2562 = vrot.slane %v2275, 2
      %v2563 = vrot.slane %v2276, 2
      %v2564 = vsel %vm511, %v2562, %v2563
      %v2565 = vrot.slane %v2277, 2
      %v2566 = vsel %vm511, %v2563, %v2565
      %v2567 = vrot.slane %v2278, 2
      %v2568 = vrot.slane %v2279, 2
      %v2569 = vsel %vm511, %v2567, %v2568
      %v2570 = vrot.slane %v2280, 2
      %v2571 = vsel %vm511, %v2568, %v2570
      %v2572 = vrot.slane %v2281, 2
      %v2573 = vrot.slane %v2282, 2
      %v2574 = vsel %vm511, %v2572, %v2573
      %v2575 = vrot.slane %v2283, 2
      %v2576 = vsel %vm511, %v2573, %v2575
      %v2577 = vrot.slane %v2284, 2
      %v2578 = vrot.slane %v2285, 2
      %v2579 = vsel %vm511, %v2577, %v2578
      %v2580 = vrot.slane %v2286, 2
      %v2581 = vsel %vm511, %v2578, %v2580
      %v2582 = vrot.slane %v2287, 2
      %v2583 = vrot.slane %v2288, 2
      %v2584 = vsel %vm511, %v2582, %v2583
      %v2585 = vrot.slane %v2289, 2
      %v2586 = vsel %vm511, %v2583, %v2585
      %v2587 = vrot.slane %v2290, 2
      %v2588 = vrot.slane %v2291, 2
      %v2589 = vsel %vm511, %v2587, %v2588
      %v2590 = vrot.slane %v2292, 2
      %v2591 = vsel %vm511, %v2588, %v2590
      %v2592 = vrot.slane %v2293, 2
      %v2593 = vrot.slane %v2294, 2
      %v2594 = vsel %vm511, %v2592, %v2593
      %v2595 = vrot.slane %v2295, 2
      %v2596 = vsel %vm511, %v2593, %v2595
      %v2597 = vrot.slane %v2296, 2
      %v2598 = vrot.slane %v2297, 2
      %v2599 = vsel %vm511, %v2597, %v2598
      %v2600 = vrot.slane %v2298, 2
      %v2601 = vsel %vm511, %v2598, %v2600
      %v2602 = vrot.slane %v2299, 2
      %v2603 = vrot.slane %v2300, 2
      %v2604 = vsel %vm511, %v2602, %v2603
      %v2605 = vrot.slane %v2301, 2
      %v2606 = vsel %vm511, %v2603, %v2605
      %v2607 = vrot.slane %v2302, 2
      %v2608 = vrot.slane %v2303, 2
      %v2609 = vsel %vm511, %v2607, %v2608
      %v2610 = vrot.slane %v2304, 2
      %v2611 = vsel %vm511, %v2608, %v2610
      %v2612 = vrot.slane %v2305, 2
      %v2613 = vrot.slane %v2306, 2
      %v2614 = vsel %vm511, %v2612, %v2613
      %v2615 = vrot.slane %v2307, 2
      %v2616 = vsel %vm511, %v2613, %v2615
      %v2617 = vrot.slane %v2308, 2
      %v2618 = vrot.slane %v2309, 2
      %v2619 = vsel %vm511, %v2617, %v2618
      %v2620 = vrot.slane %v2310, 2
      %v2621 = vsel %vm511, %v2618, %v2620
      %v2622 = vrot.slane %v2311, 2
      %v2623 = vrot.slane %v2312, 2
      %v2624 = vsel %vm511, %v2622, %v2623
      %v2625 = vrot.slane %v2313, 2
      %v2626 = vsel %vm511, %v2623, %v2625
      %v2627 = vrot.slane %v2314, 2
      %v2628 = vrot.slane %v2315, 2
      %v2629 = vsel %vm511, %v2627, %v2628
      %v2630 = vrot.slane %v2316, 2
      %v2631 = vsel %vm511, %v2628, %v2630
      %2632 = vrot.lane.b32.xlu0 %v2554, 8
      %v2633 = vpop.permute.xlu0 %2632
      %2634 = vrot.lane.b32.xlu0 %v2556, 8
      %v2635 = vpop.permute.xlu0 %2634
      %2636 = vrot.lane.b32.xlu0 %v2559, 8
      %v2637 = vpop.permute.xlu0 %2636
      %2638 = vrot.lane.b32.xlu0 %v2561, 8
      %v2639 = vpop.permute.xlu0 %2638
      %2640 = vrot.lane.b32.xlu0 %v2564, 8
      %v2641 = vpop.permute.xlu0 %2640
      %2642 = vrot.lane.b32.xlu0 %v2566, 8
      %v2643 = vpop.permute.xlu0 %2642
      %2644 = vrot.lane.b32.xlu0 %v2569, 8
      %v2645 = vpop.permute.xlu0 %2644
      %2646 = vrot.lane.b32.xlu0 %v2571, 8
      %v2647 = vpop.permute.xlu0 %2646
      %2648 = vrot.lane.b32.xlu0 %v2574, 8
      %v2649 = vpop.permute.xlu0 %2648
      %2650 = vrot.lane.b32.xlu0 %v2576, 8
      %v2651 = vpop.permute.xlu0 %2650
      %2652 = vrot.lane.b32.xlu0 %v2579, 8
      %v2653 = vpop.permute.xlu0 %2652
      %2654 = vrot.lane.b32.xlu0 %v2581, 8
      %v2655 = vpop.permute.xlu0 %2654
      %2656 = vrot.lane.b32.xlu0 %v2584, 8
      %v2657 = vpop.permute.xlu0 %2656
      %2658 = vrot.lane.b32.xlu0 %v2586, 8
      %v2659 = vpop.permute.xlu0 %2658
      %2660 = vrot.lane.b32.xlu0 %v2589, 8
      %v2661 = vpop.permute.xlu0 %2660
      %2662 = vrot.lane.b32.xlu0 %v2591, 8
      %v2663 = vpop.permute.xlu0 %2662
      %2664 = vrot.lane.b32.xlu0 %v2594, 8
      %v2665 = vpop.permute.xlu0 %2664
      %2666 = vrot.lane.b32.xlu0 %v2596, 8
      %v2667 = vpop.permute.xlu0 %2666
      %2668 = vrot.lane.b32.xlu0 %v2599, 8
      %v2669 = vpop.permute.xlu0 %2668
      %2670 = vrot.lane.b32.xlu0 %v2601, 8
      %v2671 = vpop.permute.xlu0 %2670
      %2672 = vrot.lane.b32.xlu0 %v2604, 8
      %v2673 = vpop.permute.xlu0 %2672
      %2674 = vrot.lane.b32.xlu0 %v2606, 8
      %v2675 = vpop.permute.xlu0 %2674
      %2676 = vrot.lane.b32.xlu0 %v2609, 8
      %v2677 = vpop.permute.xlu0 %2676
      %2678 = vrot.lane.b32.xlu0 %v2611, 8
      %v2679 = vpop.permute.xlu0 %2678
      %2680 = vrot.lane.b32.xlu0 %v2614, 8
      %v2681 = vpop.permute.xlu0 %2680
      %2682 = vrot.lane.b32.xlu0 %v2616, 8
      %v2683 = vpop.permute.xlu0 %2682
      %2684 = vrot.lane.b32.xlu0 %v2619, 8
      %v2685 = vpop.permute.xlu0 %2684
      %2686 = vrot.lane.b32.xlu0 %v2621, 8
      %v2687 = vpop.permute.xlu0 %2686
      %2688 = vrot.lane.b32.xlu0 %v2624, 8
      %v2689 = vpop.permute.xlu0 %2688
      %2690 = vrot.lane.b32.xlu0 %v2626, 8
      %v2691 = vpop.permute.xlu0 %2690
      %2692 = vrot.lane.b32.xlu0 %v2629, 8
      %v2693 = vpop.permute.xlu0 %2692
      %2694 = vrot.lane.b32.xlu0 %v2631, 8
      %v2695 = vpop.permute.xlu0 %2694
      %2730 = vrot.lane.b32.xlu0 %v2272, 12
      %v2731 = vpop.permute.xlu0 %2730
      %2732 = vrot.lane.b32.xlu0 %v2273, 12
      %v2733 = vpop.permute.xlu0 %2732
      %2734 = vrot.lane.b32.xlu0 %v2275, 12
      %v2735 = vpop.permute.xlu0 %2734
      %2736 = vrot.lane.b32.xlu0 %v2276, 12
      %v2737 = vpop.permute.xlu0 %2736
      %2738 = vrot.lane.b32.xlu0 %v2278, 12
      %v2739 = vpop.permute.xlu0 %2738
      %2740 = vrot.lane.b32.xlu0 %v2279, 12
      %v2741 = vpop.permute.xlu0 %2740
      %2742 = vrot.lane.b32.xlu0 %v2281, 12
      %v2743 = vpop.permute.xlu0 %2742
      %2744 = vrot.lane.b32.xlu0 %v2282, 12
      %v2745 = vpop.permute.xlu0 %2744
      %2746 = vrot.lane.b32.xlu0 %v2284, 12
      %v2747 = vpop.permute.xlu0 %2746
      %2748 = vrot.lane.b32.xlu0 %v2285, 12
      %v2749 = vpop.permute.xlu0 %2748
      %2750 = vrot.lane.b32.xlu0 %v2287, 12
      %v2751 = vpop.permute.xlu0 %2750
      %2752 = vrot.lane.b32.xlu0 %v2288, 12
      %v2753 = vpop.permute.xlu0 %2752
      %2754 = vrot.lane.b32.xlu0 %v2290, 12
      %v2755 = vpop.permute.xlu0 %2754
      %2756 = vrot.lane.b32.xlu0 %v2291, 12
      %v2757 = vpop.permute.xlu0 %2756
      %2758 = vrot.lane.b32.xlu0 %v2293, 12
      %v2759 = vpop.permute.xlu0 %2758
      %2760 = vrot.lane.b32.xlu0 %v2294, 12
      %v2761 = vpop.permute.xlu0 %2760
      %2762 = vrot.lane.b32.xlu0 %v2296, 12
      %v2763 = vpop.permute.xlu0 %2762
      %2764 = vrot.lane.b32.xlu0 %v2297, 12
      %v2765 = vpop.permute.xlu0 %2764
      %2766 = vrot.lane.b32.xlu0 %v2299, 12
      %v2767 = vpop.permute.xlu0 %2766
      %2768 = vrot.lane.b32.xlu0 %v2300, 12
      %v2769 = vpop.permute.xlu0 %2768
      %2770 = vrot.lane.b32.xlu0 %v2302, 12
      %v2771 = vpop.permute.xlu0 %2770
      %2772 = vrot.lane.b32.xlu0 %v2303, 12
      %v2773 = vpop.permute.xlu0 %2772
      %2774 = vrot.lane.b32.xlu0 %v2305, 12
      %v2775 = vpop.permute.xlu0 %2774
      %2776 = vrot.lane.b32.xlu0 %v2306, 12
      %v2777 = vpop.permute.xlu0 %2776
      %2778 = vrot.lane.b32.xlu0 %v2308, 12
      %v2779 = vpop.permute.xlu0 %2778
      %2780 = vrot.lane.b32.xlu0 %v2309, 12
      %v2781 = vpop.permute.xlu0 %2780
      %2782 = vrot.lane.b32.xlu0 %v2311, 12
      %v2783 = vpop.permute.xlu0 %2782
      %2784 = vrot.lane.b32.xlu0 %v2312, 12
      %v2785 = vpop.permute.xlu0 %2784
      %2786 = vrot.lane.b32.xlu0 %v2314, 12
      %v2787 = vpop.permute.xlu0 %2786
      %2788 = vrot.lane.b32.xlu0 %v2315, 12
      %v2789 = vpop.permute.xlu0 %2788
      %2790 = vrot.lane.b32.xlu0 %v2317, 12
      %v2791 = vpop.permute.xlu0 %2790
      %2792 = vrot.lane.b32.xlu0 %v2318, 12
      %v2793 = vpop.permute.xlu0 %2792
      %v2827 = vrot.slane %v2317, 1
      %v2828 = vrot.slane %v2318, 1
      %v2829 = vsel %vm334, %v2827, %v2828
      %v2830 = vrot.slane %v2319, 1
      %v2831 = vsel %vm334, %v2828, %v2830
      %2832 = vrot.lane.b32.xlu0 %v2383, 16
      %v2833 = vpop.permute.xlu0 %2832
      %2834 = vrot.lane.b32.xlu0 %v2385, 16
      %v2835 = vpop.permute.xlu0 %2834
      %2836 = vrot.lane.b32.xlu0 %v2388, 16
      %v2837 = vpop.permute.xlu0 %2836
      %2838 = vrot.lane.b32.xlu0 %v2390, 16
      %v2839 = vpop.permute.xlu0 %2838
      %2840 = vrot.lane.b32.xlu0 %v2393, 16
      %v2841 = vpop.permute.xlu0 %2840
      %2842 = vrot.lane.b32.xlu0 %v2395, 16
      %v2843 = vpop.permute.xlu0 %2842
      %2844 = vrot.lane.b32.xlu0 %v2398, 16
      %v2845 = vpop.permute.xlu0 %2844
      %2846 = vrot.lane.b32.xlu0 %v2400, 16
      %v2847 = vpop.permute.xlu0 %2846
      %2848 = vrot.lane.b32.xlu0 %v2403, 16
      %v2849 = vpop.permute.xlu0 %2848
      %2850 = vrot.lane.b32.xlu0 %v2405, 16
      %v2851 = vpop.permute.xlu0 %2850
      %2852 = vrot.lane.b32.xlu0 %v2408, 16
      %v2853 = vpop.permute.xlu0 %2852
      %2854 = vrot.lane.b32.xlu0 %v2410, 16
      %v2855 = vpop.permute.xlu0 %2854
      %2856 = vrot.lane.b32.xlu0 %v2413, 16
      %v2857 = vpop.permute.xlu0 %2856
      %2858 = vrot.lane.b32.xlu0 %v2415, 16
      %v2859 = vpop.permute.xlu0 %2858
      %2860 = vrot.lane.b32.xlu0 %v2418, 16
      %v2861 = vpop.permute.xlu0 %2860
      %2862 = vrot.lane.b32.xlu0 %v2420, 16
      %v2863 = vpop.permute.xlu0 %2862
      %2864 = vrot.lane.b32.xlu0 %v2423, 16
      %v2865 = vpop.permute.xlu0 %2864
      %2866 = vrot.lane.b32.xlu0 %v2425, 16
      %v2867 = vpop.permute.xlu0 %2866
      %2868 = vrot.lane.b32.xlu0 %v2428, 16
      %v2869 = vpop.permute.xlu0 %2868
      %2870 = vrot.lane.b32.xlu0 %v2430, 16
      %v2871 = vpop.permute.xlu0 %2870
      %2872 = vrot.lane.b32.xlu0 %v2433, 16
      %v2873 = vpop.permute.xlu0 %2872
      %2874 = vrot.lane.b32.xlu0 %v2435, 16
      %v2875 = vpop.permute.xlu0 %2874
      %2876 = vrot.lane.b32.xlu0 %v2438, 16
      %v2877 = vpop.permute.xlu0 %2876
      %2878 = vrot.lane.b32.xlu0 %v2440, 16
      %v2879 = vpop.permute.xlu0 %2878
      %2880 = vrot.lane.b32.xlu0 %v2443, 16
      %v2881 = vpop.permute.xlu0 %2880
      %2882 = vrot.lane.b32.xlu0 %v2445, 16
      %v2883 = vpop.permute.xlu0 %2882
      %2884 = vrot.lane.b32.xlu0 %v2448, 16
      %v2885 = vpop.permute.xlu0 %2884
      %2886 = vrot.lane.b32.xlu0 %v2450, 16
      %v2887 = vpop.permute.xlu0 %2886
      %2888 = vrot.lane.b32.xlu0 %v2453, 16
      %v2889 = vpop.permute.xlu0 %2888
      %2890 = vrot.lane.b32.xlu0 %v2455, 16
      %v2891 = vpop.permute.xlu0 %2890
      %2892 = vrot.lane.b32.xlu0 %v2829, 16
      %v2893 = vpop.permute.xlu0 %2892
      %2894 = vrot.lane.b32.xlu0 %v2831, 16
      %v2895 = vpop.permute.xlu0 %2894
      %v2928 = vrot.slane %v2317, 2
      %v2929 = vrot.slane %v2318, 2
      %v2930 = vsel %vm511, %v2928, %v2929
      %v2931 = vrot.slane %v2319, 2
      %v2932 = vsel %vm511, %v2929, %v2931
      %2933 = vrot.lane.b32.xlu0 %v2559, 20
      %v2934 = vpop.permute.xlu0 %2933
      %2935 = vrot.lane.b32.xlu0 %v2561, 20
      %v2936 = vpop.permute.xlu0 %2935
      %2937 = vrot.lane.b32.xlu0 %v2564, 20
      %v2938 = vpop.permute.xlu0 %2937
      %2939 = vrot.lane.b32.xlu0 %v2566, 20
      %v2940 = vpop.permute.xlu0 %2939
      %2941 = vrot.lane.b32.xlu0 %v2569, 20
      %v2942 = vpop.permute.xlu0 %2941
      %2943 = vrot.lane.b32.xlu0 %v2571, 20
      %v2944 = vpop.permute.xlu0 %2943
      %2945 = vrot.lane.b32.xlu0 %v2574, 20
      %v2946 = vpop.permute.xlu0 %2945
      %2947 = vrot.lane.b32.xlu0 %v2576, 20
      %v2948 = vpop.permute.xlu0 %2947
      %2949 = vrot.lane.b32.xlu0 %v2579, 20
      %v2950 = vpop.permute.xlu0 %2949
      %2951 = vrot.lane.b32.xlu0 %v2581, 20
      %v2952 = vpop.permute.xlu0 %2951
      %2953 = vrot.lane.b32.xlu0 %v2584, 20
      %v2954 = vpop.permute.xlu0 %2953
      %2955 = vrot.lane.b32.xlu0 %v2586, 20
      %v2956 = vpop.permute.xlu0 %2955
      %2957 = vrot.lane.b32.xlu0 %v2589, 20
      %v2958 = vpop.permute.xlu0 %2957
      %2959 = vrot.lane.b32.xlu0 %v2591, 20
      %v2960 = vpop.permute.xlu0 %2959
      %2961 = vrot.lane.b32.xlu0 %v2594, 20
      %v2962 = vpop.permute.xlu0 %2961
      %2963 = vrot.lane.b32.xlu0 %v2596, 20
      %v2964 = vpop.permute.xlu0 %2963
      %2965 = vrot.lane.b32.xlu0 %v2599, 20
      %v2966 = vpop.permute.xlu0 %2965
      %2967 = vrot.lane.b32.xlu0 %v2601, 20
      %v2968 = vpop.permute.xlu0 %2967
      %2969 = vrot.lane.b32.xlu0 %v2604, 20
      %v2970 = vpop.permute.xlu0 %2969
      %2971 = vrot.lane.b32.xlu0 %v2606, 20
      %v2972 = vpop.permute.xlu0 %2971
      %2973 = vrot.lane.b32.xlu0 %v2609, 20
      %v2974 = vpop.permute.xlu0 %2973
      %2975 = vrot.lane.b32.xlu0 %v2611, 20
      %v2976 = vpop.permute.xlu0 %2975
      %2977 = vrot.lane.b32.xlu0 %v2614, 20
      %v2978 = vpop.permute.xlu0 %2977
      %2979 = vrot.lane.b32.xlu0 %v2616, 20
      %v2980 = vpop.permute.xlu0 %2979
      %2981 = vrot.lane.b32.xlu0 %v2619, 20
      %v2982 = vpop.permute.xlu0 %2981
      %2983 = vrot.lane.b32.xlu0 %v2621, 20
      %v2984 = vpop.permute.xlu0 %2983
      %2985 = vrot.lane.b32.xlu0 %v2624, 20
      %v2986 = vpop.permute.xlu0 %2985
      %2987 = vrot.lane.b32.xlu0 %v2626, 20
      %v2988 = vpop.permute.xlu0 %2987
      %2989 = vrot.lane.b32.xlu0 %v2629, 20
      %v2990 = vpop.permute.xlu0 %2989
      %2991 = vrot.lane.b32.xlu0 %v2631, 20
      %v2992 = vpop.permute.xlu0 %2991
      %2993 = vrot.lane.b32.xlu0 %v2930, 20
      %v2994 = vpop.permute.xlu0 %2993
      %2995 = vrot.lane.b32.xlu0 %v2932, 20
      %v2996 = vpop.permute.xlu0 %2995
      %3031 = vrot.lane.b32.xlu0 %v2275, 24
      %v3032 = vpop.permute.xlu0 %3031
      %3033 = vrot.lane.b32.xlu0 %v2276, 24
      %v3034 = vpop.permute.xlu0 %3033
      %3035 = vrot.lane.b32.xlu0 %v2278, 24
      %v3036 = vpop.permute.xlu0 %3035
      %3037 = vrot.lane.b32.xlu0 %v2279, 24
      %v3038 = vpop.permute.xlu0 %3037
      %3039 = vrot.lane.b32.xlu0 %v2281, 24
      %v3040 = vpop.permute.xlu0 %3039
      %3041 = vrot.lane.b32.xlu0 %v2282, 24
      %v3042 = vpop.permute.xlu0 %3041
      %3043 = vrot.lane.b32.xlu0 %v2284, 24
      %v3044 = vpop.permute.xlu0 %3043
      %3045 = vrot.lane.b32.xlu0 %v2285, 24
      %v3046 = vpop.permute.xlu0 %3045
      %3047 = vrot.lane.b32.xlu0 %v2287, 24
      %v3048 = vpop.permute.xlu0 %3047
      %3049 = vrot.lane.b32.xlu0 %v2288, 24
      %v3050 = vpop.permute.xlu0 %3049
      %3051 = vrot.lane.b32.xlu0 %v2290, 24
      %v3052 = vpop.permute.xlu0 %3051
      %3053 = vrot.lane.b32.xlu0 %v2291, 24
      %v3054 = vpop.permute.xlu0 %3053
      %3055 = vrot.lane.b32.xlu0 %v2293, 24
      %v3056 = vpop.permute.xlu0 %3055
      %3057 = vrot.lane.b32.xlu0 %v2294, 24
      %v3058 = vpop.permute.xlu0 %3057
      %3059 = vrot.lane.b32.xlu0 %v2296, 24
      %v3060 = vpop.permute.xlu0 %3059
      %3061 = vrot.lane.b32.xlu0 %v2297, 24
      %v3062 = vpop.permute.xlu0 %3061
      %3063 = vrot.lane.b32.xlu0 %v2299, 24
      %v3064 = vpop.permute.xlu0 %3063
      %3065 = vrot.lane.b32.xlu0 %v2300, 24
      %v3066 = vpop.permute.xlu0 %3065
      %3067 = vrot.lane.b32.xlu0 %v2302, 24
      %v3068 = vpop.permute.xlu0 %3067
      %3069 = vrot.lane.b32.xlu0 %v2303, 24
      %v3070 = vpop.permute.xlu0 %3069
      %3071 = vrot.lane.b32.xlu0 %v2305, 24
      %v3072 = vpop.permute.xlu0 %3071
      %3073 = vrot.lane.b32.xlu0 %v2306, 24
      %v3074 = vpop.permute.xlu0 %3073
      %3075 = vrot.lane.b32.xlu0 %v2308, 24
      %v3076 = vpop.permute.xlu0 %3075
      %3077 = vrot.lane.b32.xlu0 %v2309, 24
      %v3078 = vpop.permute.xlu0 %3077
      %3079 = vrot.lane.b32.xlu0 %v2311, 24
      %v3080 = vpop.permute.xlu0 %3079
      %3081 = vrot.lane.b32.xlu0 %v2312, 24
      %v3082 = vpop.permute.xlu0 %3081
      %3083 = vrot.lane.b32.xlu0 %v2314, 24
      %v3084 = vpop.permute.xlu0 %3083
      %3085 = vrot.lane.b32.xlu0 %v2315, 24
      %v3086 = vpop.permute.xlu0 %3085
      %3087 = vrot.lane.b32.xlu0 %v2317, 24
      %v3088 = vpop.permute.xlu0 %3087
      %3089 = vrot.lane.b32.xlu0 %v2318, 24
      %v3090 = vpop.permute.xlu0 %3089
      %3091 = vrot.lane.b32.xlu0 %v2320, 24
      %v3092 = vpop.permute.xlu0 %3091
      %3093 = vrot.lane.b32.xlu0 %v2321, 24
      %v3094 = vpop.permute.xlu0 %3093
      %v3128 = vrot.slane %v2320, 1
      %v3129 = vrot.slane %v2321, 1
      %v3130 = vsel %vm334, %v3128, %v3129
      %v3131 = vrot.slane %v2322, 1
      %v3132 = vsel %vm334, %v3129, %v3131
      %3133 = vrot.lane.b32.xlu0 %v2388, 28
      %v3134 = vpop.permute.xlu0 %3133
      %3135 = vrot.lane.b32.xlu0 %v2390, 28
      %v3136 = vpop.permute.xlu0 %3135
      %3137 = vrot.lane.b32.xlu0 %v2393, 28
      %v3138 = vpop.permute.xlu0 %3137
      %3139 = vrot.lane.b32.xlu0 %v2395, 28
      %v3140 = vpop.permute.xlu0 %3139
      %3141 = vrot.lane.b32.xlu0 %v2398, 28
      %v3142 = vpop.permute.xlu0 %3141
      %3143 = vrot.lane.b32.xlu0 %v2400, 28
      %v3144 = vpop.permute.xlu0 %3143
      %3145 = vrot.lane.b32.xlu0 %v2403, 28
      %v3146 = vpop.permute.xlu0 %3145
      %3147 = vrot.lane.b32.xlu0 %v2405, 28
      %v3148 = vpop.permute.xlu0 %3147
      %3149 = vrot.lane.b32.xlu0 %v2408, 28
      %v3150 = vpop.permute.xlu0 %3149
      %3151 = vrot.lane.b32.xlu0 %v2410, 28
      %v3152 = vpop.permute.xlu0 %3151
      %3153 = vrot.lane.b32.xlu0 %v2413, 28
      %v3154 = vpop.permute.xlu0 %3153
      %3155 = vrot.lane.b32.xlu0 %v2415, 28
      %v3156 = vpop.permute.xlu0 %3155
      %3157 = vrot.lane.b32.xlu0 %v2418, 28
      %v3158 = vpop.permute.xlu0 %3157
      %3159 = vrot.lane.b32.xlu0 %v2420, 28
      %v3160 = vpop.permute.xlu0 %3159
      %3161 = vrot.lane.b32.xlu0 %v2423, 28
      %v3162 = vpop.permute.xlu0 %3161
      %3163 = vrot.lane.b32.xlu0 %v2425, 28
      %v3164 = vpop.permute.xlu0 %3163
      %3165 = vrot.lane.b32.xlu0 %v2428, 28
      %v3166 = vpop.permute.xlu0 %3165
      %3167 = vrot.lane.b32.xlu0 %v2430, 28
      %v3168 = vpop.permute.xlu0 %3167
      %3169 = vrot.lane.b32.xlu0 %v2433, 28
      %v3170 = vpop.permute.xlu0 %3169
      %3171 = vrot.lane.b32.xlu0 %v2435, 28
      %v3172 = vpop.permute.xlu0 %3171
      %3173 = vrot.lane.b32.xlu0 %v2438, 28
      %v3174 = vpop.permute.xlu0 %3173
      %3175 = vrot.lane.b32.xlu0 %v2440, 28
      %v3176 = vpop.permute.xlu0 %3175
      %3177 = vrot.lane.b32.xlu0 %v2443, 28
      %v3178 = vpop.permute.xlu0 %3177
      %3179 = vrot.lane.b32.xlu0 %v2445, 28
      %v3180 = vpop.permute.xlu0 %3179
      %3181 = vrot.lane.b32.xlu0 %v2448, 28
      %v3182 = vpop.permute.xlu0 %3181
      %3183 = vrot.lane.b32.xlu0 %v2450, 28
      %v3184 = vpop.permute.xlu0 %3183
      %3185 = vrot.lane.b32.xlu0 %v2453, 28
      %v3186 = vpop.permute.xlu0 %3185
      %3187 = vrot.lane.b32.xlu0 %v2455, 28
      %v3188 = vpop.permute.xlu0 %3187
      %3189 = vrot.lane.b32.xlu0 %v2829, 28
      %v3190 = vpop.permute.xlu0 %3189
      %3191 = vrot.lane.b32.xlu0 %v2831, 28
      %v3192 = vpop.permute.xlu0 %3191
      %3193 = vrot.lane.b32.xlu0 %v3130, 28
      %v3194 = vpop.permute.xlu0 %3193
      %3195 = vrot.lane.b32.xlu0 %v3132, 28
      %v3196 = vpop.permute.xlu0 %3195
      %v3229 = vrot.slane %v2320, 2
      %v3230 = vrot.slane %v2321, 2
      %v3231 = vsel %vm511, %v3229, %v3230
      %v3232 = vrot.slane %v2322, 2
      %v3233 = vsel %vm511, %v3230, %v3232
      %3234 = vrot.lane.b32.xlu0 %v2564, 32
      %v3235 = vpop.permute.xlu0 %3234
      %3236 = vrot.lane.b32.xlu0 %v2566, 32
      %v3237 = vpop.permute.xlu0 %3236
      %3238 = vrot.lane.b32.xlu0 %v2569, 32
      %v3239 = vpop.permute.xlu0 %3238
      %3240 = vrot.lane.b32.xlu0 %v2571, 32
      %v3241 = vpop.permute.xlu0 %3240
      %3242 = vrot.lane.b32.xlu0 %v2574, 32
      %v3243 = vpop.permute.xlu0 %3242
      %3244 = vrot.lane.b32.xlu0 %v2576, 32
      %v3245 = vpop.permute.xlu0 %3244
      %3246 = vrot.lane.b32.xlu0 %v2579, 32
      %v3247 = vpop.permute.xlu0 %3246
      %3248 = vrot.lane.b32.xlu0 %v2581, 32
      %v3249 = vpop.permute.xlu0 %3248
      %3250 = vrot.lane.b32.xlu0 %v2584, 32
      %v3251 = vpop.permute.xlu0 %3250
      %3252 = vrot.lane.b32.xlu0 %v2586, 32
      %v3253 = vpop.permute.xlu0 %3252
      %3254 = vrot.lane.b32.xlu0 %v2589, 32
      %v3255 = vpop.permute.xlu0 %3254
      %3256 = vrot.lane.b32.xlu0 %v2591, 32
      %v3257 = vpop.permute.xlu0 %3256
      %3258 = vrot.lane.b32.xlu0 %v2594, 32
      %v3259 = vpop.permute.xlu0 %3258
      %3260 = vrot.lane.b32.xlu0 %v2596, 32
      %v3261 = vpop.permute.xlu0 %3260
      %3262 = vrot.lane.b32.xlu0 %v2599, 32
      %v3263 = vpop.permute.xlu0 %3262
      %3264 = vrot.lane.b32.xlu0 %v2601, 32
      %v3265 = vpop.permute.xlu0 %3264
      %3266 = vrot.lane.b32.xlu0 %v2604, 32
      %v3267 = vpop.permute.xlu0 %3266
      %3268 = vrot.lane.b32.xlu0 %v2606, 32
      %v3269 = vpop.permute.xlu0 %3268
      %3270 = vrot.lane.b32.xlu0 %v2609, 32
      %v3271 = vpop.permute.xlu0 %3270
      %3272 = vrot.lane.b32.xlu0 %v2611, 32
      %v3273 = vpop.permute.xlu0 %3272
      %3274 = vrot.lane.b32.xlu0 %v2614, 32
      %v3275 = vpop.permute.xlu0 %3274
      %3276 = vrot.lane.b32.xlu0 %v2616, 32
      %v3277 = vpop.permute.xlu0 %3276
      %3278 = vrot.lane.b32.xlu0 %v2619, 32
      %v3279 = vpop.permute.xlu0 %3278
      %3280 = vrot.lane.b32.xlu0 %v2621, 32
      %v3281 = vpop.permute.xlu0 %3280
      %3282 = vrot.lane.b32.xlu0 %v2624, 32
      %v3283 = vpop.permute.xlu0 %3282
      %3284 = vrot.lane.b32.xlu0 %v2626, 32
      %v3285 = vpop.permute.xlu0 %3284
      %3286 = vrot.lane.b32.xlu0 %v2629, 32
      %v3287 = vpop.permute.xlu0 %3286
      %3288 = vrot.lane.b32.xlu0 %v2631, 32
      %v3289 = vpop.permute.xlu0 %3288
      %3290 = vrot.lane.b32.xlu0 %v2930, 32
      %v3291 = vpop.permute.xlu0 %3290
      %3292 = vrot.lane.b32.xlu0 %v2932, 32
      %v3293 = vpop.permute.xlu0 %3292
      %3294 = vrot.lane.b32.xlu0 %v3231, 32
      %v3295 = vpop.permute.xlu0 %3294
      %3296 = vrot.lane.b32.xlu0 %v3233, 32
      %v3297 = vpop.permute.xlu0 %3296
      %v3330 = vsel %vm1290, %v2269, %v2457
      %v3331 = vsel %vm1290, %v2270, %v2459
      %v3332 = vsel %vm1290, %v2272, %v2461
      %v3333 = vsel %vm1290, %v2273, %v2463
      %v3334 = vsel %vm1290, %v2275, %v2465
      %v3335 = vsel %vm1290, %v2276, %v2467
      %v3336 = vsel %vm1290, %v2278, %v2469
      %v3337 = vsel %vm1290, %v2279, %v2471
      %v3338 = vsel %vm1290, %v2281, %v2473
      %v3339 = vsel %vm1290, %v2282, %v2475
      %v3340 = vsel %vm1290, %v2284, %v2477
      %v3341 = vsel %vm1290, %v2285, %v2479
      %v3342 = vsel %vm1290, %v2287, %v2481
      %v3343 = vsel %vm1290, %v2288, %v2483
      %v3344 = vsel %vm1290, %v2290, %v2485
      %v3345 = vsel %vm1290, %v2291, %v2487
      %v3346 = vsel %vm1290, %v2293, %v2489
      %v3347 = vsel %vm1290, %v2294, %v2491
      %v3348 = vsel %vm1290, %v2296, %v2493
      %v3349 = vsel %vm1290, %v2297, %v2495
      %v3350 = vsel %vm1290, %v2299, %v2497
      %v3351 = vsel %vm1290, %v2300, %v2499
      %v3352 = vsel %vm1290, %v2302, %v2501
      %v3353 = vsel %vm1290, %v2303, %v2503
      %v3354 = vsel %vm1290, %v2305, %v2505
      %v3355 = vsel %vm1290, %v2306, %v2507
      %v3356 = vsel %vm1290, %v2308, %v2509
      %v3357 = vsel %vm1290, %v2309, %v2511
      %v3358 = vsel %vm1290, %v2311, %v2513
      %v3359 = vsel %vm1290, %v2312, %v2515
      %v3360 = vsel %vm1290, %v2314, %v2517
      %v3361 = vsel %vm1290, %v2315, %v2519
      %v3362 = vsel %vm1323, %v3330, %v2633
      %v3363 = vsel %vm1323, %v3331, %v2635
      %v3364 = vsel %vm1323, %v3332, %v2637
      %v3365 = vsel %vm1323, %v3333, %v2639
      %v3366 = vsel %vm1323, %v3334, %v2641
      %v3367 = vsel %vm1323, %v3335, %v2643
      %v3368 = vsel %vm1323, %v3336, %v2645
      %v3369 = vsel %vm1323, %v3337, %v2647
      %v3370 = vsel %vm1323, %v3338, %v2649
      %v3371 = vsel %vm1323, %v3339, %v2651
      %v3372 = vsel %vm1323, %v3340, %v2653
      %v3373 = vsel %vm1323, %v3341, %v2655
      %v3374 = vsel %vm1323, %v3342, %v2657
      %v3375 = vsel %vm1323, %v3343, %v2659
      %v3376 = vsel %vm1323, %v3344, %v2661
      %v3377 = vsel %vm1323, %v3345, %v2663
      %v3378 = vsel %vm1323, %v3346, %v2665
      %v3379 = vsel %vm1323, %v3347, %v2667
      %v3380 = vsel %vm1323, %v3348, %v2669
      %v3381 = vsel %vm1323, %v3349, %v2671
      %v3382 = vsel %vm1323, %v3350, %v2673
      %v3383 = vsel %vm1323, %v3351, %v2675
      %v3384 = vsel %vm1323, %v3352, %v2677
      %v3385 = vsel %vm1323, %v3353, %v2679
      %v3386 = vsel %vm1323, %v3354, %v2681
      %v3387 = vsel %vm1323, %v3355, %v2683
      %v3388 = vsel %vm1323, %v3356, %v2685
      %v3389 = vsel %vm1323, %v3357, %v2687
      %v3390 = vsel %vm1323, %v3358, %v2689
      %v3391 = vsel %vm1323, %v3359, %v2691
      %v3392 = vsel %vm1323, %v3360, %v2693
      %v3393 = vsel %vm1323, %v3361, %v2695
      %v3394 = vsel %vm1356, %v3362, %v2731
      %v3395 = vsel %vm1356, %v3363, %v2733
      %v3396 = vsel %vm1356, %v3364, %v2735
      %v3397 = vsel %vm1356, %v3365, %v2737
      %v3398 = vsel %vm1356, %v3366, %v2739
      %v3399 = vsel %vm1356, %v3367, %v2741
      %v3400 = vsel %vm1356, %v3368, %v2743
      %v3401 = vsel %vm1356, %v3369, %v2745
      %v3402 = vsel %vm1356, %v3370, %v2747
      %v3403 = vsel %vm1356, %v3371, %v2749
      %v3404 = vsel %vm1356, %v3372, %v2751
      %v3405 = vsel %vm1356, %v3373, %v2753
      %v3406 = vsel %vm1356, %v3374, %v2755
      %v3407 = vsel %vm1356, %v3375, %v2757
      %v3408 = vsel %vm1356, %v3376, %v2759
      %v3409 = vsel %vm1356, %v3377, %v2761
      %v3410 = vsel %vm1356, %v3378, %v2763
      %v3411 = vsel %vm1356, %v3379, %v2765
      %v3412 = vsel %vm1356, %v3380, %v2767
      %v3413 = vsel %vm1356, %v3381, %v2769
      %v3414 = vsel %vm1356, %v3382, %v2771
      %v3415 = vsel %vm1356, %v3383, %v2773
      %v3416 = vsel %vm1356, %v3384, %v2775
      %v3417 = vsel %vm1356, %v3385, %v2777
      %v3418 = vsel %vm1356, %v3386, %v2779
      %v3419 = vsel %vm1356, %v3387, %v2781
      %v3420 = vsel %vm1356, %v3388, %v2783
      %v3421 = vsel %vm1356, %v3389, %v2785
      %v3422 = vsel %vm1356, %v3390, %v2787
      %v3423 = vsel %vm1356, %v3391, %v2789
      %v3424 = vsel %vm1356, %v3392, %v2791
      %v3425 = vsel %vm1356, %v3393, %v2793
      %v3426 = vsel %vm1389, %v3394, %v2833
      %v3427 = vsel %vm1389, %v3395, %v2835
      %v3428 = vsel %vm1389, %v3396, %v2837
      %v3429 = vsel %vm1389, %v3397, %v2839
      %v3430 = vsel %vm1389, %v3398, %v2841
      %v3431 = vsel %vm1389, %v3399, %v2843
      %v3432 = vsel %vm1389, %v3400, %v2845
      %v3433 = vsel %vm1389, %v3401, %v2847
      %v3434 = vsel %vm1389, %v3402, %v2849
      %v3435 = vsel %vm1389, %v3403, %v2851
      %v3436 = vsel %vm1389, %v3404, %v2853
      %v3437 = vsel %vm1389, %v3405, %v2855
      %v3438 = vsel %vm1389, %v3406, %v2857
      %v3439 = vsel %vm1389, %v3407, %v2859
      %v3440 = vsel %vm1389, %v3408, %v2861
      %v3441 = vsel %vm1389, %v3409, %v2863
      %v3442 = vsel %vm1389, %v3410, %v2865
      %v3443 = vsel %vm1389, %v3411, %v2867
      %v3444 = vsel %vm1389, %v3412, %v2869
      %v3445 = vsel %vm1389, %v3413, %v2871
      %v3446 = vsel %vm1389, %v3414, %v2873
      %v3447 = vsel %vm1389, %v3415, %v2875
      %v3448 = vsel %vm1389, %v3416, %v2877
      %v3449 = vsel %vm1389, %v3417, %v2879
      %v3450 = vsel %vm1389, %v3418, %v2881
      %v3451 = vsel %vm1389, %v3419, %v2883
      %v3452 = vsel %vm1389, %v3420, %v2885
      %v3453 = vsel %vm1389, %v3421, %v2887
      %v3454 = vsel %vm1389, %v3422, %v2889
      %v3455 = vsel %vm1389, %v3423, %v2891
      %v3456 = vsel %vm1389, %v3424, %v2893
      %v3457 = vsel %vm1389, %v3425, %v2895
      %v3458 = vsel %vm1422, %v3426, %v2934
      %v3459 = vsel %vm1422, %v3427, %v2936
      %v3460 = vsel %vm1422, %v3428, %v2938
      %v3461 = vsel %vm1422, %v3429, %v2940
      %v3462 = vsel %vm1422, %v3430, %v2942
      %v3463 = vsel %vm1422, %v3431, %v2944
      %v3464 = vsel %vm1422, %v3432, %v2946
      %v3465 = vsel %vm1422, %v3433, %v2948
      %v3466 = vsel %vm1422, %v3434, %v2950
      %v3467 = vsel %vm1422, %v3435, %v2952
      %v3468 = vsel %vm1422, %v3436, %v2954
      %v3469 = vsel %vm1422, %v3437, %v2956
      %v3470 = vsel %vm1422, %v3438, %v2958
      %v3471 = vsel %vm1422, %v3439, %v2960
      %v3472 = vsel %vm1422, %v3440, %v2962
      %v3473 = vsel %vm1422, %v3441, %v2964
      %v3474 = vsel %vm1422, %v3442, %v2966
      %v3475 = vsel %vm1422, %v3443, %v2968
      %v3476 = vsel %vm1422, %v3444, %v2970
      %v3477 = vsel %vm1422, %v3445, %v2972
      %v3478 = vsel %vm1422, %v3446, %v2974
      %v3479 = vsel %vm1422, %v3447, %v2976
      %v3480 = vsel %vm1422, %v3448, %v2978
      %v3481 = vsel %vm1422, %v3449, %v2980
      %v3482 = vsel %vm1422, %v3450, %v2982
      %v3483 = vsel %vm1422, %v3451, %v2984
      %v3484 = vsel %vm1422, %v3452, %v2986
      %v3485 = vsel %vm1422, %v3453, %v2988
      %v3486 = vsel %vm1422, %v3454, %v2990
      %v3487 = vsel %vm1422, %v3455, %v2992
      %v3488 = vsel %vm1422, %v3456, %v2994
      %v3489 = vsel %vm1422, %v3457, %v2996
      %v3490 = vsel %vm1455, %v3458, %v3032
      %v3491 = vsel %vm1455, %v3459, %v3034
      %v3492 = vsel %vm1455, %v3460, %v3036
      %v3493 = vsel %vm1455, %v3461, %v3038
      %v3494 = vsel %vm1455, %v3462, %v3040
      %v3495 = vsel %vm1455, %v3463, %v3042
      %v3496 = vsel %vm1455, %v3464, %v3044
      %v3497 = vsel %vm1455, %v3465, %v3046
      %v3498 = vsel %vm1455, %v3466, %v3048
      %v3499 = vsel %vm1455, %v3467, %v3050
      %v3500 = vsel %vm1455, %v3468, %v3052
      %v3501 = vsel %vm1455, %v3469, %v3054
      %v3502 = vsel %vm1455, %v3470, %v3056
      %v3503 = vsel %vm1455, %v3471, %v3058
      %v3504 = vsel %vm1455, %v3472, %v3060
      %v3505 = vsel %vm1455, %v3473, %v3062
      %v3506 = vsel %vm1455, %v3474, %v3064
      %v3507 = vsel %vm1455, %v3475, %v3066
      %v3508 = vsel %vm1455, %v3476, %v3068
      %v3509 = vsel %vm1455, %v3477, %v3070
      %v3510 = vsel %vm1455, %v3478, %v3072
      %v3511 = vsel %vm1455, %v3479, %v3074
      %v3512 = vsel %vm1455, %v3480, %v3076
      %v3513 = vsel %vm1455, %v3481, %v3078
      %v3514 = vsel %vm1455, %v3482, %v3080
      %v3515 = vsel %vm1455, %v3483, %v3082
      %v3516 = vsel %vm1455, %v3484, %v3084
      %v3517 = vsel %vm1455, %v3485, %v3086
      %v3518 = vsel %vm1455, %v3486, %v3088
      %v3519 = vsel %vm1455, %v3487, %v3090
      %v3520 = vsel %vm1455, %v3488, %v3092
      %v3521 = vsel %vm1455, %v3489, %v3094
      %v3522 = vsel %vm1488, %v3490, %v3134
      %v3523 = vsel %vm1488, %v3491, %v3136
      %v3524 = vsel %vm1488, %v3492, %v3138
      %v3525 = vsel %vm1488, %v3493, %v3140
      %v3526 = vsel %vm1488, %v3494, %v3142
      %v3527 = vsel %vm1488, %v3495, %v3144
      %v3528 = vsel %vm1488, %v3496, %v3146
      %v3529 = vsel %vm1488, %v3497, %v3148
      %v3530 = vsel %vm1488, %v3498, %v3150
      %v3531 = vsel %vm1488, %v3499, %v3152
      %v3532 = vsel %vm1488, %v3500, %v3154
      %v3533 = vsel %vm1488, %v3501, %v3156
      %v3534 = vsel %vm1488, %v3502, %v3158
      %v3535 = vsel %vm1488, %v3503, %v3160
      %v3536 = vsel %vm1488, %v3504, %v3162
      %v3537 = vsel %vm1488, %v3505, %v3164
      %v3538 = vsel %vm1488, %v3506, %v3166
      %v3539 = vsel %vm1488, %v3507, %v3168
      %v3540 = vsel %vm1488, %v3508, %v3170
      %v3541 = vsel %vm1488, %v3509, %v3172
      %v3542 = vsel %vm1488, %v3510, %v3174
      %v3543 = vsel %vm1488, %v3511, %v3176
      %v3544 = vsel %vm1488, %v3512, %v3178
      %v3545 = vsel %vm1488, %v3513, %v3180
      %v3546 = vsel %vm1488, %v3514, %v3182
      %v3547 = vsel %vm1488, %v3515, %v3184
      %v3548 = vsel %vm1488, %v3516, %v3186
      %v3549 = vsel %vm1488, %v3517, %v3188
      %v3550 = vsel %vm1488, %v3518, %v3190
      %v3551 = vsel %vm1488, %v3519, %v3192
      %v3552 = vsel %vm1488, %v3520, %v3194
      %v3553 = vsel %vm1488, %v3521, %v3196
      %v3554 = vsel %vm1521, %v3522, %v3235
      %v3555 = vsel %vm1521, %v3523, %v3237
      %v3556 = vsel %vm1521, %v3524, %v3239
      %v3557 = vsel %vm1521, %v3525, %v3241
      %v3558 = vsel %vm1521, %v3526, %v3243
      %v3559 = vsel %vm1521, %v3527, %v3245
      %v3560 = vsel %vm1521, %v3528, %v3247
      %v3561 = vsel %vm1521, %v3529, %v3249
      %v3562 = vsel %vm1521, %v3530, %v3251
      %v3563 = vsel %vm1521, %v3531, %v3253
      %v3564 = vsel %vm1521, %v3532, %v3255
      %v3565 = vsel %vm1521, %v3533, %v3257
      %v3566 = vsel %vm1521, %v3534, %v3259
      %v3567 = vsel %vm1521, %v3535, %v3261
      %v3568 = vsel %vm1521, %v3536, %v3263
      %v3569 = vsel %vm1521, %v3537, %v3265
      %v3570 = vsel %vm1521, %v3538, %v3267
      %v3571 = vsel %vm1521, %v3539, %v3269
      %v3572 = vsel %vm1521, %v3540, %v3271
      %v3573 = vsel %vm1521, %v3541, %v3273
      %v3574 = vsel %vm1521, %v3542, %v3275
      %v3575 = vsel %vm1521, %v3543, %v3277
      %v3576 = vsel %vm1521, %v3544, %v3279
      %v3577 = vsel %vm1521, %v3545, %v3281
      %v3578 = vsel %vm1521, %v3546, %v3283
      %v3579 = vsel %vm1521, %v3547, %v3285
      %v3580 = vsel %vm1521, %v3548, %v3287
      %v3581 = vsel %vm1521, %v3549, %v3289
      %v3582 = vsel %vm1521, %v3550, %v3291
      %v3583 = vsel %vm1521, %v3551, %v3293
      %v3584 = vsel %vm1521, %v3552, %v3295
      %v3585 = vsel %vm1521, %v3553, %v3297
      %v3587 = vlaneseq
      %v3588 = vshrl.u32 %v3587, 7
      %v3589 = vsub.s32 0, %v3588
      %v3590 = vrot.slane %v280, %v3589
      %v3593 = vsel %vm1560, %v3554, 0
      %v3596 = vsel %vm1560, %v3555, 0
      %v3599 = vsel %vm1560, %v3556, 0
      %v3602 = vsel %vm1560, %v3557, 0
      %v3605 = vsel %vm1560, %v3558, 0
      %v3608 = vsel %vm1560, %v3559, 0
      %v3611 = vsel %vm1560, %v3560, 0
      %v3614 = vsel %vm1560, %v3561, 0
      %v3617 = vsel %vm1560, %v3562, 0
      %v3620 = vsel %vm1560, %v3563, 0
      %v3623 = vsel %vm1560, %v3564, 0
      %v3626 = vsel %vm1560, %v3565, 0
      %v3629 = vsel %vm1560, %v3566, 0
      %v3632 = vsel %vm1560, %v3567, 0
      %v3635 = vsel %vm1560, %v3568, 0
      %v3638 = vsel %vm1560, %v3569, 0
      %v3641 = vsel %vm1560, %v3570, 0
      %v3644 = vsel %vm1560, %v3571, 0
      %v3647 = vsel %vm1560, %v3572, 0
      %v3650 = vsel %vm1560, %v3573, 0
      %v3653 = vsel %vm1560, %v3574, 0
      %v3656 = vsel %vm1560, %v3575, 0
      %v3659 = vsel %vm1560, %v3576, 0
      %v3662 = vsel %vm1560, %v3577, 0
      %v3665 = vsel %vm1560, %v3578, 0
      %v3668 = vsel %vm1560, %v3579, 0
      %v3671 = vsel %vm1560, %v3580, 0
      %v3674 = vsel %vm1560, %v3581, 0
      %v3677 = vsel %vm1560, %v3582, 0
      %v3680 = vsel %vm1560, %v3583, 0
      %v3683 = vsel %vm1560, %v3584, 0
      %v3686 = vsel %vm1560, %v3585, 0
      %v3689 = vsel %vm1657, %v2327, 0
      %3691 = vmatprep.subr.mxu0 0.0
      %3692 = vmatpush1.msra.mxu0 %v2323
      %3693 = vmatprep.subr.mxu0 0.0
      %3694 = vmatpush1.msra.mxu0 %v2324
      %3695 = vmatprep.subr.mxu0 0.0
      %3696 = vmatpush1.msra.mxu0 %v2325
      %3697 = vmatprep.subr.mxu0 0.0
      %3698 = vmatpush1.msra.mxu0 %v2326
      %3699 = vmatprep.subr.mxu0 0.0
      %3700 = vmatpush1.msra.mxu0 %v3689
      %3701 = vmatprep.subr.mxu0 0.0
      %3702 = vmatpush1.msra.mxu0 0.0
      %3703 = vmatprep.subr.mxu0 0.0
      %3704 = vmatpush1.msra.mxu0 0.0
      %3705 = vmatprep.subr.mxu0 0.0
      %3706 = vmatpush1.msra.mxu0 0.0
      %3707 = vmatprep.subr.mxu0 0.0
      %3708 = vmatpush1.msra.mxu0 0.0
      %3709 = vmatprep.subr.mxu0 0.0
      %3710 = vmatpush1.msra.mxu0 0.0
      %3711 = vmatprep.subr.mxu0 0.0
      %3712 = vmatpush1.msra.mxu0 0.0
      %3713 = vmatprep.subr.mxu0 0.0
      %3714 = vmatpush1.msra.mxu0 0.0
      %3715 = vmatprep.subr.mxu0 0.0
      %3716 = vmatpush1.msra.mxu0 0.0
      %3717 = vmatprep.subr.mxu0 0.0
      %3718 = vmatpush1.msra.mxu0 0.0
      %3719 = vmatprep.subr.mxu0 0.0
      %3720 = vmatpush1.msra.mxu0 0.0
      %3721 = vmatprep.subr.mxu0 0.0
      %3722 = vmatpush1.msra.mxu0 0.0
      %3723 = vmatprep.subr.mxu0 0.0
      %3724 = vmatpush1.msra.mxu0 0.0
      %3725 = vmatprep.subr.mxu0 0.0
      %3726 = vmatpush1.msra.mxu0 0.0
      %3727 = vmatprep.subr.mxu0 0.0
      %3728 = vmatpush1.msra.mxu0 0.0
      %3729 = vmatprep.subr.mxu0 0.0
      %3730 = vmatpush1.msra.mxu0 0.0
      %3731 = vmatprep.subr.mxu0 0.0
      %3732 = vmatpush1.msra.mxu0 0.0
      %3733 = vmatprep.subr.mxu0 0.0
      %3734 = vmatpush1.msra.mxu0 0.0
      %3735 = vmatprep.subr.mxu0 0.0
      %3736 = vmatpush1.msra.mxu0 0.0
      %3737 = vmatprep.subr.mxu0 0.0
      %3738 = vmatpush1.msra.mxu0 0.0
      %3739 = vmatprep.subr.mxu0 0.0
      %3740 = vmatpush1.msra.mxu0 0.0
      %3741 = vmatprep.subr.mxu0 0.0
      %3742 = vmatpush1.msra.mxu0 0.0
      %3743 = vmatprep.subr.mxu0 0.0
      %3744 = vmatpush1.msra.mxu0 0.0
      %3745 = vmatprep.subr.mxu0 0.0
      %3746 = vmatpush1.msra.mxu0 0.0
      %3747 = vmatprep.subr.mxu0 0.0
      %3748 = vmatpush1.msra.mxu0 0.0
      %3749 = vmatprep.subr.mxu0 0.0
      %3750 = vmatpush1.msra.mxu0 0.0
      %3751 = vmatprep.subr.mxu0 0.0
      %3752 = vmatpush1.msra.mxu0 0.0
      %3753 = vmatprep.subr.mxu0 0.0
      %3754 = vmatpush1.msra.mxu0 0.0
      %3755 = vmatprep.mubr.f32.mxu0 0.0
      %3756 = vmatmul.mubr.f32.gmra.mrb[0].mxu0 %v3593
      %v3757 = vpop.f32.mrb[0].mxu0
      %v3758 = vadd.f32 %v3590, %v3757
      %v3759 = vpop.f32.mrb[0].mxu0
      %3760 = vmatprep.mubr.f32.mxu0 0.0
      %3761 = vmatmul.mubr.f32.gmra.mrb[0].mxu0 %v3596
      %v3762 = vpop.f32.mrb[0].mxu0
      %v3763 = vadd.f32 %v3590, %v3762
      %v3764 = vpop.f32.mrb[0].mxu0
      %3765 = vmatprep.mubr.f32.mxu0 0.0
      %3766 = vmatmul.mubr.f32.gmra.mrb[0].mxu0 %v3599
      %v3767 = vpop.f32.mrb[0].mxu0
      %v3768 = vadd.f32 %v3590, %v3767
      %v3769 = vpop.f32.mrb[0].mxu0
      %3770 = vmatprep.mubr.f32.mxu0 0.0
      %3771 = vmatmul.mubr.f32.gmra.mrb[0].mxu0 %v3602
      %v3772 = vpop.f32.mrb[0].mxu0
      %v3773 = vadd.f32 %v3590, %v3772
      %v3774 = vpop.f32.mrb[0].mxu0
      %3775 = vmatprep.mubr.f32.mxu0 0.0
      %3776 = vmatmul.mubr.f32.gmra.mrb[0].mxu0 %v3605
      %v3777 = vpop.f32.mrb[0].mxu0
      %v3778 = vadd.f32 %v3590, %v3777
      %v3779 = vpop.f32.mrb[0].mxu0
      %3780 = vmatprep.mubr.f32.mxu0 0.0
      %3781 = vmatmul.mubr.f32.gmra.mrb[0].mxu0 %v3608
      %v3782 = vpop.f32.mrb[0].mxu0
      %v3783 = vadd.f32 %v3590, %v3782
      %v3784 = vpop.f32.mrb[0].mxu0
      %3785 = vmatprep.mubr.f32.mxu0 0.0
      %3786 = vmatmul.mubr.f32.gmra.mrb[0].mxu0 %v3611
      %v3787 = vpop.f32.mrb[0].mxu0
      %v3788 = vadd.f32 %v3590, %v3787
      %v3789 = vpop.f32.mrb[0].mxu0
      %3790 = vmatprep.mubr.f32.mxu0 0.0
      %3791 = vmatmul.mubr.f32.gmra.mrb[0].mxu0 %v3614
      %v3792 = vpop.f32.mrb[0].mxu0
      %v3793 = vadd.f32 %v3590, %v3792
      %v3794 = vpop.f32.mrb[0].mxu0
      %3795 = vmatprep.mubr.f32.mxu0 0.0
      %3796 = vmatmul.mubr.f32.gmra.mrb[0].mxu0 %v3617
      %v3797 = vpop.f32.mrb[0].mxu0
      %v3798 = vadd.f32 %v3590, %v3797
      %v3799 = vpop.f32.mrb[0].mxu0
      %3800 = vmatprep.mubr.f32.mxu0 0.0
      %3801 = vmatmul.mubr.f32.gmra.mrb[0].mxu0 %v3620
      %v3802 = vpop.f32.mrb[0].mxu0
      %v3803 = vadd.f32 %v3590, %v3802
      %v3804 = vpop.f32.mrb[0].mxu0
      %3805 = vmatprep.mubr.f32.mxu0 0.0
      %3806 = vmatmul.mubr.f32.gmra.mrb[0].mxu0 %v3623
      %v3807 = vpop.f32.mrb[0].mxu0
      %v3808 = vadd.f32 %v3590, %v3807
      %v3809 = vpop.f32.mrb[0].mxu0
      %3810 = vmatprep.mubr.f32.mxu0 0.0
      %3811 = vmatmul.mubr.f32.gmra.mrb[0].mxu0 %v3626
      %v3812 = vpop.f32.mrb[0].mxu0
      %v3813 = vadd.f32 %v3590, %v3812
      %v3814 = vpop.f32.mrb[0].mxu0
      %3815 = vmatprep.mubr.f32.mxu0 0.0
      %3816 = vmatmul.mubr.f32.gmra.mrb[0].mxu0 %v3629
      %v3817 = vpop.f32.mrb[0].mxu0
      %v3818 = vadd.f32 %v3590, %v3817
      %v3819 = vpop.f32.mrb[0].mxu0
      %3820 = vmatprep.mubr.f32.mxu0 0.0
      %3821 = vmatmul.mubr.f32.gmra.mrb[0].mxu0 %v3632
      %v3822 = vpop.f32.mrb[0].mxu0
      %v3823 = vadd.f32 %v3590, %v3822
      %v3824 = vpop.f32.mrb[0].mxu0
      %3825 = vmatprep.mubr.f32.mxu0 0.0
      %3826 = vmatmul.mubr.f32.gmra.mrb[0].mxu0 %v3635
      %v3827 = vpop.f32.mrb[0].mxu0
      %v3828 = vadd.f32 %v3590, %v3827
      %v3829 = vpop.f32.mrb[0].mxu0
      %3830 = vmatprep.mubr.f32.mxu0 0.0
      %3831 = vmatmul.mubr.f32.gmra.mrb[0].mxu0 %v3638
      %v3832 = vpop.f32.mrb[0].mxu0
      %v3833 = vadd.f32 %v3590, %v3832
      %v3834 = vpop.f32.mrb[0].mxu0
      %3835 = vmatprep.mubr.f32.mxu0 0.0
      %3836 = vmatmul.mubr.f32.gmra.mrb[0].mxu0 %v3641
      %v3837 = vpop.f32.mrb[0].mxu0
      %v3838 = vadd.f32 %v3590, %v3837
      %v3839 = vpop.f32.mrb[0].mxu0
      %3840 = vmatprep.mubr.f32.mxu0 0.0
      %3841 = vmatmul.mubr.f32.gmra.mrb[0].mxu0 %v3644
      %v3842 = vpop.f32.mrb[0].mxu0
      %v3843 = vadd.f32 %v3590, %v3842
      %v3844 = vpop.f32.mrb[0].mxu0
      %3845 = vmatprep.mubr.f32.mxu0 0.0
      %3846 = vmatmul.mubr.f32.gmra.mrb[0].mxu0 %v3647
      %v3847 = vpop.f32.mrb[0].mxu0
      %v3848 = vadd.f32 %v3590, %v3847
      %v3849 = vpop.f32.mrb[0].mxu0
      %3850 = vmatprep.mubr.f32.mxu0 0.0
      %3851 = vmatmul.mubr.f32.gmra.mrb[0].mxu0 %v3650
      %v3852 = vpop.f32.mrb[0].mxu0
      %v3853 = vadd.f32 %v3590, %v3852
      %v3854 = vpop.f32.mrb[0].mxu0
      %3855 = vmatprep.mubr.f32.mxu0 0.0
      %3856 = vmatmul.mubr.f32.gmra.mrb[0].mxu0 %v3653
      %v3857 = vpop.f32.mrb[0].mxu0
      %v3858 = vadd.f32 %v3590, %v3857
      %v3859 = vpop.f32.mrb[0].mxu0
      %3860 = vmatprep.mubr.f32.mxu0 0.0
      %3861 = vmatmul.mubr.f32.gmra.mrb[0].mxu0 %v3656
      %v3862 = vpop.f32.mrb[0].mxu0
      %v3863 = vadd.f32 %v3590, %v3862
      %v3864 = vpop.f32.mrb[0].mxu0
      %3865 = vmatprep.mubr.f32.mxu0 0.0
      %3866 = vmatmul.mubr.f32.gmra.mrb[0].mxu0 %v3659
      %v3867 = vpop.f32.mrb[0].mxu0
      %v3868 = vadd.f32 %v3590, %v3867
      %v3869 = vpop.f32.mrb[0].mxu0
      %3870 = vmatprep.mubr.f32.mxu0 0.0
      %3871 = vmatmul.mubr.f32.gmra.mrb[0].mxu0 %v3662
      %v3872 = vpop.f32.mrb[0].mxu0
      %v3873 = vadd.f32 %v3590, %v3872
      %v3874 = vpop.f32.mrb[0].mxu0
      %3875 = vmatprep.mubr.f32.mxu0 0.0
      %3876 = vmatmul.mubr.f32.gmra.mrb[0].mxu0 %v3665
      %v3877 = vpop.f32.mrb[0].mxu0
      %v3878 = vadd.f32 %v3590, %v3877
      %v3879 = vpop.f32.mrb[0].mxu0
      %3880 = vmatprep.mubr.f32.mxu0 0.0
      %3881 = vmatmul.mubr.f32.gmra.mrb[0].mxu0 %v3668
      %v3882 = vpop.f32.mrb[0].mxu0
      %v3883 = vadd.f32 %v3590, %v3882
      %v3884 = vpop.f32.mrb[0].mxu0
      %3885 = vmatprep.mubr.f32.mxu0 0.0
      %3886 = vmatmul.mubr.f32.gmra.mrb[0].mxu0 %v3671
      %v3887 = vpop.f32.mrb[0].mxu0
      %v3888 = vadd.f32 %v3590, %v3887
      %v3889 = vpop.f32.mrb[0].mxu0
      %3890 = vmatprep.mubr.f32.mxu0 0.0
      %3891 = vmatmul.mubr.f32.gmra.mrb[0].mxu0 %v3674
      %v3892 = vpop.f32.mrb[0].mxu0
      %v3893 = vadd.f32 %v3590, %v3892
      %v3894 = vpop.f32.mrb[0].mxu0
      %3895 = vmatprep.mubr.f32.mxu0 0.0
      %3896 = vmatmul.mubr.f32.gmra.mrb[0].mxu0 %v3677
      %v3897 = vpop.f32.mrb[0].mxu0
      %v3898 = vadd.f32 %v3590, %v3897
      %v3899 = vpop.f32.mrb[0].mxu0
      %3900 = vmatprep.mubr.f32.mxu0 0.0
      %3901 = vmatmul.mubr.f32.gmra.mrb[0].mxu0 %v3680
      %v3902 = vpop.f32.mrb[0].mxu0
      %v3903 = vadd.f32 %v3590, %v3902
      %v3904 = vpop.f32.mrb[0].mxu0
      %3905 = vmatprep.mubr.f32.mxu0 0.0
      %3906 = vmatmul.mubr.f32.gmra.mrb[0].mxu0 %v3683
      %v3907 = vpop.f32.mrb[0].mxu0
      %v3908 = vadd.f32 %v3590, %v3907
      %v3909 = vpop.f32.mrb[0].mxu0
      %3910 = vmatprep.mubr.f32.mxu0 0.0
      %3911 = vmatmul.mubr.f32.gmra.mrb[0].mxu0 %v3686
      %v3912 = vpop.f32.mrb[0].mxu0
      %v3913 = vadd.f32 %v3590, %v3912
      %v3914 = vpop.f32.mrb[0].mxu0
      %3915 = vdwg.mxu0
      %v3916 = vsel %vm1290, %v3758, 0.0
      %v3917 = vsel %vm1290, %v3763, 0.0
      %v3918 = vadd.f32 %v3916, %v3917
      %v3919 = vsel %vm1290, %v3768, 0.0
      %v3920 = vadd.f32 %v3918, %v3919
      %v3921 = vsel %vm1290, %v3773, 0.0
      %v3922 = vadd.f32 %v3920, %v3921
      %v3923 = vsel %vm1290, %v3778, 0.0
      %v3924 = vadd.f32 %v3922, %v3923
      %v3925 = vsel %vm1290, %v3783, 0.0
      %v3926 = vadd.f32 %v3924, %v3925
      %v3927 = vsel %vm1290, %v3788, 0.0
      %v3928 = vadd.f32 %v3926, %v3927
      %v3929 = vsel %vm1290, %v3793, 0.0
      %v3930 = vadd.f32 %v3928, %v3929
      %v3931 = vsel %vm1290, %v3798, 0.0
      %v3932 = vadd.f32 %v3930, %v3931
      %v3933 = vsel %vm1290, %v3803, 0.0
      %v3934 = vadd.f32 %v3932, %v3933
      %v3935 = vsel %vm1290, %v3808, 0.0
      %v3936 = vadd.f32 %v3934, %v3935
      %v3937 = vsel %vm1290, %v3813, 0.0
      %v3938 = vadd.f32 %v3936, %v3937
      %v3939 = vsel %vm1290, %v3818, 0.0
      %v3940 = vadd.f32 %v3938, %v3939
      %v3941 = vsel %vm1290, %v3823, 0.0
      %v3942 = vadd.f32 %v3940, %v3941
      %v3943 = vsel %vm1290, %v3828, 0.0
      %v3944 = vadd.f32 %v3942, %v3943
      %v3945 = vsel %vm1290, %v3833, 0.0
      %v3946 = vadd.f32 %v3944, %v3945
      %v3947 = vsel %vm1290, %v3838, 0.0
      %v3948 = vadd.f32 %v3946, %v3947
      %v3949 = vsel %vm1290, %v3843, 0.0
      %v3950 = vadd.f32 %v3948, %v3949
      %v3951 = vsel %vm1290, %v3848, 0.0
      %v3952 = vadd.f32 %v3950, %v3951
      %v3953 = vsel %vm1290, %v3853, 0.0
      %v3954 = vadd.f32 %v3952, %v3953
      %v3955 = vsel %vm1290, %v3858, 0.0
      %v3956 = vadd.f32 %v3954, %v3955
      %v3957 = vsel %vm1290, %v3863, 0.0
      %v3958 = vadd.f32 %v3956, %v3957
      %v3959 = vsel %vm1290, %v3868, 0.0
      %v3960 = vadd.f32 %v3958, %v3959
      %v3961 = vsel %vm1290, %v3873, 0.0
      %v3962 = vadd.f32 %v3960, %v3961
      %v3963 = vsel %vm1290, %v3878, 0.0
      %v3964 = vadd.f32 %v3962, %v3963
      %v3965 = vsel %vm1290, %v3883, 0.0
      %v3966 = vadd.f32 %v3964, %v3965
      %v3967 = vsel %vm1290, %v3888, 0.0
      %v3968 = vadd.f32 %v3966, %v3967
      %v3969 = vsel %vm1290, %v3893, 0.0
      %v3970 = vadd.f32 %v3968, %v3969
      %v3971 = vsel %vm1290, %v3898, 0.0
      %v3972 = vadd.f32 %v3970, %v3971
      %v3973 = vsel %vm1290, %v3903, 0.0
      %v3974 = vadd.f32 %v3972, %v3973
      %v3975 = vsel %vm1290, %v3908, 0.0
      %v3976 = vadd.f32 %v3974, %v3975
      %v3977 = vsel %vm1290, %v3913, 0.0
      %v3978 = vadd.f32 %v3976, %v3977
      %v3979 = vrot.slane %v3978, 4
      %v3980 = vadd.f32 %v3978, %v3979
      %v3981 = vrot.slane %v3980, 2
      %v3982 = vadd.f32 %v3980, %v3981
      %v3983 = vrot.slane %v3982, 1
      %v3984 = vadd.f32 %v3982, %v3983
      %v3985 = vmul.f32 %v3758, %v3758
      %v3986 = vmul.f32 %v3763, %v3763
      %v3987 = vmul.f32 %v3768, %v3768
      %v3988 = vmul.f32 %v3773, %v3773
      %v3989 = vmul.f32 %v3778, %v3778
      %v3990 = vmul.f32 %v3783, %v3783
      %v3991 = vmul.f32 %v3788, %v3788
      %v3992 = vmul.f32 %v3793, %v3793
      %v3993 = vmul.f32 %v3798, %v3798
      %v3994 = vmul.f32 %v3803, %v3803
      %v3995 = vmul.f32 %v3808, %v3808
      %v3996 = vmul.f32 %v3813, %v3813
      %v3997 = vmul.f32 %v3818, %v3818
      %v3998 = vmul.f32 %v3823, %v3823
      %v3999 = vmul.f32 %v3828, %v3828
      %v4000 = vmul.f32 %v3833, %v3833
      %v4001 = vmul.f32 %v3838, %v3838
      %v4002 = vmul.f32 %v3843, %v3843
      %v4003 = vmul.f32 %v3848, %v3848
      %v4004 = vmul.f32 %v3853, %v3853
      %v4005 = vmul.f32 %v3858, %v3858
      %v4006 = vmul.f32 %v3863, %v3863
      %v4007 = vmul.f32 %v3868, %v3868
      %v4008 = vmul.f32 %v3873, %v3873
      %v4009 = vmul.f32 %v3878, %v3878
      %v4010 = vmul.f32 %v3883, %v3883
      %v4011 = vmul.f32 %v3888, %v3888
      %v4012 = vmul.f32 %v3893, %v3893
      %v4013 = vmul.f32 %v3898, %v3898
      %v4014 = vmul.f32 %v3903, %v3903
      %v4015 = vmul.f32 %v3908, %v3908
      %v4016 = vmul.f32 %v3913, %v3913
      %v4017 = vsel %vm1290, %v3985, 0.0
      %v4018 = vsel %vm1290, %v3986, 0.0
      %v4019 = vadd.f32 %v4017, %v4018
      %v4020 = vsel %vm1290, %v3987, 0.0
      %v4021 = vadd.f32 %v4019, %v4020
      %v4022 = vsel %vm1290, %v3988, 0.0
      %v4023 = vadd.f32 %v4021, %v4022
      %v4024 = vsel %vm1290, %v3989, 0.0
      %v4025 = vadd.f32 %v4023, %v4024
      %v4026 = vsel %vm1290, %v3990, 0.0
      %v4027 = vadd.f32 %v4025, %v4026
      %v4028 = vsel %vm1290, %v3991, 0.0
      %v4029 = vadd.f32 %v4027, %v4028
      %v4030 = vsel %vm1290, %v3992, 0.0
      %v4031 = vadd.f32 %v4029, %v4030
      %v4032 = vsel %vm1290, %v3993, 0.0
      %v4033 = vadd.f32 %v4031, %v4032
      %v4034 = vsel %vm1290, %v3994, 0.0
      %v4035 = vadd.f32 %v4033, %v4034
      %v4036 = vsel %vm1290, %v3995, 0.0
      %v4037 = vadd.f32 %v4035, %v4036
      %v4038 = vsel %vm1290, %v3996, 0.0
      %v4039 = vadd.f32 %v4037, %v4038
      %v4040 = vsel %vm1290, %v3997, 0.0
      %v4041 = vadd.f32 %v4039, %v4040
      %v4042 = vsel %vm1290, %v3998, 0.0
      %v4043 = vadd.f32 %v4041, %v4042
      %v4044 = vsel %vm1290, %v3999, 0.0
      %v4045 = vadd.f32 %v4043, %v4044
      %v4046 = vsel %vm1290, %v4000, 0.0
      %v4047 = vadd.f32 %v4045, %v4046
      %v4048 = vsel %vm1290, %v4001, 0.0
      %v4049 = vadd.f32 %v4047, %v4048
      %v4050 = vsel %vm1290, %v4002, 0.0
      %v4051 = vadd.f32 %v4049, %v4050
      %v4052 = vsel %vm1290, %v4003, 0.0
      %v4053 = vadd.f32 %v4051, %v4052
      %v4054 = vsel %vm1290, %v4004, 0.0
      %v4055 = vadd.f32 %v4053, %v4054
      %v4056 = vsel %vm1290, %v4005, 0.0
      %v4057 = vadd.f32 %v4055, %v4056
      %v4058 = vsel %vm1290, %v4006, 0.0
      %v4059 = vadd.f32 %v4057, %v4058
      %v4060 = vsel %vm1290, %v4007, 0.0
      %v4061 = vadd.f32 %v4059, %v4060
      %v4062 = vsel %vm1290, %v4008, 0.0
      %v4063 = vadd.f32 %v4061, %v4062
      %v4064 = vsel %vm1290, %v4009, 0.0
      %v4065 = vadd.f32 %v4063, %v4064
      %v4066 = vsel %vm1290, %v4010, 0.0
      %v4067 = vadd.f32 %v4065, %v4066
      %v4068 = vsel %vm1290, %v4011, 0.0
      %v4069 = vadd.f32 %v4067, %v4068
      %v4070 = vsel %vm1290, %v4012, 0.0
      %v4071 = vadd.f32 %v4069, %v4070
      %v4072 = vsel %vm1290, %v4013, 0.0
      %v4073 = vadd.f32 %v4071, %v4072
      %v4074 = vsel %vm1290, %v4014, 0.0
      %v4075 = vadd.f32 %v4073, %v4074
      %v4076 = vsel %vm1290, %v4015, 0.0
      %v4077 = vadd.f32 %v4075, %v4076
      %v4078 = vsel %vm1290, %v4016, 0.0
      %v4079 = vadd.f32 %v4077, %v4078
      %v4080 = vrot.slane %v4079, 4
      %v4081 = vadd.f32 %v4079, %v4080
      %v4082 = vrot.slane %v4081, 2
      %v4083 = vadd.f32 %v4081, %v4082
      %v4084 = vrot.slane %v4083, 1
      %v4085 = vadd.f32 %v4083, %v4084
      %v4086 = vmul.f32 %v3984, 0.00390625
      %v4087 = vmul.f32 %v4085, 0.00390625
      %v4088 = vmul.f32 %v4086, %v4086
      %v4089 = vsub.f32 %v4087, %v4088
      %v4090 = vsub.f32 %v3758, %v4086
      %v4091 = vsub.f32 %v3763, %v4086
      %v4092 = vsub.f32 %v3768, %v4086
      %v4093 = vsub.f32 %v3773, %v4086
      %v4094 = vsub.f32 %v3778, %v4086
      %v4095 = vsub.f32 %v3783, %v4086
      %v4096 = vsub.f32 %v3788, %v4086
      %v4097 = vsub.f32 %v3793, %v4086
      %v4098 = vsub.f32 %v3798, %v4086
      %v4099 = vsub.f32 %v3803, %v4086
      %v4100 = vsub.f32 %v3808, %v4086
      %v4101 = vsub.f32 %v3813, %v4086
      %v4102 = vsub.f32 %v3818, %v4086
      %v4103 = vsub.f32 %v3823, %v4086
      %v4104 = vsub.f32 %v3828, %v4086
      %v4105 = vsub.f32 %v3833, %v4086
      %v4106 = vsub.f32 %v3838, %v4086
      %v4107 = vsub.f32 %v3843, %v4086
      %v4108 = vsub.f32 %v3848, %v4086
      %v4109 = vsub.f32 %v3853, %v4086
      %v4110 = vsub.f32 %v3858, %v4086
      %v4111 = vsub.f32 %v3863, %v4086
      %v4112 = vsub.f32 %v3868, %v4086
      %v4113 = vsub.f32 %v3873, %v4086
      %v4114 = vsub.f32 %v3878, %v4086
      %v4115 = vsub.f32 %v3883, %v4086
      %v4116 = vsub.f32 %v3888, %v4086
      %v4117 = vsub.f32 %v3893, %v4086
      %v4118 = vsub.f32 %v3898, %v4086
      %v4119 = vsub.f32 %v3903, %v4086
      %v4120 = vsub.f32 %v3908, %v4086
      %v4121 = vsub.f32 %v3913, %v4086
      %v4122 = vadd.f32 %v4089, 1e-05
      %v4123 = vrsqrt.pop %v4122
      %v4124 = vmul.f32 %v4090, %v4123
      %v4125 = vmul.f32 %v4091, %v4123
      %v4126 = vmul.f32 %v4092, %v4123
      %v4127 = vmul.f32 %v4093, %v4123
      %v4128 = vmul.f32 %v4094, %v4123
      %v4129 = vmul.f32 %v4095, %v4123
      %v4130 = vmul.f32 %v4096, %v4123
      %v4131 = vmul.f32 %v4097, %v4123
      %v4132 = vmul.f32 %v4098, %v4123
      %v4133 = vmul.f32 %v4099, %v4123
      %v4134 = vmul.f32 %v4100, %v4123
      %v4135 = vmul.f32 %v4101, %v4123
      %v4136 = vmul.f32 %v4102, %v4123
      %v4137 = vmul.f32 %v4103, %v4123
      %v4138 = vmul.f32 %v4104, %v4123
      %v4139 = vmul.f32 %v4105, %v4123
      %v4140 = vmul.f32 %v4106, %v4123
      %v4141 = vmul.f32 %v4107, %v4123
      %v4142 = vmul.f32 %v4108, %v4123
      %v4143 = vmul.f32 %v4109, %v4123
      %v4144 = vmul.f32 %v4110, %v4123
      %v4145 = vmul.f32 %v4111, %v4123
      %v4146 = vmul.f32 %v4112, %v4123
      %v4147 = vmul.f32 %v4113, %v4123
      %v4148 = vmul.f32 %v4114, %v4123
      %v4149 = vmul.f32 %v4115, %v4123
      %v4150 = vmul.f32 %v4116, %v4123
      %v4151 = vmul.f32 %v4117, %v4123
      %v4152 = vmul.f32 %v4118, %v4123
      %v4153 = vmul.f32 %v4119, %v4123
      %v4154 = vmul.f32 %v4120, %v4123
      %v4155 = vmul.f32 %v4121, %v4123
      %vm4188 = vcmask 1040384
      %v4189 = vrot.slane %v4124, 7
      %v4190 = vrot.slane %v4125, 7
      %v4191 = vsel %vm4188, %v4189, %v4190
      %v4192 = vrot.slane %v4126, 7
      %v4193 = vrot.slane %v4127, 7
      %v4194 = vsel %vm4188, %v4192, %v4193
      %v4195 = vrot.slane %v4128, 7
      %v4196 = vrot.slane %v4129, 7
      %v4197 = vsel %vm4188, %v4195, %v4196
      %v4198 = vrot.slane %v4130, 7
      %v4199 = vrot.slane %v4131, 7
      %v4200 = vsel %vm4188, %v4198, %v4199
      %v4201 = vrot.slane %v4132, 7
      %v4202 = vrot.slane %v4133, 7
      %v4203 = vsel %vm4188, %v4201, %v4202
      %v4204 = vrot.slane %v4134, 7
      %v4205 = vrot.slane %v4135, 7
      %v4206 = vsel %vm4188, %v4204, %v4205
      %v4207 = vrot.slane %v4136, 7
      %v4208 = vrot.slane %v4137, 7
      %v4209 = vsel %vm4188, %v4207, %v4208
      %v4210 = vrot.slane %v4138, 7
      %v4211 = vrot.slane %v4139, 7
      %v4212 = vsel %vm4188, %v4210, %v4211
      %v4213 = vrot.slane %v4140, 7
      %v4214 = vrot.slane %v4141, 7
      %v4215 = vsel %vm4188, %v4213, %v4214
      %v4216 = vrot.slane %v4142, 7
      %v4217 = vrot.slane %v4143, 7
      %v4218 = vsel %vm4188, %v4216, %v4217
      %v4219 = vrot.slane %v4144, 7
      %v4220 = vrot.slane %v4145, 7
      %v4221 = vsel %vm4188, %v4219, %v4220
      %v4222 = vrot.slane %v4146, 7
      %v4223 = vrot.slane %v4147, 7
      %v4224 = vsel %vm4188, %v4222, %v4223
      %v4225 = vrot.slane %v4148, 7
      %v4226 = vrot.slane %v4149, 7
      %v4227 = vsel %vm4188, %v4225, %v4226
      %v4228 = vrot.slane %v4150, 7
      %v4229 = vrot.slane %v4151, 7
      %v4230 = vsel %vm4188, %v4228, %v4229
      %v4231 = vrot.slane %v4152, 7
      %v4232 = vrot.slane %v4153, 7
      %v4233 = vsel %vm4188, %v4231, %v4232
      %v4234 = vrot.slane %v4154, 7
      %v4235 = vrot.slane %v4155, 7
      %v4236 = vsel %vm4188, %v4234, %v4235
      %v4285 = vadd.f32 %v228, %v4189
      %v4286 = vadd.f32 %v229, %v4191
      %v4287 = vadd.f32 %v230, %v4190
      %v4288 = vadd.f32 %v231, %v4192
      %v4289 = vadd.f32 %v232, %v4194
      %v4290 = vadd.f32 %v233, %v4193
      %v4291 = vadd.f32 %v234, %v4195
      %v4292 = vadd.f32 %v235, %v4197
      %v4293 = vadd.f32 %v236, %v4196
      %v4294 = vadd.f32 %v237, %v4198
      %v4295 = vadd.f32 %v238, %v4200
      %v4296 = vadd.f32 %v239, %v4199
      %v4297 = vadd.f32 %v240, %v4201
      %v4298 = vadd.f32 %v241, %v4203
      %v4299 = vadd.f32 %v242, %v4202
      %v4300 = vadd.f32 %v243, %v4204
      %v4301 = vadd.f32 %v244, %v4206
      %v4302 = vadd.f32 %v245, %v4205
      %v4303 = vadd.f32 %v246, %v4207
      %v4304 = vadd.f32 %v247, %v4209
      %v4305 = vadd.f32 %v248, %v4208
      %v4306 = vadd.f32 %v249, %v4210
      %v4307 = vadd.f32 %v250, %v4212
      %v4308 = vadd.f32 %v251, %v4211
      %v4309 = vadd.f32 %v252, %v4213
      %v4310 = vadd.f32 %v253, %v4215
      %v4311 = vadd.f32 %v254, %v4214
      %v4312 = vadd.f32 %v255, %v4216
      %v4313 = vadd.f32 %v256, %v4218
      %v4314 = vadd.f32 %v257, %v4217
      %v4315 = vadd.f32 %v258, %v4219
      %v4316 = vadd.f32 %v259, %v4221
      %v4317 = vadd.f32 %v260, %v4220
      %v4318 = vadd.f32 %v261, %v4222
      %v4319 = vadd.f32 %v262, %v4224
      %v4320 = vadd.f32 %v263, %v4223
      %v4321 = vadd.f32 %v264, %v4225
      %v4322 = vadd.f32 %v265, %v4227
      %v4323 = vadd.f32 %v266, %v4226
      %v4324 = vadd.f32 %v267, %v4228
      %v4325 = vadd.f32 %v268, %v4230
      %v4326 = vadd.f32 %v269, %v4229
      %v4327 = vadd.f32 %v270, %v4231
      %v4328 = vadd.f32 %v271, %v4233
      %v4329 = vadd.f32 %v272, %v4232
      %v4330 = vadd.f32 %v273, %v4234
      %v4331 = vadd.f32 %v274, %v4236
      %v4332 = vadd.f32 %v275, %v4235
      %vm4333 = vcmask 31745
      %4334 = vst.msk [vmem:[%s224 - $0x1] sm:$0xfe] %vm4333, %v4285
      %4335 = vst.msk [vmem:[%s224 + $0x7] sm:$0xff] %vm1290, %v4286
      %4336 = vst.msk [vmem:[%s224 + $0xf] sm:$0x1] %vm2214, %v4287
      %4337 = vst.msk [vmem:[%s224 + $0xf] sm:$0xfe] %vm4333, %v4288
      %4338 = vst.msk [vmem:[%s224 + $0x17] sm:$0xff] %vm1290, %v4289
      %4339 = vst.msk [vmem:[%s224 + $0x1f] sm:$0x1] %vm2214, %v4290
      %4340 = vst.msk [vmem:[%s224 + $0x1f] sm:$0xfe] %vm4333, %v4291
      %4341 = vst.msk [vmem:[%s224 + $0x27] sm:$0xff] %vm1290, %v4292
      %4342 = vst.msk [vmem:[%s224 + $0x2f] sm:$0x1] %vm2214, %v4293
      %4343 = vst.msk [vmem:[%s224 + $0x2f] sm:$0xfe] %vm4333, %v4294
      %4344 = vst.msk [vmem:[%s224 + $0x37] sm:$0xff] %vm1290, %v4295
      %4345 = vst.msk [vmem:[%s224 + $0x3f] sm:$0x1] %vm2214, %v4296
      %4346 = vst.msk [vmem:[%s224 + $0x3f] sm:$0xfe] %vm4333, %v4297
      %4347 = vst.msk [vmem:[%s224 + $0x47] sm:$0xff] %vm1290, %v4298
      %4348 = vst.msk [vmem:[%s224 + $0x4f] sm:$0x1] %vm2214, %v4299
      %4349 = vst.msk [vmem:[%s224 + $0x4f] sm:$0xfe] %vm4333, %v4300
      %4350 = vst.msk [vmem:[%s224 + $0x57] sm:$0xff] %vm1290, %v4301
      %4351 = vst.msk [vmem:[%s224 + $0x5f] sm:$0x1] %vm2214, %v4302
      %4352 = vst.msk [vmem:[%s224 + $0x5f] sm:$0xfe] %vm4333, %v4303
      %4353 = vst.msk [vmem:[%s224 + $0x67] sm:$0xff] %vm1290, %v4304
      %4354 = vst.msk [vmem:[%s224 + $0x6f] sm:$0x1] %vm2214, %v4305
      %4355 = vst.msk [vmem:[%s224 + $0x6f] sm:$0xfe] %vm4333, %v4306
      %4356 = vst.msk [vmem:[%s224 + $0x77] sm:$0xff] %vm1290, %v4307
      %4357 = vst.msk [vmem:[%s224 + $0x7f] sm:$0x1] %vm2214, %v4308
      %4358 = vst.msk [vmem:[%s224 + $0x7f] sm:$0xfe] %vm4333, %v4309
      %4359 = vst.msk [vmem:[%s224 + $0x87] sm:$0xff] %vm1290, %v4310
      %4360 = vst.msk [vmem:[%s224 + $0x8f] sm:$0x1] %vm2214, %v4311
      %4361 = vst.msk [vmem:[%s224 + $0x8f] sm:$0xfe] %vm4333, %v4312
      %4362 = vst.msk [vmem:[%s224 + $0x97] sm:$0xff] %vm1290, %v4313
      %4363 = vst.msk [vmem:[%s224 + $0x9f] sm:$0x1] %vm2214, %v4314
      %4364 = vst.msk [vmem:[%s224 + $0x9f] sm:$0xfe] %vm4333, %v4315
      %4365 = vst.msk [vmem:[%s224 + $0xa7] sm:$0xff] %vm1290, %v4316
      %4366 = vst.msk [vmem:[%s224 + $0xaf] sm:$0x1] %vm2214, %v4317
      %4367 = vst.msk [vmem:[%s224 + $0xaf] sm:$0xfe] %vm4333, %v4318
      %4368 = vst.msk [vmem:[%s224 + $0xb7] sm:$0xff] %vm1290, %v4319
      %4369 = vst.msk [vmem:[%s224 + $0xbf] sm:$0x1] %vm2214, %v4320
      %4370 = vst.msk [vmem:[%s224 + $0xbf] sm:$0xfe] %vm4333, %v4321
      %4371 = vst.msk [vmem:[%s224 + $0xc7] sm:$0xff] %vm1290, %v4322
      %4372 = vst.msk [vmem:[%s224 + $0xcf] sm:$0x1] %vm2214, %v4323
      %4373 = vst.msk [vmem:[%s224 + $0xcf] sm:$0xfe] %vm4333, %v4324
      %4374 = vst.msk [vmem:[%s224 + $0xd7] sm:$0xff] %vm1290, %v4325
      %4375 = vst.msk [vmem:[%s224 + $0xdf] sm:$0x1] %vm2214, %v4326
      %4376 = vst.msk [vmem:[%s224 + $0xdf] sm:$0xfe] %vm4333, %v4327
      %4377 = vst.msk [vmem:[%s224 + $0xe7] sm:$0xff] %vm1290, %v4328
      %4378 = vst.msk [vmem:[%s224 + $0xef] sm:$0x1] %vm2214, %v4329
      %4379 = vst.msk [vmem:[%s224 + $0xef] sm:$0xfe] %vm4333, %v4330
      %4380 = vst.msk [vmem:[%s224 + $0xf7] sm:$0xff] %vm1290, %v4331
      %4381 = vst.msk [vmem:[%s224 + $0xff] sm:$0x1] %vm2214, %v4332
      %p4382 = scmp.lt.s32.totalorder %s16, 1
      %s4383 = scalar_select %p4382, %s16, 1
      %s4384 = smul.addr %s4383, 32
      %s4385 = smul.addr %s4384, 8
      %s4386 = scalar_lea.vmem %s5, %s4385
      // Predicated region
      $region41: #{tpu_custom_call.1} parent=39 // pred_check
        %p4387 = pneg %p144
      $region42: #{tpu_custom_call.1} parent=39 // pred_check_branch
        %4389 = sbr.rel (%p4387) target = $region44
      $region43: #{tpu_custom_call.1} parent=39 // pred_region
        _
      $region44: #{tpu_custom_call.1} parent=39 // pred_fallthru
        _
    $region40: #{tpu_custom_call.1} parent=5 // pred_fallthru
      _
    %p4390 = scmp.le.s32.totalorder 2, %s11
    // Predicated region
    $region45: #{tpu_custom_call.1} parent=5 // pred_check
      %p4391 = pneg %p4390
    $region46: #{tpu_custom_call.1} parent=5 // pred_check_branch
      %4393 = sbr.rel (%p4391) target = $region48
    $region47: #{tpu_custom_call.1} parent=5 // pred_region
      %s4394 = ssub.s32 %s11, 2
      // Predicated region
      $region49: #{tpu_custom_call.1} parent=47 // pred_check
        %p4395 = pneg %p150
      $region50: #{tpu_custom_call.1} parent=47 // pred_check_branch
        %4397 = sbr.rel (%p4395) target = $region52
      $region51: #{tpu_custom_call.1} parent=47 // pred_region
        %p4398 = scmp.lt.s32.totalorder %s17, 1
        %s4399 = scalar_select %p4398, %s17, 1
        %s4400 = smul.addr %s4399, 32
        %s4401 = smul.addr %s4400, 8
        %s4402 = scalar_lea.vmem %s5, %s4401
      $region52: #{tpu_custom_call.1} parent=47 // pred_fallthru
        _
    $region48: #{tpu_custom_call.1} parent=5 // pred_fallthru
      _
  $region6: #{tpu_custom_call.1} parent=0 // loop_footer
    %s15 = sadd.s32 1, %s11
  $region7: #{tpu_custom_call.1} parent=0 // loop_footer_branch
    %10 = sbr.rel target = $region3
  $region8: #{tpu_custom_call.1} parent=0 // loop_exit
    _

</llo_original>
